<compile_context>
chip_gen: v7x
topology: tpu7x:2x2x1
jax: 0.10.0
libtpu: 0.0.40
codegen_flags: <defaults>
</compile_context>

<pallas_src>
import functools

import numpy as np

import jax
import jax.numpy as jnp
from jax.experimental import pallas as pl
from jax.experimental.pallas import tpu as pltpu

VMEM_SPEC = pl.BlockSpec(memory_space=pltpu.MemorySpace.VMEM)


# ----------------------------------------------------------------------------
# Fused forward kernel
# ----------------------------------------------------------------------------
def _drnn_fused_kernel(avg_ref, x_ref, *refs, num_layers, hidden):
    # avg_ref : (B*L, B*L) moving-average matrix, time-major row/col order
    #           t*B + b  (== kron(A_LxL, I_B)).
    # x_ref   : (B, L, C)
    # refs    : w0x (C,6H), w0d (C,6H), bih0 (1,6H), whh0 (2H,6H), bhhn0 (1,2H),
    #           then per layer l>=1: wih_l (2H,6H), bih_l (1,6H), whh_l (2H,6H),
    #           bhhn_l (1,2H); then w_head (P,2L), b_head (P,1), o_ref (P,B*H).
    # Gate-column layout everywhere: [r_s|r_t | z_s|z_t | n_s|n_t] (block-diag
    # between the seasonal and trend branches). r/z recurrent biases are folded
    # into the input biases; bhhn_* is the n-gate recurrent bias only.
    o_ref = refs[-1]
    w0x_ref, w0d_ref, bih0_ref, whh0_ref, bhhn0_ref = refs[0:5]
    upper_refs = [refs[5 + 4 * i: 9 + 4 * i] for i in range(num_layers - 1)]
    head_idx = 5 + 4 * (num_layers - 1)
    whead_ref, bhead_ref = refs[head_idx], refs[head_idx + 1]

    B, L, C = x_ref.shape
    H = hidden
    H2, H4, H6 = 2 * H, 4 * H, 6 * H
    f32 = jnp.float32

    # --- series decomposition folded into the hoisted layer-0 projection -----
    #     gi0 = x @ W_seas + A @ (x @ (W_trend - W_seas)) + b   (time-major rows)
    x_tm = jnp.transpose(x_ref[...].astype(f32), (1, 0, 2)).reshape(L * B, C)
    y = jnp.dot(x_tm, w0d_ref[...], preferred_element_type=f32)       # (LB,6H)
    gi0 = (jnp.dot(x_tm, w0x_ref[...], preferred_element_type=f32)
           + jnp.dot(avg_ref[...], y, preferred_element_type=f32)
           + bih0_ref[...])                                            # (LB,6H)
    gi0 = gi0.reshape(L, B, H6)          # contiguous leading-axis step slices

    # --- wave-pipelined (layer-interleaved) GRU recurrence --------------------
    whh0 = whh0_ref[...]
    bhhn0 = bhhn0_ref[...]
    up = [(w[...], bi[...], wh[...], bn[...]) for (w, bi, wh, bn) in upper_refs]

    def cell(gi_t, h_prev, whh, bhh_n):
        gh = jnp.dot(h_prev, whh, preferred_element_type=f32)         # (B, 6H)
        rz = jax.nn.sigmoid(gi_t[:, :H4] + gh[:, :H4])     # fused r+z sigmoid
        r, z = rz[:, :H2], rz[:, H2:]
        n = jnp.tanh(gi_t[:, H4:] + r * (gh[:, H4:] + bhh_n))
        return (1.0 - z) * n + z * h_prev

    h = [jnp.zeros((B, H2), f32) for _ in range(num_layers)]
    outs = []
    # Wave step s updates layer l at time t = s - l.  Every update within one
    # wave reads only the state snapshot from the start of the wave, so the
    # layer-0 and layer-1 micro-matmuls / EUP activations of a wave are
    # mutually independent and the scheduler can overlap them.
    for s in range(L + num_layers - 1):            # fully unrolled (static)
        prev = list(h)
        for l in range(num_layers):
            t = s - l
            if not (0 <= t < L):
                continue
            if l == 0:
                gi_t, whh, bhh_n = gi0[t], whh0, bhhn0
            else:
                wih, bih, whh, bhh_n = up[l - 1]
                gi_t = jnp.dot(prev[l - 1], wih,
                               preferred_element_type=f32) + bih
            h[l] = cell(gi_t, prev[l], whh, bhh_n)
            if l == num_layers - 1:
                outs.append(h[l])

    # --- DLinear head: ONE (P,2L) x (2L,B*H) matmul ---------------------------
    h_all = jnp.stack(outs, axis=0)                                   # (L,B,2H)
    st = jnp.concatenate([h_all[:, :, :H], h_all[:, :, H:]],
                         axis=0).reshape(2 * L, B * H)                # (2L,B*H)
    head = (jnp.dot(whead_ref[...], st, preferred_element_type=f32)
            + bhead_ref[...])                                         # (P,B*H)
    o_ref[...] = head.astype(o_ref.dtype)        # single lane-dense 2-D store


# ----------------------------------------------------------------------------
# Wrapper
# ----------------------------------------------------------------------------
def model_forward(x, fused, cfg):
    """Runs the fused kernel; returns (B, pred_len, hidden_size)."""
    B, L, _ = x.shape
    H, P, nl = cfg["hidden_size"], cfg["pred_len"], cfg["num_layers"]
    assert fused["batch"] == B and fused["seq_len"] == L

    inputs = [fused["avg"], x,
              fused["w0x"], fused["w0d"], fused["bih0"],
              fused["whh0"], fused["bhhn0"]]
    for lp in fused["upper"]:
        inputs.extend(lp)
    inputs.extend([fused["w_head"], fused["b_head"]])

    kernel = functools.partial(_drnn_fused_kernel, num_layers=nl, hidden=H)
    out = pl.pallas_call(
        kernel,
        out_shape=jax.ShapeDtypeStruct((P, B * H), jnp.float32),
        in_specs=[VMEM_SPEC] * len(inputs),
        out_specs=VMEM_SPEC,
    )(*inputs)
    # Kernel writes a lane-dense (P, B*H) slab; reorder to (B, P, H) outside
    # the kernel (layout plumbing only, off the kernel's critical path).
    return jnp.transpose(out.reshape(P, B, H), (1, 0, 2))


# ----------------------------------------------------------------------------
# One-time host-side parameter fusion
# ----------------------------------------------------------------------------
def _avg_matrix(L, K):
    # A[t, j] = weight of x[:, j] in the replication-padded moving average at t.
    assert K % 2 == 1, "even kernel_size breaks x - moving_mean shape upstream"
    p = (K - 1) // 2
    A = np.zeros((L, L), np.float32)
    for t in range(L):
        for k in range(K):
            j = min(max(t - p + k, 0), L - 1)
            A[t, j] += 1.0 / K
    return A


def fuse_params(params, cfg, batch):
    """Host-side one-time packing: branch block-diag weights, folded biases,
    folded-decomposition layer-0 weights, moving-average matrix, fused head."""
    H, L, K = cfg["hidden_size"], cfg["seq_len"], cfg["kernel_size"]
    H4 = 4 * H

    def blockify(wsT, wtT, d):
        # (d,3H) seasonal / trend -> (2d,6H) block-diagonal, gate columns
        # reordered to [r_s|r_t|z_s|z_t|n_s|n_t].
        out = np.zeros((2 * d, 6 * H), np.float32)
        for g in range(3):
            out[:d, (2 * g) * H:(2 * g + 1) * H] = wsT[:, g * H:(g + 1) * H]
            out[d:, (2 * g + 1) * H:(2 * g + 2) * H] = wtT[:, g * H:(g + 1) * H]
        return out

    def bias_pack(bs, bt):
        parts = []
        for g in range(3):
            parts.append(bs[g * H:(g + 1) * H])
            parts.append(bt[g * H:(g + 1) * H])
        return np.concatenate(parts)[None, :]                        # (1, 6H)

    def layer_np(ls, lt):
        return ([np.asarray(a, np.float32) for a in ls],
                [np.asarray(a, np.float32) for a in lt])

    # ---- layer 0: fold decomposition + r/z recurrent bias --------------------
    (wis, whs, bis, bhs), (wit, wht, bitr, bht) = layer_np(
        params["gru_seasonal"][0], params["gru_trend"][0])
    C = wis.shape[1]
    w0 = blockify(wis.T, wit.T, C)                                    # (2C, 6H)
    w0x = w0[:C]                              # applied to x       (seasonal)
    w0d = w0[C:] - w0[:C]                     # applied to A @ x   (trend-seas)
    whh0 = blockify(whs.T, wht.T, H)                                  # (2H, 6H)
    bih0 = bias_pack(bis, bitr).copy()
    bhh0 = bias_pack(bhs, bht)
    bih0[:, :H4] += bhh0[:, :H4]              # fold r/z recurrent bias only
    bhhn0 = bhh0[:, H4:]                                              # (1, 2H)

    # ---- layers 1..num_layers-1 ----------------------------------------------
    upper = []
    for ls, lt in zip(params["gru_seasonal"][1:], params["gru_trend"][1:]):
        (wis, whs, bis, bhs), (wit, wht, bitr, bht) = layer_np(ls, lt)
        wih = blockify(wis.T, wit.T, H)
        whh = blockify(whs.T, wht.T, H)
        bih = bias_pack(bis, bitr).copy()
        bhh = bias_pack(bhs, bht)
        bih[:, :H4] += bhh[:, :H4]
        upper.append(tuple(jnp.asarray(a)
                           for a in (wih, bih, whh, bhh[:, H4:])))

    # ---- moving-average matrix (time-major row order t*B + b) ----------------
    avg = np.kron(_avg_matrix(L, K), np.eye(batch, dtype=np.float32))

    # ---- head: Linear_Seasonal + Linear_Trend fused ---------------------------
    w_head = np.concatenate([np.asarray(params["Ws"], np.float32),
                             np.asarray(params["Wt"], np.float32)], axis=1)
    b_head = (np.asarray(params["bs"], np.float32)
              + np.asarray(params["bt"], np.float32))[:, None]

    return {
        "batch": batch, "seq_len": L,
        "avg": jnp.asarray(avg),
        "w0x": jnp.asarray(w0x), "w0d": jnp.asarray(w0d),
        "bih0": jnp.asarray(bih0), "whh0": jnp.asarray(whh0),
        "bhhn0": jnp.asarray(bhhn0),
        "upper": upper,
        "w_head": jnp.asarray(w_head), "b_head": jnp.asarray(b_head),
    }


# ----------------------------------------------------------------------------
# Pure-JAX reference (from the original, unfused parameters)
# ----------------------------------------------------------------------------
def ref_forward(x, params, cfg):
    K = cfg["kernel_size"]
    p = (K - 1) // 2
    front = jnp.repeat(x[:, 0:1, :], p, axis=1)
    end = jnp.repeat(x[:, -1:, :], p, axis=1)
    xpad = jnp.concatenate([front, x, end], axis=1)
    L = x.shape[1]
    trend = jnp.mean(jnp.stack([xpad[:, k:k + L, :] for k in range(K)], 0), 0)
    seasonal = x - trend

    def gru_ref(xs, layers):
        h = xs
        for (w_ih, w_hh, b_ih, b_hh) in layers:
            H = w_hh.shape[1]
            B = h.shape[0]

            def cell(h_prev, x_t):
                gi = x_t @ w_ih.T + b_ih
                gh = h_prev @ w_hh.T + b_hh
                r = jax.nn.sigmoid(gi[:, :H] + gh[:, :H])
                z = jax.nn.sigmoid(gi[:, H:2 * H] + gh[:, H:2 * H])
                n = jnp.tanh(gi[:, 2 * H:] + r * gh[:, 2 * H:])
                h_new = (1.0 - z) * n + z * h_prev
                return h_new, h_new

            _, ys = jax.lax.scan(cell, jnp.zeros((B, H), jnp.float32),
                                 jnp.transpose(h, (1, 0, 2)))
            h = jnp.transpose(ys, (1, 0, 2))
        return h

    seasonal = gru_ref(seasonal, params["gru_seasonal"])
    trend = gru_ref(trend, params["gru_trend"])
    s2 = jnp.transpose(seasonal, (0, 2, 1))
    t2 = jnp.transpose(trend, (0, 2, 1))
    out = s2 @ params["Ws"].T + params["bs"] + t2 @ params["Wt"].T + params["bt"]
    return jnp.transpose(out, (0, 2, 1))


# ----------------------------------------------------------------------------
# Deterministic parameter init (PyTorch-style uniform bounds)
# ----------------------------------------------------------------------------
def init_params(key, cfg):
    C, H, L, P = cfg["enc_in"], cfg["hidden_size"], cfg["seq_len"], cfg["pred_len"]
    nl = cfg["num_layers"]
    kg = 1.0 / jnp.sqrt(H)
    kl = 1.0 / jnp.sqrt(L)

    def uni(k, shape, bound):
        return jax.random.uniform(k, shape, jnp.float32, -bound, bound)

    def make_gru(key):
        layers = []
        for l in range(nl):
            din = C if l == 0 else H
            key, k1, k2, k3, k4 = jax.random.split(key, 5)
            layers.append((uni(k1, (3 * H, din), kg), uni(k2, (3 * H, H), kg),
                           uni(k3, (3 * H,), kg), uni(k4, (3 * H,), kg)))
        return key, layers

    key, gru_s = make_gru(key)
    key, gru_t = make_gru(key)
    key, k1, k2, k3, k4 = jax.random.split(key, 5)
    return {
        "gru_seasonal": gru_s,
        "gru_trend": gru_t,
        "Ws": uni(k1, (P, L), kl), "bs": uni(k2, (P,), kl),
        "Wt": uni(k3, (P, L), kl), "bt": uni(k4, (P,), kl),
    }


if __name__ == "__main__":
    cfg = dict(seq_len=8, pred_len=4, kernel_size=5, enc_in=4, hidden_size=16,
               num_layers=2, rnn_type="gru", individual=False, use_RevIN=False)

    key = jax.random.PRNGKey(0)
    key, kx = jax.random.split(key)
    params = init_params(key, cfg)
    B = 2
    x = jax.random.normal(kx, (B, cfg["seq_len"], cfg["enc_in"]), jnp.float32)

    fused = fuse_params(params, cfg, batch=B)   # one-time host-side packing
    out = model_forward(x, fused, cfg)
    out = jax.block_until_ready(out)

    assert out.shape == (B, cfg["pred_len"], cfg["hidden_size"]), out.shape
    ref = ref_forward(x, params, cfg)
    err = float(jnp.max(jnp.abs(out - ref)))
    assert err < 1e-3, err
    print("KERNEL_OK")
</pallas_src>

<mosaic_0001>
module attributes {stable_mosaic.version = 11 : i64} {
  func.func @_drnn_fused_kernel(%arg0: memref<16x16xf32, #tpu.memory_space<vmem>>, %arg1: memref<2x8x4xf32, #tpu.memory_space<vmem>>, %arg2: memref<4x96xf32, #tpu.memory_space<vmem>>, %arg3: memref<4x96xf32, #tpu.memory_space<vmem>>, %arg4: memref<1x96xf32, #tpu.memory_space<vmem>>, %arg5: memref<32x96xf32, #tpu.memory_space<vmem>>, %arg6: memref<1x32xf32, #tpu.memory_space<vmem>>, %arg7: memref<32x96xf32, #tpu.memory_space<vmem>>, %arg8: memref<1x96xf32, #tpu.memory_space<vmem>>, %arg9: memref<32x96xf32, #tpu.memory_space<vmem>>, %arg10: memref<1x32xf32, #tpu.memory_space<vmem>>, %arg11: memref<4x16xf32, #tpu.memory_space<vmem>>, %arg12: memref<4x1xf32, #tpu.memory_space<vmem>>, %arg13: memref<4x32xf32, #tpu.memory_space<vmem>>) attributes {dimension_semantics = [], scalar_prefetch = 0 : i64, scratch_operands = 0 : i64, tpu.core_type = #tpu.core_type<tc>} {
    %c0 = arith.constant 0 : index
    %c0_0 = arith.constant 0 : index
    %c0_1 = arith.constant 0 : index
    %0 = vector.load %arg1[%c0, %c0_0, %c0_1] : memref<2x8x4xf32, #tpu.memory_space<vmem>>, vector<2x8x4xf32>
    %1 = tpu.transpose %0, [1, 0, 2] : vector<2x8x4xf32> -> vector<8x2x4xf32>
    %2 = vector.shape_cast %1 : vector<8x2x4xf32> to vector<16x4xf32>
    %c0_2 = arith.constant 0 : index
    %c0_3 = arith.constant 0 : index
    %3 = vector.load %arg3[%c0_2, %c0_3] : memref<4x96xf32, #tpu.memory_space<vmem>>, vector<4x96xf32>
    %cst = arith.constant dense<0.000000e+00> : vector<16x96xf32>
    %4 = tpu.matmul %2, %3, %cst {dimension_numbers = #tpu.dot_dimension_numbers<[1], [0], [0], [1], [0, 0, 1, 1], [], []>} : vector<16x4xf32>, vector<4x96xf32>, vector<16x96xf32> -> vector<16x96xf32>
    %c0_4 = arith.constant 0 : index
    %c0_5 = arith.constant 0 : index
    %5 = vector.load %arg2[%c0_4, %c0_5] : memref<4x96xf32, #tpu.memory_space<vmem>>, vector<4x96xf32>
    %cst_6 = arith.constant dense<0.000000e+00> : vector<16x96xf32>
    %6 = tpu.matmul %2, %5, %cst_6 {dimension_numbers = #tpu.dot_dimension_numbers<[1], [0], [0], [1], [0, 0, 1, 1], [], []>} : vector<16x4xf32>, vector<4x96xf32>, vector<16x96xf32> -> vector<16x96xf32>
    %c0_7 = arith.constant 0 : index
    %c0_8 = arith.constant 0 : index
    %7 = vector.load %arg0[%c0_7, %c0_8] : memref<16x16xf32, #tpu.memory_space<vmem>>, vector<16x16xf32>
    %cst_9 = arith.constant dense<0.000000e+00> : vector<16x96xf32>
    %8 = tpu.matmul %7, %4, %cst_9 {dimension_numbers = #tpu.dot_dimension_numbers<[1], [0], [0], [1], [0, 0, 1, 1], [], []>} : vector<16x16xf32>, vector<16x96xf32>, vector<16x96xf32> -> vector<16x96xf32>
    %9 = arith.addf %6, %8 : vector<16x96xf32>
    %c0_10 = arith.constant 0 : index
    %c0_11 = arith.constant 0 : index
    %10 = vector.load %arg4[%c0_10, %c0_11] : memref<1x96xf32, #tpu.memory_space<vmem>>, vector<1x96xf32>
    %11 = vector.broadcast %10 : vector<1x96xf32> to vector<16x96xf32>
    %12 = arith.addf %9, %11 : vector<16x96xf32>
    %13 = vector.shape_cast %12 : vector<16x96xf32> to vector<8x2x96xf32>
    %c0_12 = arith.constant 0 : index
    %c0_13 = arith.constant 0 : index
    %14 = vector.load %arg5[%c0_12, %c0_13] : memref<32x96xf32, #tpu.memory_space<vmem>>, vector<32x96xf32>
    %c0_14 = arith.constant 0 : index
    %c0_15 = arith.constant 0 : index
    %15 = vector.load %arg6[%c0_14, %c0_15] : memref<1x32xf32, #tpu.memory_space<vmem>>, vector<1x32xf32>
    %c0_16 = arith.constant 0 : index
    %c0_17 = arith.constant 0 : index
    %16 = vector.load %arg7[%c0_16, %c0_17] : memref<32x96xf32, #tpu.memory_space<vmem>>, vector<32x96xf32>
    %c0_18 = arith.constant 0 : index
    %c0_19 = arith.constant 0 : index
    %17 = vector.load %arg8[%c0_18, %c0_19] : memref<1x96xf32, #tpu.memory_space<vmem>>, vector<1x96xf32>
    %c0_20 = arith.constant 0 : index
    %c0_21 = arith.constant 0 : index
    %18 = vector.load %arg9[%c0_20, %c0_21] : memref<32x96xf32, #tpu.memory_space<vmem>>, vector<32x96xf32>
    %c0_22 = arith.constant 0 : index
    %c0_23 = arith.constant 0 : index
    %19 = vector.load %arg10[%c0_22, %c0_23] : memref<1x32xf32, #tpu.memory_space<vmem>>, vector<1x32xf32>
    %cst_24 = arith.constant 0.000000e+00 : f32
    %20 = vector.broadcast %cst_24 : f32 to vector<2x32xf32>
    %cst_25 = arith.constant 0.000000e+00 : f32
    %21 = vector.broadcast %cst_25 : f32 to vector<2x32xf32>
    %22 = vector.extract_strided_slice %13 {offsets = [0, 0, 0], sizes = [1, 2, 96], strides = [1, 1, 1]} : vector<8x2x96xf32> to vector<1x2x96xf32>
    %23 = vector.shape_cast %22 : vector<1x2x96xf32> to vector<2x96xf32>
    %cst_26 = arith.constant dense<0.000000e+00> : vector<2x96xf32>
    %24 = tpu.matmul %20, %14, %cst_26 {dimension_numbers = #tpu.dot_dimension_numbers<[1], [0], [0], [1], [0, 0, 1, 1], [], []>} : vector<2x32xf32>, vector<32x96xf32>, vector<2x96xf32> -> vector<2x96xf32>
    %25 = vector.extract_strided_slice %23 {offsets = [0, 0], sizes = [2, 64], strides = [1, 1]} : vector<2x96xf32> to vector<2x64xf32>
    %26 = vector.extract_strided_slice %24 {offsets = [0, 0], sizes = [2, 64], strides = [1, 1]} : vector<2x96xf32> to vector<2x64xf32>
    %27 = arith.addf %25, %26 : vector<2x64xf32>
    %28 = arith.negf %27 : vector<2x64xf32>
    %29 = math.exp %28 : vector<2x64xf32>
    %cst_27 = arith.constant 1.000000e+00 : f32
    %30 = vector.broadcast %cst_27 : f32 to vector<2x64xf32>
    %31 = arith.addf %30, %29 : vector<2x64xf32>
    %32 = arith.divf %30, %31 : vector<2x64xf32>
    %33 = vector.extract_strided_slice %32 {offsets = [0, 0], sizes = [2, 32], strides = [1, 1]} : vector<2x64xf32> to vector<2x32xf32>
    %34 = vector.extract_strided_slice %32 {offsets = [0, 32], sizes = [2, 32], strides = [1, 1]} : vector<2x64xf32> to vector<2x32xf32>
    %35 = vector.extract_strided_slice %23 {offsets = [0, 64], sizes = [2, 32], strides = [1, 1]} : vector<2x96xf32> to vector<2x32xf32>
    %36 = vector.extract_strided_slice %24 {offsets = [0, 64], sizes = [2, 32], strides = [1, 1]} : vector<2x96xf32> to vector<2x32xf32>
    %37 = vector.broadcast %15 : vector<1x32xf32> to vector<2x32xf32>
    %38 = arith.addf %36, %37 : vector<2x32xf32>
    %39 = arith.mulf %33, %38 : vector<2x32xf32>
    %40 = arith.addf %35, %39 : vector<2x32xf32>
    %41 = math.tanh %40 : vector<2x32xf32>
    %cst_28 = arith.constant 1.000000e+00 : f32
    %42 = vector.broadcast %cst_28 : f32 to vector<2x32xf32>
    %43 = arith.subf %42, %34 : vector<2x32xf32>
    %44 = arith.mulf %43, %41 : vector<2x32xf32>
    %45 = arith.mulf %34, %20 : vector<2x32xf32>
    %46 = arith.addf %44, %45 : vector<2x32xf32>
    %47 = vector.extract_strided_slice %13 {offsets = [1, 0, 0], sizes = [1, 2, 96], strides = [1, 1, 1]} : vector<8x2x96xf32> to vector<1x2x96xf32>
    %48 = vector.shape_cast %47 : vector<1x2x96xf32> to vector<2x96xf32>
    %cst_29 = arith.constant dense<0.000000e+00> : vector<2x96xf32>
    %49 = tpu.matmul %46, %14, %cst_29 {dimension_numbers = #tpu.dot_dimension_numbers<[1], [0], [0], [1], [0, 0, 1, 1], [], []>} : vector<2x32xf32>, vector<32x96xf32>, vector<2x96xf32> -> vector<2x96xf32>
    %50 = vector.extract_strided_slice %48 {offsets = [0, 0], sizes = [2, 64], strides = [1, 1]} : vector<2x96xf32> to vector<2x64xf32>
    %51 = vector.extract_strided_slice %49 {offsets = [0, 0], sizes = [2, 64], strides = [1, 1]} : vector<2x96xf32> to vector<2x64xf32>
    %52 = arith.addf %50, %51 : vector<2x64xf32>
    %53 = arith.negf %52 : vector<2x64xf32>
    %54 = math.exp %53 : vector<2x64xf32>
    %cst_30 = arith.constant 1.000000e+00 : f32
    %55 = vector.broadcast %cst_30 : f32 to vector<2x64xf32>
    %56 = arith.addf %55, %54 : vector<2x64xf32>
    %57 = arith.divf %55, %56 : vector<2x64xf32>
    %58 = vector.extract_strided_slice %57 {offsets = [0, 0], sizes = [2, 32], strides = [1, 1]} : vector<2x64xf32> to vector<2x32xf32>
    %59 = vector.extract_strided_slice %57 {offsets = [0, 32], sizes = [2, 32], strides = [1, 1]} : vector<2x64xf32> to vector<2x32xf32>
    %60 = vector.extract_strided_slice %48 {offsets = [0, 64], sizes = [2, 32], strides = [1, 1]} : vector<2x96xf32> to vector<2x32xf32>
    %61 = vector.extract_strided_slice %49 {offsets = [0, 64], sizes = [2, 32], strides = [1, 1]} : vector<2x96xf32> to vector<2x32xf32>
    %62 = vector.broadcast %15 : vector<1x32xf32> to vector<2x32xf32>
    %63 = arith.addf %61, %62 : vector<2x32xf32>
    %64 = arith.mulf %58, %63 : vector<2x32xf32>
    %65 = arith.addf %60, %64 : vector<2x32xf32>
    %66 = math.tanh %65 : vector<2x32xf32>
    %cst_31 = arith.constant 1.000000e+00 : f32
    %67 = vector.broadcast %cst_31 : f32 to vector<2x32xf32>
    %68 = arith.subf %67, %59 : vector<2x32xf32>
    %69 = arith.mulf %68, %66 : vector<2x32xf32>
    %70 = arith.mulf %59, %46 : vector<2x32xf32>
    %71 = arith.addf %69, %70 : vector<2x32xf32>
    %cst_32 = arith.constant dense<0.000000e+00> : vector<2x96xf32>
    %72 = tpu.matmul %46, %16, %cst_32 {dimension_numbers = #tpu.dot_dimension_numbers<[1], [0], [0], [1], [0, 0, 1, 1], [], []>} : vector<2x32xf32>, vector<32x96xf32>, vector<2x96xf32> -> vector<2x96xf32>
    %73 = vector.broadcast %17 : vector<1x96xf32> to vector<2x96xf32>
    %74 = arith.addf %72, %73 : vector<2x96xf32>
    %cst_33 = arith.constant dense<0.000000e+00> : vector<2x96xf32>
    %75 = tpu.matmul %21, %18, %cst_33 {dimension_numbers = #tpu.dot_dimension_numbers<[1], [0], [0], [1], [0, 0, 1, 1], [], []>} : vector<2x32xf32>, vector<32x96xf32>, vector<2x96xf32> -> vector<2x96xf32>
    %76 = vector.extract_strided_slice %74 {offsets = [0, 0], sizes = [2, 64], strides = [1, 1]} : vector<2x96xf32> to vector<2x64xf32>
    %77 = vector.extract_strided_slice %75 {offsets = [0, 0], sizes = [2, 64], strides = [1, 1]} : vector<2x96xf32> to vector<2x64xf32>
    %78 = arith.addf %76, %77 : vector<2x64xf32>
    %79 = arith.negf %78 : vector<2x64xf32>
    %80 = math.exp %79 : vector<2x64xf32>
    %cst_34 = arith.constant 1.000000e+00 : f32
    %81 = vector.broadcast %cst_34 : f32 to vector<2x64xf32>
    %82 = arith.addf %81, %80 : vector<2x64xf32>
    %83 = arith.divf %81, %82 : vector<2x64xf32>
    %84 = vector.extract_strided_slice %83 {offsets = [0, 0], sizes = [2, 32], strides = [1, 1]} : vector<2x64xf32> to vector<2x32xf32>
    %85 = vector.extract_strided_slice %83 {offsets = [0, 32], sizes = [2, 32], strides = [1, 1]} : vector<2x64xf32> to vector<2x32xf32>
    %86 = vector.extract_strided_slice %74 {offsets = [0, 64], sizes = [2, 32], strides = [1, 1]} : vector<2x96xf32> to vector<2x32xf32>
    %87 = vector.extract_strided_slice %75 {offsets = [0, 64], sizes = [2, 32], strides = [1, 1]} : vector<2x96xf32> to vector<2x32xf32>
    %88 = vector.broadcast %19 : vector<1x32xf32> to vector<2x32xf32>
    %89 = arith.addf %87, %88 : vector<2x32xf32>
    %90 = arith.mulf %84, %89 : vector<2x32xf32>
    %91 = arith.addf %86, %90 : vector<2x32xf32>
    %92 = math.tanh %91 : vector<2x32xf32>
    %cst_35 = arith.constant 1.000000e+00 : f32
    %93 = vector.broadcast %cst_35 : f32 to vector<2x32xf32>
    %94 = arith.subf %93, %85 : vector<2x32xf32>
    %95 = arith.mulf %94, %92 : vector<2x32xf32>
    %96 = arith.mulf %85, %21 : vector<2x32xf32>
    %97 = arith.addf %95, %96 : vector<2x32xf32>
    %98 = vector.extract_strided_slice %13 {offsets = [2, 0, 0], sizes = [1, 2, 96], strides = [1, 1, 1]} : vector<8x2x96xf32> to vector<1x2x96xf32>
    %99 = vector.shape_cast %98 : vector<1x2x96xf32> to vector<2x96xf32>
    %cst_36 = arith.constant dense<0.000000e+00> : vector<2x96xf32>
    %100 = tpu.matmul %71, %14, %cst_36 {dimension_numbers = #tpu.dot_dimension_numbers<[1], [0], [0], [1], [0, 0, 1, 1], [], []>} : vector<2x32xf32>, vector<32x96xf32>, vector<2x96xf32> -> vector<2x96xf32>
    %101 = vector.extract_strided_slice %99 {offsets = [0, 0], sizes = [2, 64], strides = [1, 1]} : vector<2x96xf32> to vector<2x64xf32>
    %102 = vector.extract_strided_slice %100 {offsets = [0, 0], sizes = [2, 64], strides = [1, 1]} : vector<2x96xf32> to vector<2x64xf32>
    %103 = arith.addf %101, %102 : vector<2x64xf32>
    %104 = arith.negf %103 : vector<2x64xf32>
    %105 = math.exp %104 : vector<2x64xf32>
    %cst_37 = arith.constant 1.000000e+00 : f32
    %106 = vector.broadcast %cst_37 : f32 to vector<2x64xf32>
    %107 = arith.addf %106, %105 : vector<2x64xf32>
    %108 = arith.divf %106, %107 : vector<2x64xf32>
    %109 = vector.extract_strided_slice %108 {offsets = [0, 0], sizes = [2, 32], strides = [1, 1]} : vector<2x64xf32> to vector<2x32xf32>
    %110 = vector.extract_strided_slice %108 {offsets = [0, 32], sizes = [2, 32], strides = [1, 1]} : vector<2x64xf32> to vector<2x32xf32>
    %111 = vector.extract_strided_slice %99 {offsets = [0, 64], sizes = [2, 32], strides = [1, 1]} : vector<2x96xf32> to vector<2x32xf32>
    %112 = vector.extract_strided_slice %100 {offsets = [0, 64], sizes = [2, 32], strides = [1, 1]} : vector<2x96xf32> to vector<2x32xf32>
    %113 = vector.broadcast %15 : vector<1x32xf32> to vector<2x32xf32>
    %114 = arith.addf %112, %113 : vector<2x32xf32>
    %115 = arith.mulf %109, %114 : vector<2x32xf32>
    %116 = arith.addf %111, %115 : vector<2x32xf32>
    %117 = math.tanh %116 : vector<2x32xf32>
    %cst_38 = arith.constant 1.000000e+00 : f32
    %118 = vector.broadcast %cst_38 : f32 to vector<2x32xf32>
    %119 = arith.subf %118, %110 : vector<2x32xf32>
    %120 = arith.mulf %119, %117 : vector<2x32xf32>
    %121 = arith.mulf %110, %71 : vector<2x32xf32>
    %122 = arith.addf %120, %121 : vector<2x32xf32>
    %cst_39 = arith.constant dense<0.000000e+00> : vector<2x96xf32>
    %123 = tpu.matmul %71, %16, %cst_39 {dimension_numbers = #tpu.dot_dimension_numbers<[1], [0], [0], [1], [0, 0, 1, 1], [], []>} : vector<2x32xf32>, vector<32x96xf32>, vector<2x96xf32> -> vector<2x96xf32>
    %124 = vector.broadcast %17 : vector<1x96xf32> to vector<2x96xf32>
    %125 = arith.addf %123, %124 : vector<2x96xf32>
    %cst_40 = arith.constant dense<0.000000e+00> : vector<2x96xf32>
    %126 = tpu.matmul %97, %18, %cst_40 {dimension_numbers = #tpu.dot_dimension_numbers<[1], [0], [0], [1], [0, 0, 1, 1], [], []>} : vector<2x32xf32>, vector<32x96xf32>, vector<2x96xf32> -> vector<2x96xf32>
    %127 = vector.extract_strided_slice %125 {offsets = [0, 0], sizes = [2, 64], strides = [1, 1]} : vector<2x96xf32> to vector<2x64xf32>
    %128 = vector.extract_strided_slice %126 {offsets = [0, 0], sizes = [2, 64], strides = [1, 1]} : vector<2x96xf32> to vector<2x64xf32>
    %129 = arith.addf %127, %128 : vector<2x64xf32>
    %130 = arith.negf %129 : vector<2x64xf32>
    %131 = math.exp %130 : vector<2x64xf32>
    %cst_41 = arith.constant 1.000000e+00 : f32
    %132 = vector.broadcast %cst_41 : f32 to vector<2x64xf32>
    %133 = arith.addf %132, %131 : vector<2x64xf32>
    %134 = arith.divf %132, %133 : vector<2x64xf32>
    %135 = vector.extract_strided_slice %134 {offsets = [0, 0], sizes = [2, 32], strides = [1, 1]} : vector<2x64xf32> to vector<2x32xf32>
    %136 = vector.extract_strided_slice %134 {offsets = [0, 32], sizes = [2, 32], strides = [1, 1]} : vector<2x64xf32> to vector<2x32xf32>
    %137 = vector.extract_strided_slice %125 {offsets = [0, 64], sizes = [2, 32], strides = [1, 1]} : vector<2x96xf32> to vector<2x32xf32>
    %138 = vector.extract_strided_slice %126 {offsets = [0, 64], sizes = [2, 32], strides = [1, 1]} : vector<2x96xf32> to vector<2x32xf32>
    %139 = vector.broadcast %19 : vector<1x32xf32> to vector<2x32xf32>
    %140 = arith.addf %138, %139 : vector<2x32xf32>
    %141 = arith.mulf %135, %140 : vector<2x32xf32>
    %142 = arith.addf %137, %141 : vector<2x32xf32>
    %143 = math.tanh %142 : vector<2x32xf32>
    %cst_42 = arith.constant 1.000000e+00 : f32
    %144 = vector.broadcast %cst_42 : f32 to vector<2x32xf32>
    %145 = arith.subf %144, %136 : vector<2x32xf32>
    %146 = arith.mulf %145, %143 : vector<2x32xf32>
    %147 = arith.mulf %136, %97 : vector<2x32xf32>
    %148 = arith.addf %146, %147 : vector<2x32xf32>
    %149 = vector.extract_strided_slice %13 {offsets = [3, 0, 0], sizes = [1, 2, 96], strides = [1, 1, 1]} : vector<8x2x96xf32> to vector<1x2x96xf32>
    %150 = vector.shape_cast %149 : vector<1x2x96xf32> to vector<2x96xf32>
    %cst_43 = arith.constant dense<0.000000e+00> : vector<2x96xf32>
    %151 = tpu.matmul %122, %14, %cst_43 {dimension_numbers = #tpu.dot_dimension_numbers<[1], [0], [0], [1], [0, 0, 1, 1], [], []>} : vector<2x32xf32>, vector<32x96xf32>, vector<2x96xf32> -> vector<2x96xf32>
    %152 = vector.extract_strided_slice %150 {offsets = [0, 0], sizes = [2, 64], strides = [1, 1]} : vector<2x96xf32> to vector<2x64xf32>
    %153 = vector.extract_strided_slice %151 {offsets = [0, 0], sizes = [2, 64], strides = [1, 1]} : vector<2x96xf32> to vector<2x64xf32>
    %154 = arith.addf %152, %153 : vector<2x64xf32>
    %155 = arith.negf %154 : vector<2x64xf32>
    %156 = math.exp %155 : vector<2x64xf32>
    %cst_44 = arith.constant 1.000000e+00 : f32
    %157 = vector.broadcast %cst_44 : f32 to vector<2x64xf32>
    %158 = arith.addf %157, %156 : vector<2x64xf32>
    %159 = arith.divf %157, %158 : vector<2x64xf32>
    %160 = vector.extract_strided_slice %159 {offsets = [0, 0], sizes = [2, 32], strides = [1, 1]} : vector<2x64xf32> to vector<2x32xf32>
    %161 = vector.extract_strided_slice %159 {offsets = [0, 32], sizes = [2, 32], strides = [1, 1]} : vector<2x64xf32> to vector<2x32xf32>
    %162 = vector.extract_strided_slice %150 {offsets = [0, 64], sizes = [2, 32], strides = [1, 1]} : vector<2x96xf32> to vector<2x32xf32>
    %163 = vector.extract_strided_slice %151 {offsets = [0, 64], sizes = [2, 32], strides = [1, 1]} : vector<2x96xf32> to vector<2x32xf32>
    %164 = vector.broadcast %15 : vector<1x32xf32> to vector<2x32xf32>
    %165 = arith.addf %163, %164 : vector<2x32xf32>
    %166 = arith.mulf %160, %165 : vector<2x32xf32>
    %167 = arith.addf %162, %166 : vector<2x32xf32>
    %168 = math.tanh %167 : vector<2x32xf32>
    %cst_45 = arith.constant 1.000000e+00 : f32
    %169 = vector.broadcast %cst_45 : f32 to vector<2x32xf32>
    %170 = arith.subf %169, %161 : vector<2x32xf32>
    %171 = arith.mulf %170, %168 : vector<2x32xf32>
    %172 = arith.mulf %161, %122 : vector<2x32xf32>
    %173 = arith.addf %171, %172 : vector<2x32xf32>
    %cst_46 = arith.constant dense<0.000000e+00> : vector<2x96xf32>
    %174 = tpu.matmul %122, %16, %cst_46 {dimension_numbers = #tpu.dot_dimension_numbers<[1], [0], [0], [1], [0, 0, 1, 1], [], []>} : vector<2x32xf32>, vector<32x96xf32>, vector<2x96xf32> -> vector<2x96xf32>
    %175 = vector.broadcast %17 : vector<1x96xf32> to vector<2x96xf32>
    %176 = arith.addf %174, %175 : vector<2x96xf32>
    %cst_47 = arith.constant dense<0.000000e+00> : vector<2x96xf32>
    %177 = tpu.matmul %148, %18, %cst_47 {dimension_numbers = #tpu.dot_dimension_numbers<[1], [0], [0], [1], [0, 0, 1, 1], [], []>} : vector<2x32xf32>, vector<32x96xf32>, vector<2x96xf32> -> vector<2x96xf32>
    %178 = vector.extract_strided_slice %176 {offsets = [0, 0], sizes = [2, 64], strides = [1, 1]} : vector<2x96xf32> to vector<2x64xf32>
    %179 = vector.extract_strided_slice %177 {offsets = [0, 0], sizes = [2, 64], strides = [1, 1]} : vector<2x96xf32> to vector<2x64xf32>
    %180 = arith.addf %178, %179 : vector<2x64xf32>
    %181 = arith.negf %180 : vector<2x64xf32>
    %182 = math.exp %181 : vector<2x64xf32>
    %cst_48 = arith.constant 1.000000e+00 : f32
    %183 = vector.broadcast %cst_48 : f32 to vector<2x64xf32>
    %184 = arith.addf %183, %182 : vector<2x64xf32>
    %185 = arith.divf %183, %184 : vector<2x64xf32>
    %186 = vector.extract_strided_slice %185 {offsets = [0, 0], sizes = [2, 32], strides = [1, 1]} : vector<2x64xf32> to vector<2x32xf32>
    %187 = vector.extract_strided_slice %185 {offsets = [0, 32], sizes = [2, 32], strides = [1, 1]} : vector<2x64xf32> to vector<2x32xf32>
    %188 = vector.extract_strided_slice %176 {offsets = [0, 64], sizes = [2, 32], strides = [1, 1]} : vector<2x96xf32> to vector<2x32xf32>
    %189 = vector.extract_strided_slice %177 {offsets = [0, 64], sizes = [2, 32], strides = [1, 1]} : vector<2x96xf32> to vector<2x32xf32>
    %190 = vector.broadcast %19 : vector<1x32xf32> to vector<2x32xf32>
    %191 = arith.addf %189, %190 : vector<2x32xf32>
    %192 = arith.mulf %186, %191 : vector<2x32xf32>
    %193 = arith.addf %188, %192 : vector<2x32xf32>
    %194 = math.tanh %193 : vector<2x32xf32>
    %cst_49 = arith.constant 1.000000e+00 : f32
    %195 = vector.broadcast %cst_49 : f32 to vector<2x32xf32>
    %196 = arith.subf %195, %187 : vector<2x32xf32>
    %197 = arith.mulf %196, %194 : vector<2x32xf32>
    %198 = arith.mulf %187, %148 : vector<2x32xf32>
    %199 = arith.addf %197, %198 : vector<2x32xf32>
    %200 = vector.extract_strided_slice %13 {offsets = [4, 0, 0], sizes = [1, 2, 96], strides = [1, 1, 1]} : vector<8x2x96xf32> to vector<1x2x96xf32>
    %201 = vector.shape_cast %200 : vector<1x2x96xf32> to vector<2x96xf32>
    %cst_50 = arith.constant dense<0.000000e+00> : vector<2x96xf32>
    %202 = tpu.matmul %173, %14, %cst_50 {dimension_numbers = #tpu.dot_dimension_numbers<[1], [0], [0], [1], [0, 0, 1, 1], [], []>} : vector<2x32xf32>, vector<32x96xf32>, vector<2x96xf32> -> vector<2x96xf32>
    %203 = vector.extract_strided_slice %201 {offsets = [0, 0], sizes = [2, 64], strides = [1, 1]} : vector<2x96xf32> to vector<2x64xf32>
    %204 = vector.extract_strided_slice %202 {offsets = [0, 0], sizes = [2, 64], strides = [1, 1]} : vector<2x96xf32> to vector<2x64xf32>
    %205 = arith.addf %203, %204 : vector<2x64xf32>
    %206 = arith.negf %205 : vector<2x64xf32>
    %207 = math.exp %206 : vector<2x64xf32>
    %cst_51 = arith.constant 1.000000e+00 : f32
    %208 = vector.broadcast %cst_51 : f32 to vector<2x64xf32>
    %209 = arith.addf %208, %207 : vector<2x64xf32>
    %210 = arith.divf %208, %209 : vector<2x64xf32>
    %211 = vector.extract_strided_slice %210 {offsets = [0, 0], sizes = [2, 32], strides = [1, 1]} : vector<2x64xf32> to vector<2x32xf32>
    %212 = vector.extract_strided_slice %210 {offsets = [0, 32], sizes = [2, 32], strides = [1, 1]} : vector<2x64xf32> to vector<2x32xf32>
    %213 = vector.extract_strided_slice %201 {offsets = [0, 64], sizes = [2, 32], strides = [1, 1]} : vector<2x96xf32> to vector<2x32xf32>
    %214 = vector.extract_strided_slice %202 {offsets = [0, 64], sizes = [2, 32], strides = [1, 1]} : vector<2x96xf32> to vector<2x32xf32>
    %215 = vector.broadcast %15 : vector<1x32xf32> to vector<2x32xf32>
    %216 = arith.addf %214, %215 : vector<2x32xf32>
    %217 = arith.mulf %211, %216 : vector<2x32xf32>
    %218 = arith.addf %213, %217 : vector<2x32xf32>
    %219 = math.tanh %218 : vector<2x32xf32>
    %cst_52 = arith.constant 1.000000e+00 : f32
    %220 = vector.broadcast %cst_52 : f32 to vector<2x32xf32>
    %221 = arith.subf %220, %212 : vector<2x32xf32>
    %222 = arith.mulf %221, %219 : vector<2x32xf32>
    %223 = arith.mulf %212, %173 : vector<2x32xf32>
    %224 = arith.addf %222, %223 : vector<2x32xf32>
    %cst_53 = arith.constant dense<0.000000e+00> : vector<2x96xf32>
    %225 = tpu.matmul %173, %16, %cst_53 {dimension_numbers = #tpu.dot_dimension_numbers<[1], [0], [0], [1], [0, 0, 1, 1], [], []>} : vector<2x32xf32>, vector<32x96xf32>, vector<2x96xf32> -> vector<2x96xf32>
    %226 = vector.broadcast %17 : vector<1x96xf32> to vector<2x96xf32>
    %227 = arith.addf %225, %226 : vector<2x96xf32>
    %cst_54 = arith.constant dense<0.000000e+00> : vector<2x96xf32>
    %228 = tpu.matmul %199, %18, %cst_54 {dimension_numbers = #tpu.dot_dimension_numbers<[1], [0], [0], [1], [0, 0, 1, 1], [], []>} : vector<2x32xf32>, vector<32x96xf32>, vector<2x96xf32> -> vector<2x96xf32>
    %229 = vector.extract_strided_slice %227 {offsets = [0, 0], sizes = [2, 64], strides = [1, 1]} : vector<2x96xf32> to vector<2x64xf32>
    %230 = vector.extract_strided_slice %228 {offsets = [0, 0], sizes = [2, 64], strides = [1, 1]} : vector<2x96xf32> to vector<2x64xf32>
    %231 = arith.addf %229, %230 : vector<2x64xf32>
    %232 = arith.negf %231 : vector<2x64xf32>
    %233 = math.exp %232 : vector<2x64xf32>
    %cst_55 = arith.constant 1.000000e+00 : f32
    %234 = vector.broadcast %cst_55 : f32 to vector<2x64xf32>
    %235 = arith.addf %234, %233 : vector<2x64xf32>
    %236 = arith.divf %234, %235 : vector<2x64xf32>
    %237 = vector.extract_strided_slice %236 {offsets = [0, 0], sizes = [2, 32], strides = [1, 1]} : vector<2x64xf32> to vector<2x32xf32>
    %238 = vector.extract_strided_slice %236 {offsets = [0, 32], sizes = [2, 32], strides = [1, 1]} : vector<2x64xf32> to vector<2x32xf32>
    %239 = vector.extract_strided_slice %227 {offsets = [0, 64], sizes = [2, 32], strides = [1, 1]} : vector<2x96xf32> to vector<2x32xf32>
    %240 = vector.extract_strided_slice %228 {offsets = [0, 64], sizes = [2, 32], strides = [1, 1]} : vector<2x96xf32> to vector<2x32xf32>
    %241 = vector.broadcast %19 : vector<1x32xf32> to vector<2x32xf32>
    %242 = arith.addf %240, %241 : vector<2x32xf32>
    %243 = arith.mulf %237, %242 : vector<2x32xf32>
    %244 = arith.addf %239, %243 : vector<2x32xf32>
    %245 = math.tanh %244 : vector<2x32xf32>
    %cst_56 = arith.constant 1.000000e+00 : f32
    %246 = vector.broadcast %cst_56 : f32 to vector<2x32xf32>
    %247 = arith.subf %246, %238 : vector<2x32xf32>
    %248 = arith.mulf %247, %245 : vector<2x32xf32>
    %249 = arith.mulf %238, %199 : vector<2x32xf32>
    %250 = arith.addf %248, %249 : vector<2x32xf32>
    %251 = vector.extract_strided_slice %13 {offsets = [5, 0, 0], sizes = [1, 2, 96], strides = [1, 1, 1]} : vector<8x2x96xf32> to vector<1x2x96xf32>
    %252 = vector.shape_cast %251 : vector<1x2x96xf32> to vector<2x96xf32>
    %cst_57 = arith.constant dense<0.000000e+00> : vector<2x96xf32>
    %253 = tpu.matmul %224, %14, %cst_57 {dimension_numbers = #tpu.dot_dimension_numbers<[1], [0], [0], [1], [0, 0, 1, 1], [], []>} : vector<2x32xf32>, vector<32x96xf32>, vector<2x96xf32> -> vector<2x96xf32>
    %254 = vector.extract_strided_slice %252 {offsets = [0, 0], sizes = [2, 64], strides = [1, 1]} : vector<2x96xf32> to vector<2x64xf32>
    %255 = vector.extract_strided_slice %253 {offsets = [0, 0], sizes = [2, 64], strides = [1, 1]} : vector<2x96xf32> to vector<2x64xf32>
    %256 = arith.addf %254, %255 : vector<2x64xf32>
    %257 = arith.negf %256 : vector<2x64xf32>
    %258 = math.exp %257 : vector<2x64xf32>
    %cst_58 = arith.constant 1.000000e+00 : f32
    %259 = vector.broadcast %cst_58 : f32 to vector<2x64xf32>
    %260 = arith.addf %259, %258 : vector<2x64xf32>
    %261 = arith.divf %259, %260 : vector<2x64xf32>
    %262 = vector.extract_strided_slice %261 {offsets = [0, 0], sizes = [2, 32], strides = [1, 1]} : vector<2x64xf32> to vector<2x32xf32>
    %263 = vector.extract_strided_slice %261 {offsets = [0, 32], sizes = [2, 32], strides = [1, 1]} : vector<2x64xf32> to vector<2x32xf32>
    %264 = vector.extract_strided_slice %252 {offsets = [0, 64], sizes = [2, 32], strides = [1, 1]} : vector<2x96xf32> to vector<2x32xf32>
    %265 = vector.extract_strided_slice %253 {offsets = [0, 64], sizes = [2, 32], strides = [1, 1]} : vector<2x96xf32> to vector<2x32xf32>
    %266 = vector.broadcast %15 : vector<1x32xf32> to vector<2x32xf32>
    %267 = arith.addf %265, %266 : vector<2x32xf32>
    %268 = arith.mulf %262, %267 : vector<2x32xf32>
    %269 = arith.addf %264, %268 : vector<2x32xf32>
    %270 = math.tanh %269 : vector<2x32xf32>
    %cst_59 = arith.constant 1.000000e+00 : f32
    %271 = vector.broadcast %cst_59 : f32 to vector<2x32xf32>
    %272 = arith.subf %271, %263 : vector<2x32xf32>
    %273 = arith.mulf %272, %270 : vector<2x32xf32>
    %274 = arith.mulf %263, %224 : vector<2x32xf32>
    %275 = arith.addf %273, %274 : vector<2x32xf32>
    %cst_60 = arith.constant dense<0.000000e+00> : vector<2x96xf32>
    %276 = tpu.matmul %224, %16, %cst_60 {dimension_numbers = #tpu.dot_dimension_numbers<[1], [0], [0], [1], [0, 0, 1, 1], [], []>} : vector<2x32xf32>, vector<32x96xf32>, vector<2x96xf32> -> vector<2x96xf32>
    %277 = vector.broadcast %17 : vector<1x96xf32> to vector<2x96xf32>
    %278 = arith.addf %276, %277 : vector<2x96xf32>
    %cst_61 = arith.constant dense<0.000000e+00> : vector<2x96xf32>
    %279 = tpu.matmul %250, %18, %cst_61 {dimension_numbers = #tpu.dot_dimension_numbers<[1], [0], [0], [1], [0, 0, 1, 1], [], []>} : vector<2x32xf32>, vector<32x96xf32>, vector<2x96xf32> -> vector<2x96xf32>
    %280 = vector.extract_strided_slice %278 {offsets = [0, 0], sizes = [2, 64], strides = [1, 1]} : vector<2x96xf32> to vector<2x64xf32>
    %281 = vector.extract_strided_slice %279 {offsets = [0, 0], sizes = [2, 64], strides = [1, 1]} : vector<2x96xf32> to vector<2x64xf32>
    %282 = arith.addf %280, %281 : vector<2x64xf32>
    %283 = arith.negf %282 : vector<2x64xf32>
    %284 = math.exp %283 : vector<2x64xf32>
    %cst_62 = arith.constant 1.000000e+00 : f32
    %285 = vector.broadcast %cst_62 : f32 to vector<2x64xf32>
    %286 = arith.addf %285, %284 : vector<2x64xf32>
    %287 = arith.divf %285, %286 : vector<2x64xf32>
    %288 = vector.extract_strided_slice %287 {offsets = [0, 0], sizes = [2, 32], strides = [1, 1]} : vector<2x64xf32> to vector<2x32xf32>
    %289 = vector.extract_strided_slice %287 {offsets = [0, 32], sizes = [2, 32], strides = [1, 1]} : vector<2x64xf32> to vector<2x32xf32>
    %290 = vector.extract_strided_slice %278 {offsets = [0, 64], sizes = [2, 32], strides = [1, 1]} : vector<2x96xf32> to vector<2x32xf32>
    %291 = vector.extract_strided_slice %279 {offsets = [0, 64], sizes = [2, 32], strides = [1, 1]} : vector<2x96xf32> to vector<2x32xf32>
    %292 = vector.broadcast %19 : vector<1x32xf32> to vector<2x32xf32>
    %293 = arith.addf %291, %292 : vector<2x32xf32>
    %294 = arith.mulf %288, %293 : vector<2x32xf32>
    %295 = arith.addf %290, %294 : vector<2x32xf32>
    %296 = math.tanh %295 : vector<2x32xf32>
    %cst_63 = arith.constant 1.000000e+00 : f32
    %297 = vector.broadcast %cst_63 : f32 to vector<2x32xf32>
    %298 = arith.subf %297, %289 : vector<2x32xf32>
    %299 = arith.mulf %298, %296 : vector<2x32xf32>
    %300 = arith.mulf %289, %250 : vector<2x32xf32>
    %301 = arith.addf %299, %300 : vector<2x32xf32>
    %302 = vector.extract_strided_slice %13 {offsets = [6, 0, 0], sizes = [1, 2, 96], strides = [1, 1, 1]} : vector<8x2x96xf32> to vector<1x2x96xf32>
    %303 = vector.shape_cast %302 : vector<1x2x96xf32> to vector<2x96xf32>
    %cst_64 = arith.constant dense<0.000000e+00> : vector<2x96xf32>
    %304 = tpu.matmul %275, %14, %cst_64 {dimension_numbers = #tpu.dot_dimension_numbers<[1], [0], [0], [1], [0, 0, 1, 1], [], []>} : vector<2x32xf32>, vector<32x96xf32>, vector<2x96xf32> -> vector<2x96xf32>
    %305 = vector.extract_strided_slice %303 {offsets = [0, 0], sizes = [2, 64], strides = [1, 1]} : vector<2x96xf32> to vector<2x64xf32>
    %306 = vector.extract_strided_slice %304 {offsets = [0, 0], sizes = [2, 64], strides = [1, 1]} : vector<2x96xf32> to vector<2x64xf32>
    %307 = arith.addf %305, %306 : vector<2x64xf32>
    %308 = arith.negf %307 : vector<2x64xf32>
    %309 = math.exp %308 : vector<2x64xf32>
    %cst_65 = arith.constant 1.000000e+00 : f32
    %310 = vector.broadcast %cst_65 : f32 to vector<2x64xf32>
    %311 = arith.addf %310, %309 : vector<2x64xf32>
    %312 = arith.divf %310, %311 : vector<2x64xf32>
    %313 = vector.extract_strided_slice %312 {offsets = [0, 0], sizes = [2, 32], strides = [1, 1]} : vector<2x64xf32> to vector<2x32xf32>
    %314 = vector.extract_strided_slice %312 {offsets = [0, 32], sizes = [2, 32], strides = [1, 1]} : vector<2x64xf32> to vector<2x32xf32>
    %315 = vector.extract_strided_slice %303 {offsets = [0, 64], sizes = [2, 32], strides = [1, 1]} : vector<2x96xf32> to vector<2x32xf32>
    %316 = vector.extract_strided_slice %304 {offsets = [0, 64], sizes = [2, 32], strides = [1, 1]} : vector<2x96xf32> to vector<2x32xf32>
    %317 = vector.broadcast %15 : vector<1x32xf32> to vector<2x32xf32>
    %318 = arith.addf %316, %317 : vector<2x32xf32>
    %319 = arith.mulf %313, %318 : vector<2x32xf32>
    %320 = arith.addf %315, %319 : vector<2x32xf32>
    %321 = math.tanh %320 : vector<2x32xf32>
    %cst_66 = arith.constant 1.000000e+00 : f32
    %322 = vector.broadcast %cst_66 : f32 to vector<2x32xf32>
    %323 = arith.subf %322, %314 : vector<2x32xf32>
    %324 = arith.mulf %323, %321 : vector<2x32xf32>
    %325 = arith.mulf %314, %275 : vector<2x32xf32>
    %326 = arith.addf %324, %325 : vector<2x32xf32>
    %cst_67 = arith.constant dense<0.000000e+00> : vector<2x96xf32>
    %327 = tpu.matmul %275, %16, %cst_67 {dimension_numbers = #tpu.dot_dimension_numbers<[1], [0], [0], [1], [0, 0, 1, 1], [], []>} : vector<2x32xf32>, vector<32x96xf32>, vector<2x96xf32> -> vector<2x96xf32>
    %328 = vector.broadcast %17 : vector<1x96xf32> to vector<2x96xf32>
    %329 = arith.addf %327, %328 : vector<2x96xf32>
    %cst_68 = arith.constant dense<0.000000e+00> : vector<2x96xf32>
    %330 = tpu.matmul %301, %18, %cst_68 {dimension_numbers = #tpu.dot_dimension_numbers<[1], [0], [0], [1], [0, 0, 1, 1], [], []>} : vector<2x32xf32>, vector<32x96xf32>, vector<2x96xf32> -> vector<2x96xf32>
    %331 = vector.extract_strided_slice %329 {offsets = [0, 0], sizes = [2, 64], strides = [1, 1]} : vector<2x96xf32> to vector<2x64xf32>
    %332 = vector.extract_strided_slice %330 {offsets = [0, 0], sizes = [2, 64], strides = [1, 1]} : vector<2x96xf32> to vector<2x64xf32>
    %333 = arith.addf %331, %332 : vector<2x64xf32>
    %334 = arith.negf %333 : vector<2x64xf32>
    %335 = math.exp %334 : vector<2x64xf32>
    %cst_69 = arith.constant 1.000000e+00 : f32
    %336 = vector.broadcast %cst_69 : f32 to vector<2x64xf32>
    %337 = arith.addf %336, %335 : vector<2x64xf32>
    %338 = arith.divf %336, %337 : vector<2x64xf32>
    %339 = vector.extract_strided_slice %338 {offsets = [0, 0], sizes = [2, 32], strides = [1, 1]} : vector<2x64xf32> to vector<2x32xf32>
    %340 = vector.extract_strided_slice %338 {offsets = [0, 32], sizes = [2, 32], strides = [1, 1]} : vector<2x64xf32> to vector<2x32xf32>
    %341 = vector.extract_strided_slice %329 {offsets = [0, 64], sizes = [2, 32], strides = [1, 1]} : vector<2x96xf32> to vector<2x32xf32>
    %342 = vector.extract_strided_slice %330 {offsets = [0, 64], sizes = [2, 32], strides = [1, 1]} : vector<2x96xf32> to vector<2x32xf32>
    %343 = vector.broadcast %19 : vector<1x32xf32> to vector<2x32xf32>
    %344 = arith.addf %342, %343 : vector<2x32xf32>
    %345 = arith.mulf %339, %344 : vector<2x32xf32>
    %346 = arith.addf %341, %345 : vector<2x32xf32>
    %347 = math.tanh %346 : vector<2x32xf32>
    %cst_70 = arith.constant 1.000000e+00 : f32
    %348 = vector.broadcast %cst_70 : f32 to vector<2x32xf32>
    %349 = arith.subf %348, %340 : vector<2x32xf32>
    %350 = arith.mulf %349, %347 : vector<2x32xf32>
    %351 = arith.mulf %340, %301 : vector<2x32xf32>
    %352 = arith.addf %350, %351 : vector<2x32xf32>
    %353 = vector.extract_strided_slice %13 {offsets = [7, 0, 0], sizes = [1, 2, 96], strides = [1, 1, 1]} : vector<8x2x96xf32> to vector<1x2x96xf32>
    %354 = vector.shape_cast %353 : vector<1x2x96xf32> to vector<2x96xf32>
    %cst_71 = arith.constant dense<0.000000e+00> : vector<2x96xf32>
    %355 = tpu.matmul %326, %14, %cst_71 {dimension_numbers = #tpu.dot_dimension_numbers<[1], [0], [0], [1], [0, 0, 1, 1], [], []>} : vector<2x32xf32>, vector<32x96xf32>, vector<2x96xf32> -> vector<2x96xf32>
    %356 = vector.extract_strided_slice %354 {offsets = [0, 0], sizes = [2, 64], strides = [1, 1]} : vector<2x96xf32> to vector<2x64xf32>
    %357 = vector.extract_strided_slice %355 {offsets = [0, 0], sizes = [2, 64], strides = [1, 1]} : vector<2x96xf32> to vector<2x64xf32>
    %358 = arith.addf %356, %357 : vector<2x64xf32>
    %359 = arith.negf %358 : vector<2x64xf32>
    %360 = math.exp %359 : vector<2x64xf32>
    %cst_72 = arith.constant 1.000000e+00 : f32
    %361 = vector.broadcast %cst_72 : f32 to vector<2x64xf32>
    %362 = arith.addf %361, %360 : vector<2x64xf32>
    %363 = arith.divf %361, %362 : vector<2x64xf32>
    %364 = vector.extract_strided_slice %363 {offsets = [0, 0], sizes = [2, 32], strides = [1, 1]} : vector<2x64xf32> to vector<2x32xf32>
    %365 = vector.extract_strided_slice %363 {offsets = [0, 32], sizes = [2, 32], strides = [1, 1]} : vector<2x64xf32> to vector<2x32xf32>
    %366 = vector.extract_strided_slice %354 {offsets = [0, 64], sizes = [2, 32], strides = [1, 1]} : vector<2x96xf32> to vector<2x32xf32>
    %367 = vector.extract_strided_slice %355 {offsets = [0, 64], sizes = [2, 32], strides = [1, 1]} : vector<2x96xf32> to vector<2x32xf32>
    %368 = vector.broadcast %15 : vector<1x32xf32> to vector<2x32xf32>
    %369 = arith.addf %367, %368 : vector<2x32xf32>
    %370 = arith.mulf %364, %369 : vector<2x32xf32>
    %371 = arith.addf %366, %370 : vector<2x32xf32>
    %372 = math.tanh %371 : vector<2x32xf32>
    %cst_73 = arith.constant 1.000000e+00 : f32
    %373 = vector.broadcast %cst_73 : f32 to vector<2x32xf32>
    %374 = arith.subf %373, %365 : vector<2x32xf32>
    %375 = arith.mulf %374, %372 : vector<2x32xf32>
    %376 = arith.mulf %365, %326 : vector<2x32xf32>
    %377 = arith.addf %375, %376 : vector<2x32xf32>
    %cst_74 = arith.constant dense<0.000000e+00> : vector<2x96xf32>
    %378 = tpu.matmul %326, %16, %cst_74 {dimension_numbers = #tpu.dot_dimension_numbers<[1], [0], [0], [1], [0, 0, 1, 1], [], []>} : vector<2x32xf32>, vector<32x96xf32>, vector<2x96xf32> -> vector<2x96xf32>
    %379 = vector.broadcast %17 : vector<1x96xf32> to vector<2x96xf32>
    %380 = arith.addf %378, %379 : vector<2x96xf32>
    %cst_75 = arith.constant dense<0.000000e+00> : vector<2x96xf32>
    %381 = tpu.matmul %352, %18, %cst_75 {dimension_numbers = #tpu.dot_dimension_numbers<[1], [0], [0], [1], [0, 0, 1, 1], [], []>} : vector<2x32xf32>, vector<32x96xf32>, vector<2x96xf32> -> vector<2x96xf32>
    %382 = vector.extract_strided_slice %380 {offsets = [0, 0], sizes = [2, 64], strides = [1, 1]} : vector<2x96xf32> to vector<2x64xf32>
    %383 = vector.extract_strided_slice %381 {offsets = [0, 0], sizes = [2, 64], strides = [1, 1]} : vector<2x96xf32> to vector<2x64xf32>
    %384 = arith.addf %382, %383 : vector<2x64xf32>
    %385 = arith.negf %384 : vector<2x64xf32>
    %386 = math.exp %385 : vector<2x64xf32>
    %cst_76 = arith.constant 1.000000e+00 : f32
    %387 = vector.broadcast %cst_76 : f32 to vector<2x64xf32>
    %388 = arith.addf %387, %386 : vector<2x64xf32>
    %389 = arith.divf %387, %388 : vector<2x64xf32>
    %390 = vector.extract_strided_slice %389 {offsets = [0, 0], sizes = [2, 32], strides = [1, 1]} : vector<2x64xf32> to vector<2x32xf32>
    %391 = vector.extract_strided_slice %389 {offsets = [0, 32], sizes = [2, 32], strides = [1, 1]} : vector<2x64xf32> to vector<2x32xf32>
    %392 = vector.extract_strided_slice %380 {offsets = [0, 64], sizes = [2, 32], strides = [1, 1]} : vector<2x96xf32> to vector<2x32xf32>
    %393 = vector.extract_strided_slice %381 {offsets = [0, 64], sizes = [2, 32], strides = [1, 1]} : vector<2x96xf32> to vector<2x32xf32>
    %394 = vector.broadcast %19 : vector<1x32xf32> to vector<2x32xf32>
    %395 = arith.addf %393, %394 : vector<2x32xf32>
    %396 = arith.mulf %390, %395 : vector<2x32xf32>
    %397 = arith.addf %392, %396 : vector<2x32xf32>
    %398 = math.tanh %397 : vector<2x32xf32>
    %cst_77 = arith.constant 1.000000e+00 : f32
    %399 = vector.broadcast %cst_77 : f32 to vector<2x32xf32>
    %400 = arith.subf %399, %391 : vector<2x32xf32>
    %401 = arith.mulf %400, %398 : vector<2x32xf32>
    %402 = arith.mulf %391, %352 : vector<2x32xf32>
    %403 = arith.addf %401, %402 : vector<2x32xf32>
    %cst_78 = arith.constant dense<0.000000e+00> : vector<2x96xf32>
    %404 = tpu.matmul %377, %16, %cst_78 {dimension_numbers = #tpu.dot_dimension_numbers<[1], [0], [0], [1], [0, 0, 1, 1], [], []>} : vector<2x32xf32>, vector<32x96xf32>, vector<2x96xf32> -> vector<2x96xf32>
    %405 = vector.broadcast %17 : vector<1x96xf32> to vector<2x96xf32>
    %406 = arith.addf %404, %405 : vector<2x96xf32>
    %cst_79 = arith.constant dense<0.000000e+00> : vector<2x96xf32>
    %407 = tpu.matmul %403, %18, %cst_79 {dimension_numbers = #tpu.dot_dimension_numbers<[1], [0], [0], [1], [0, 0, 1, 1], [], []>} : vector<2x32xf32>, vector<32x96xf32>, vector<2x96xf32> -> vector<2x96xf32>
    %408 = vector.extract_strided_slice %406 {offsets = [0, 0], sizes = [2, 64], strides = [1, 1]} : vector<2x96xf32> to vector<2x64xf32>
    %409 = vector.extract_strided_slice %407 {offsets = [0, 0], sizes = [2, 64], strides = [1, 1]} : vector<2x96xf32> to vector<2x64xf32>
    %410 = arith.addf %408, %409 : vector<2x64xf32>
    %411 = arith.negf %410 : vector<2x64xf32>
    %412 = math.exp %411 : vector<2x64xf32>
    %cst_80 = arith.constant 1.000000e+00 : f32
    %413 = vector.broadcast %cst_80 : f32 to vector<2x64xf32>
    %414 = arith.addf %413, %412 : vector<2x64xf32>
    %415 = arith.divf %413, %414 : vector<2x64xf32>
    %416 = vector.extract_strided_slice %415 {offsets = [0, 0], sizes = [2, 32], strides = [1, 1]} : vector<2x64xf32> to vector<2x32xf32>
    %417 = vector.extract_strided_slice %415 {offsets = [0, 32], sizes = [2, 32], strides = [1, 1]} : vector<2x64xf32> to vector<2x32xf32>
    %418 = vector.extract_strided_slice %406 {offsets = [0, 64], sizes = [2, 32], strides = [1, 1]} : vector<2x96xf32> to vector<2x32xf32>
    %419 = vector.extract_strided_slice %407 {offsets = [0, 64], sizes = [2, 32], strides = [1, 1]} : vector<2x96xf32> to vector<2x32xf32>
    %420 = vector.broadcast %19 : vector<1x32xf32> to vector<2x32xf32>
    %421 = arith.addf %419, %420 : vector<2x32xf32>
    %422 = arith.mulf %416, %421 : vector<2x32xf32>
    %423 = arith.addf %418, %422 : vector<2x32xf32>
    %424 = math.tanh %423 : vector<2x32xf32>
    %cst_81 = arith.constant 1.000000e+00 : f32
    %425 = vector.broadcast %cst_81 : f32 to vector<2x32xf32>
    %426 = arith.subf %425, %417 : vector<2x32xf32>
    %427 = arith.mulf %426, %424 : vector<2x32xf32>
    %428 = arith.mulf %417, %403 : vector<2x32xf32>
    %429 = arith.addf %427, %428 : vector<2x32xf32>
    %430 = vector.shape_cast %97 : vector<2x32xf32> to vector<1x2x32xf32>
    %431 = vector.shape_cast %148 : vector<2x32xf32> to vector<1x2x32xf32>
    %432 = vector.shape_cast %199 : vector<2x32xf32> to vector<1x2x32xf32>
    %433 = vector.shape_cast %250 : vector<2x32xf32> to vector<1x2x32xf32>
    %434 = vector.shape_cast %301 : vector<2x32xf32> to vector<1x2x32xf32>
    %435 = vector.shape_cast %352 : vector<2x32xf32> to vector<1x2x32xf32>
    %436 = vector.shape_cast %403 : vector<2x32xf32> to vector<1x2x32xf32>
    %437 = vector.shape_cast %429 : vector<2x32xf32> to vector<1x2x32xf32>
    %438 = tpu.concatenate %430, %431, %432, %433, %434, %435, %436, %437 in 0 : vector<1x2x32xf32>, vector<1x2x32xf32>, vector<1x2x32xf32>, vector<1x2x32xf32>, vector<1x2x32xf32>, vector<1x2x32xf32>, vector<1x2x32xf32>, vector<1x2x32xf32> -> vector<8x2x32xf32>
    %439 = vector.extract_strided_slice %438 {offsets = [0, 0, 0], sizes = [8, 2, 16], strides = [1, 1, 1]} : vector<8x2x32xf32> to vector<8x2x16xf32>
    %440 = vector.extract_strided_slice %438 {offsets = [0, 0, 16], sizes = [8, 2, 16], strides = [1, 1, 1]} : vector<8x2x32xf32> to vector<8x2x16xf32>
    %441 = tpu.concatenate %439, %440 in 0 : vector<8x2x16xf32>, vector<8x2x16xf32> -> vector<16x2x16xf32>
    %442 = vector.shape_cast %441 : vector<16x2x16xf32> to vector<16x32xf32>
    %c0_82 = arith.constant 0 : index
    %c0_83 = arith.constant 0 : index
    %443 = vector.load %arg11[%c0_82, %c0_83] : memref<4x16xf32, #tpu.memory_space<vmem>>, vector<4x16xf32>
    %cst_84 = arith.constant dense<0.000000e+00> : vector<4x32xf32>
    %444 = tpu.matmul %443, %442, %cst_84 {dimension_numbers = #tpu.dot_dimension_numbers<[1], [0], [0], [1], [0, 0, 1, 1], [], []>} : vector<4x16xf32>, vector<16x32xf32>, vector<4x32xf32> -> vector<4x32xf32>
    %c0_85 = arith.constant 0 : index
    %c0_86 = arith.constant 0 : index
    %445 = vector.load %arg12[%c0_85, %c0_86] : memref<4x1xf32, #tpu.memory_space<vmem>>, vector<4x1xf32>
    %446 = vector.broadcast %445 : vector<4x1xf32> to vector<4x32xf32>
    %447 = arith.addf %444, %446 : vector<4x32xf32>
    %c0_87 = arith.constant 0 : index
    %c0_88 = arith.constant 0 : index
    %448 = vector.load %arg13[%c0_87, %c0_88] : memref<4x32xf32, #tpu.memory_space<vmem>>, vector<4x32xf32>
    tpu.vector_store %arg13[%c0_87, %c0_88], %447 {strides = array<i32>} : memref<4x32xf32, #tpu.memory_space<vmem>>, vector<4x32xf32>,
    return
  }
}

</mosaic_0001>

<llo_original>
// kernel: tpu_custom_call.1
$region0: #{tpu_custom_call.1}
  #allocation0 [shape = 'u32[]', space=smem, size = 0x4, offset = 0x4, fixed_abs, tag = 'smem constant byte address 0x4 - core index']
  #allocation1 [shape = 'u32[144,128]{1,0:T(1,128)}', space=vmem, size = 0x12000, scoped, tag = 'internal scratch']
  %s0 = inlined_call_operand.hbm [shape: f32[16,16], index: 0, kind: input, shape index: {}]
  %s1 = inlined_call_operand.vmem [shape: f32[2,8,4], index: 1, kind: input, shape index: {}]
  %s2 = inlined_call_operand.vmem [shape: f32[4,96], index: 2, kind: input, shape index: {}]
  %s3 = inlined_call_operand.vmem [shape: f32[4,96], index: 3, kind: input, shape index: {}]
  %s4 = inlined_call_operand.vmem [shape: f32[1,96], index: 4, kind: input, shape index: {}]
  %s5 = inlined_call_operand.vmem [shape: f32[32,96], index: 5, kind: input, shape index: {}]
  %s6 = inlined_call_operand.vmem [shape: f32[1,32], index: 6, kind: input, shape index: {}]
  %s7 = inlined_call_operand.hbm [shape: f32[32,96], index: 7, kind: input, shape index: {}]
  %s8 = inlined_call_operand.vmem [shape: f32[1,96], index: 8, kind: input, shape index: {}]
  %s9 = inlined_call_operand.hbm [shape: f32[32,96], index: 9, kind: input, shape index: {}]
  %s10 = inlined_call_operand.vmem [shape: f32[1,32], index: 10, kind: input, shape index: {}]
  %s11 = inlined_call_operand.vmem [shape: f32[4,16], index: 11, kind: input, shape index: {}]
  %s12 = inlined_call_operand.vmem [shape: f32[4,1], index: 12, kind: input, shape index: {}]
  %s13 = inlined_call_operand.hbm [shape: f32[4,32], index: 13, kind: output, shape index: {}]
  %s14 = sld [smem:[#allocation0]]
  $region74: #{tpu_custom_call.1} parent=0
    _
  %s16 = ssub.s32 1, %s14
  %s17 = scalar_select 0, %s16, %s14
  $region1: #{tpu_custom_call.1} parent=0
    #allocation2 [shape = 'u8[8192]{0}', space=vmem, size = 0x2000, scoped, tag = 'input window, operand 0, single buffered']
    #allocation3 [shape = 's32[1]{0}', space=sflag, size = 0x4, scoped, tag = 'scoped memory for tpu_custom_call.1']
    #allocation4 [shape = 's32[1]{0}', space=sflag, size = 0x4, scoped, tag = 'scoped memory for tpu_custom_call.1']
    #allocation5 [shape = 'u8[16384]{0}', space=vmem, size = 0x4000, scoped, tag = 'input window, operand 7, single buffered']
    #allocation6 [shape = 's32[1]{0}', space=sflag, size = 0x4, scoped, tag = 'scoped memory for tpu_custom_call.1']
    #allocation7 [shape = 'u8[16384]{0}', space=vmem, size = 0x4000, scoped, tag = 'input window, operand 9, single buffered']
    #allocation8 [shape = 'u8[2048]{0}', space=vmem, size = 0x800, scoped, tag = 'output window, operand 0, single buffered']
    %18 = vsyncpa [#allocation3], 0
    %19 = vsyncpa [#allocation6], 0
    %20 = vsyncpa [#allocation4], 0
    // Predicated region
    $region2: #{tpu_custom_call.1} parent=1 // pred_check
      _
    $region3: #{tpu_custom_call.1} parent=1 // pred_check_branch
      %22 = sbr.rel (0) target = $region5
    $region4: #{tpu_custom_call.1} parent=1 // pred_region
      %s24 = ssub.s32 256, 256
      %25 = vsyncadd [#allocation3], %s24
      %s26 = sshll.u32 [#allocation2], 4
      %s27 = int_to_ptr.vmem [resolvable:$true] %s26
      %32 = dma.hbm_to_vmem [thread:$0]  %s0, 256, %s27, [#allocation3], 128, 128, 8
    $region5: #{tpu_custom_call.1} parent=1 // pred_fallthru
      _
    // Predicated region
    $region6: #{tpu_custom_call.1} parent=1 // pred_check
      _
    $region7: #{tpu_custom_call.1} parent=1 // pred_check_branch
      %34 = sbr.rel (0) target = $region9
    $region8: #{tpu_custom_call.1} parent=1 // pred_region
      _
    $region9: #{tpu_custom_call.1} parent=1 // pred_fallthru
      _
    // Predicated region
    $region10: #{tpu_custom_call.1} parent=1 // pred_check
      _
    $region11: #{tpu_custom_call.1} parent=1 // pred_check_branch
      %36 = sbr.rel (0) target = $region13
    $region12: #{tpu_custom_call.1} parent=1 // pred_region
      _
    $region13: #{tpu_custom_call.1} parent=1 // pred_fallthru
      _
    // Predicated region
    $region14: #{tpu_custom_call.1} parent=1 // pred_check
      _
    $region15: #{tpu_custom_call.1} parent=1 // pred_check_branch
      %38 = sbr.rel (0) target = $region17
    $region16: #{tpu_custom_call.1} parent=1 // pred_region
      _
    $region17: #{tpu_custom_call.1} parent=1 // pred_fallthru
      _
    // Predicated region
    $region18: #{tpu_custom_call.1} parent=1 // pred_check
      _
    $region19: #{tpu_custom_call.1} parent=1 // pred_check_branch
      %40 = sbr.rel (0) target = $region21
    $region20: #{tpu_custom_call.1} parent=1 // pred_region
      _
    $region21: #{tpu_custom_call.1} parent=1 // pred_fallthru
      _
    // Predicated region
    $region22: #{tpu_custom_call.1} parent=1 // pred_check
      _
    $region23: #{tpu_custom_call.1} parent=1 // pred_check_branch
      %42 = sbr.rel (0) target = $region25
    $region24: #{tpu_custom_call.1} parent=1 // pred_region
      _
    $region25: #{tpu_custom_call.1} parent=1 // pred_fallthru
      _
    // Predicated region
    $region26: #{tpu_custom_call.1} parent=1 // pred_check
      _
    $region27: #{tpu_custom_call.1} parent=1 // pred_check_branch
      %44 = sbr.rel (0) target = $region29
    $region28: #{tpu_custom_call.1} parent=1 // pred_region
      _
    $region29: #{tpu_custom_call.1} parent=1 // pred_fallthru
      _
    // Predicated region
    $region30: #{tpu_custom_call.1} parent=1 // pred_check
      _
    $region31: #{tpu_custom_call.1} parent=1 // pred_check_branch
      %46 = sbr.rel (0) target = $region33
    $region32: #{tpu_custom_call.1} parent=1 // pred_region
      %s48 = ssub.s32 512, 512
      %49 = vsyncadd [#allocation6], %s48
      %s50 = sshll.u32 [#allocation5], 4
      %s51 = int_to_ptr.vmem [resolvable:$true] %s50
      %56 = dma.hbm_to_vmem [thread:$0]  %s7, 512, %s51, [#allocation6], 128, 128, 8
    $region33: #{tpu_custom_call.1} parent=1 // pred_fallthru
      _
    // Predicated region
    $region34: #{tpu_custom_call.1} parent=1 // pred_check
      _
    $region35: #{tpu_custom_call.1} parent=1 // pred_check_branch
      %58 = sbr.rel (0) target = $region37
    $region36: #{tpu_custom_call.1} parent=1 // pred_region
      _
    $region37: #{tpu_custom_call.1} parent=1 // pred_fallthru
      _
    // Predicated region
    $region38: #{tpu_custom_call.1} parent=1 // pred_check
      _
    $region39: #{tpu_custom_call.1} parent=1 // pred_check_branch
      %60 = sbr.rel (0) target = $region41
    $region40: #{tpu_custom_call.1} parent=1 // pred_region
      %s62 = ssub.s32 512, 512
      %63 = vsyncadd [#allocation6], %s62
      %s64 = sshll.u32 [#allocation7], 4
      %s65 = int_to_ptr.vmem [resolvable:$true] %s64
      %70 = dma.hbm_to_vmem [thread:$0]  %s9, 512, %s65, [#allocation6], 128, 128, 8
    $region41: #{tpu_custom_call.1} parent=1 // pred_fallthru
      _
    // Predicated region
    $region42: #{tpu_custom_call.1} parent=1 // pred_check
      _
    $region43: #{tpu_custom_call.1} parent=1 // pred_check_branch
      %72 = sbr.rel (0) target = $region45
    $region44: #{tpu_custom_call.1} parent=1 // pred_region
      _
    $region45: #{tpu_custom_call.1} parent=1 // pred_fallthru
      _
    // Predicated region
    $region46: #{tpu_custom_call.1} parent=1 // pred_check
      _
    $region47: #{tpu_custom_call.1} parent=1 // pred_check_branch
      %74 = sbr.rel (0) target = $region49
    $region48: #{tpu_custom_call.1} parent=1 // pred_region
      _
    $region49: #{tpu_custom_call.1} parent=1 // pred_fallthru
      _
    // Predicated region
    $region50: #{tpu_custom_call.1} parent=1 // pred_check
      _
    $region51: #{tpu_custom_call.1} parent=1 // pred_check_branch
      %76 = sbr.rel (0) target = $region53
    $region52: #{tpu_custom_call.1} parent=1 // pred_region
      _
    $region53: #{tpu_custom_call.1} parent=1 // pred_fallthru
      _
    // Predicated region
    $region54: #{tpu_custom_call.1} parent=1 // pred_check
      _
    $region55: #{tpu_custom_call.1} parent=1 // pred_check_branch
      %78 = sbr.rel (0) target = $region57
    $region56: #{tpu_custom_call.1} parent=1 // pred_region
      %79 = dma.done [#allocation3], 256
    $region57: #{tpu_custom_call.1} parent=1 // pred_fallthru
      _
    // Predicated region
    $region58: #{tpu_custom_call.1} parent=1 // pred_check
      _
    $region59: #{tpu_custom_call.1} parent=1 // pred_check_branch
      %81 = sbr.rel (0) target = $region61
    $region60: #{tpu_custom_call.1} parent=1 // pred_region
      %82 = dma.done [#allocation6], 512
    $region61: #{tpu_custom_call.1} parent=1 // pred_fallthru
      _
    // Predicated region
    $region62: #{tpu_custom_call.1} parent=1 // pred_check
      _
    $region63: #{tpu_custom_call.1} parent=1 // pred_check_branch
      %84 = sbr.rel (0) target = $region65
    $region64: #{tpu_custom_call.1} parent=1 // pred_region
      %85 = dma.done [#allocation6], 512
    $region65: #{tpu_custom_call.1} parent=1 // pred_fallthru
      _
    %v86 = vld [vmem:[%s1] sm:$0xff]
    %v87 = vld [vmem:[%s1 + $0x8] sm:$0xff]
    %v88 = vcombine.high %v86, 0.0
    %v90 = vunpack.c.l.s4 1983009808
    %v91 = vunpack.c.0.s8 %v90
    %v92 = vlaneseq
    %v93 = vshrl.u32 %v92, 7
    %v94 = vsub.s32 %v91, %v93
    %v95 = vrot.slane %v86, %v94
    %v97 = vunpack.c.l.s4 1983009808
    %v98 = vunpack.c.0.s8 %v97
    %v99 = vlaneseq
    %v100 = vshrl.u32 %v99, 7
    %v101 = vsub.s32 %v98, %v100
    %v102 = vrot.slane %v88, %v101
    %v103 = vcombine.high %v87, 0.0
    %v105 = vunpack.c.l.s4 1983009808
    %v106 = vunpack.c.0.s8 %v105
    %v107 = vlaneseq
    %v108 = vshrl.u32 %v107, 7
    %v109 = vsub.s32 %v106, %v108
    %v110 = vrot.slane %v87, %v109
    %v112 = vunpack.c.l.s4 1983009808
    %v113 = vunpack.c.0.s8 %v112
    %v114 = vlaneseq
    %v115 = vshrl.u32 %v114, 7
    %v116 = vsub.s32 %v113, %v115
    %v117 = vrot.slane %v103, %v116
    %v118 = vcombine.low %v95, %v110
    %v119 = vcombine.high %v95, %v110
    %v121 = vunpack.c.l.s4 1934713408
    %v122 = vunpack.c.0.s8 %v121
    %v123 = vlaneseq
    %v124 = vshrl.u32 %v123, 7
    %v125 = vsub.s32 %v122, %v124
    %v126 = vrot.slane %v118, %v125
    %v128 = vunpack.c.l.s4 1934713408
    %v129 = vunpack.c.0.s8 %v128
    %v130 = vlaneseq
    %v131 = vshrl.u32 %v130, 7
    %v132 = vsub.s32 %v129, %v131
    %v133 = vrot.slane %v119, %v132
    %v134 = vcombine.low %v102, %v117
    %v135 = vcombine.high %v102, %v117
    %v137 = vunpack.c.l.s4 1934713408
    %v138 = vunpack.c.0.s8 %v137
    %v139 = vlaneseq
    %v140 = vshrl.u32 %v139, 7
    %v141 = vsub.s32 %v138, %v140
    %v142 = vrot.slane %v134, %v141
    %v144 = vunpack.c.l.s4 1934713408
    %v145 = vunpack.c.0.s8 %v144
    %v146 = vlaneseq
    %v147 = vshrl.u32 %v146, 7
    %v148 = vsub.s32 %v145, %v147
    %v149 = vrot.slane %v135, %v148
    %v150 = vcombine.high %v126, 0.0
    %v151 = vcombine.high %v133, 0.0
    %v152 = vcombine.high %v142, 0.0
    %v153 = vcombine.high %v149, 0.0
    %v154 = vld [vmem:[%s3] sm:$0xf]
    %v163 = vcombine.low %v126, %v150
    %v164 = vcombine.low %v133, %v151
    %v166 = vunpack.c.l.s4 1983009808
    %v167 = vunpack.c.0.s8 %v166
    %v168 = vlaneseq
    %v169 = vshrl.u32 %v168, 7
    %v170 = vsub.s32 %v167, %v169
    %v171 = vrot.slane %v163, %v170
    %v173 = vunpack.c.l.s4 1983009808
    %v174 = vunpack.c.0.s8 %v173
    %v175 = vlaneseq
    %v176 = vshrl.u32 %v175, 7
    %v177 = vsub.s32 %v174, %v176
    %v178 = vrot.slane %v164, %v177
    %v179 = vcombine.low %v171, %v178
    %v180 = vcombine.low %v142, %v152
    %v181 = vcombine.low %v149, %v153
    %v183 = vunpack.c.l.s4 1983009808
    %v184 = vunpack.c.0.s8 %v183
    %v185 = vlaneseq
    %v186 = vshrl.u32 %v185, 7
    %v187 = vsub.s32 %v184, %v186
    %v188 = vrot.slane %v180, %v187
    %v190 = vunpack.c.l.s4 1983009808
    %v191 = vunpack.c.0.s8 %v190
    %v192 = vlaneseq
    %v193 = vshrl.u32 %v192, 7
    %v194 = vsub.s32 %v191, %v193
    %v195 = vrot.slane %v181, %v194
    %v196 = vcombine.low %v188, %v195
    %vm197 = vcmask 31744
    %v198 = vsel %vm197, %v179, 0
    %v200 = vsel %vm197, %v196, 0
    %vm202 = vcmask 1043456
    %v204 = vsel %vm202, %v154, 0
    %206 = vmatprep.subr.mxu0 0.0
    %207 = vmatpush1.msra.mxu0 %v204
    %208 = vmatprep.subr.mxu0 0.0
    %209 = vmatpush1.msra.mxu0 0.0
    %210 = vmatprep.subr.mxu0 0.0
    %211 = vmatpush1.msra.mxu0 0.0
    %212 = vmatprep.subr.mxu0 0.0
    %213 = vmatpush1.msra.mxu0 0.0
    %214 = vmatprep.subr.mxu0 0.0
    %215 = vmatpush1.msra.mxu0 0.0
    %216 = vmatprep.subr.mxu0 0.0
    %217 = vmatpush1.msra.mxu0 0.0
    %218 = vmatprep.subr.mxu0 0.0
    %219 = vmatpush1.msra.mxu0 0.0
    %220 = vmatprep.subr.mxu0 0.0
    %221 = vmatpush1.msra.mxu0 0.0
    %222 = vmatprep.subr.mxu0 0.0
    %223 = vmatpush1.msra.mxu0 0.0
    %224 = vmatprep.subr.mxu0 0.0
    %225 = vmatpush1.msra.mxu0 0.0
    %226 = vmatprep.subr.mxu0 0.0
    %227 = vmatpush1.msra.mxu0 0.0
    %228 = vmatprep.subr.mxu0 0.0
    %229 = vmatpush1.msra.mxu0 0.0
    %230 = vmatprep.subr.mxu0 0.0
    %231 = vmatpush1.msra.mxu0 0.0
    %232 = vmatprep.subr.mxu0 0.0
    %233 = vmatpush1.msra.mxu0 0.0
    %234 = vmatprep.subr.mxu0 0.0
    %235 = vmatpush1.msra.mxu0 0.0
    %236 = vmatprep.subr.mxu0 0.0
    %237 = vmatpush1.msra.mxu0 0.0
    %238 = vmatprep.subr.mxu0 0.0
    %239 = vmatpush1.msra.mxu0 0.0
    %240 = vmatprep.subr.mxu0 0.0
    %241 = vmatpush1.msra.mxu0 0.0
    %242 = vmatprep.subr.mxu0 0.0
    %243 = vmatpush1.msra.mxu0 0.0
    %244 = vmatprep.subr.mxu0 0.0
    %245 = vmatpush1.msra.mxu0 0.0
    %246 = vmatprep.subr.mxu0 0.0
    %247 = vmatpush1.msra.mxu0 0.0
    %248 = vmatprep.subr.mxu0 0.0
    %249 = vmatpush1.msra.mxu0 0.0
    %250 = vmatprep.subr.mxu0 0.0
    %251 = vmatpush1.msra.mxu0 0.0
    %252 = vmatprep.subr.mxu0 0.0
    %253 = vmatpush1.msra.mxu0 0.0
    %254 = vmatprep.subr.mxu0 0.0
    %255 = vmatpush1.msra.mxu0 0.0
    %256 = vmatprep.subr.mxu0 0.0
    %257 = vmatpush1.msra.mxu0 0.0
    %258 = vmatprep.subr.mxu0 0.0
    %259 = vmatpush1.msra.mxu0 0.0
    %260 = vmatprep.subr.mxu0 0.0
    %261 = vmatpush1.msra.mxu0 0.0
    %262 = vmatprep.subr.mxu0 0.0
    %263 = vmatpush1.msra.mxu0 0.0
    %264 = vmatprep.subr.mxu0 0.0
    %265 = vmatpush1.msra.mxu0 0.0
    %266 = vmatprep.subr.mxu0 0.0
    %267 = vmatpush1.msra.mxu0 0.0
    %268 = vmatprep.subr.mxu0 0.0
    %269 = vmatpush1.msra.mxu0 0.0
    %270 = vmatprep.mubr.f32.mxu0 0.0
    %271 = vmatmul.mubr.f32.gmra.mrb[0].mxu0 %v198
    %v272 = vpop.f32.mrb[0].mxu0
    %v273 = vadd.f32 0.0, %v272
    %v274 = vpop.f32.mrb[0].mxu0
    %275 = vmatprep.mubr.f32.mxu0 0.0
    %276 = vmatmul.mubr.f32.gmra.mrb[0].mxu0 %v200
    %v277 = vpop.f32.mrb[0].mxu0
    %v278 = vadd.f32 0.0, %v277
    %v279 = vpop.f32.mrb[0].mxu0
    %280 = vdwg.mxu0
    %v281 = vld [vmem:[%s2] sm:$0xf]
    %v282 = vld [vmem:[#allocation2] sm:$0xff]
    %v283 = vld [vmem:[#allocation2 + $0x8] sm:$0xff]
    %vm284 = vcmask 130048
    %v286 = vsel %vm284, %v282, 0
    %v289 = vsel %vm284, %v283, 0
    %291 = vmatprep.subr.mxu0 0.0
    %292 = vmatpush1.msra.mxu0 %v273
    %293 = vmatprep.subr.mxu0 0.0
    %294 = vmatpush1.msra.mxu0 %v278
    %295 = vmatprep.subr.mxu0 0.0
    %296 = vmatpush1.msra.mxu0 0.0
    %297 = vmatprep.subr.mxu0 0.0
    %298 = vmatpush1.msra.mxu0 0.0
    %299 = vmatprep.subr.mxu0 0.0
    %300 = vmatpush1.msra.mxu0 0.0
    %301 = vmatprep.subr.mxu0 0.0
    %302 = vmatpush1.msra.mxu0 0.0
    %303 = vmatprep.subr.mxu0 0.0
    %304 = vmatpush1.msra.mxu0 0.0
    %305 = vmatprep.subr.mxu0 0.0
    %306 = vmatpush1.msra.mxu0 0.0
    %307 = vmatprep.subr.mxu0 0.0
    %308 = vmatpush1.msra.mxu0 0.0
    %309 = vmatprep.subr.mxu0 0.0
    %310 = vmatpush1.msra.mxu0 0.0
    %311 = vmatprep.subr.mxu0 0.0
    %312 = vmatpush1.msra.mxu0 0.0
    %313 = vmatprep.subr.mxu0 0.0
    %314 = vmatpush1.msra.mxu0 0.0
    %315 = vmatprep.subr.mxu0 0.0
    %316 = vmatpush1.msra.mxu0 0.0
    %317 = vmatprep.subr.mxu0 0.0
    %318 = vmatpush1.msra.mxu0 0.0
    %319 = vmatprep.subr.mxu0 0.0
    %320 = vmatpush1.msra.mxu0 0.0
    %321 = vmatprep.subr.mxu0 0.0
    %322 = vmatpush1.msra.mxu0 0.0
    %323 = vmatprep.subr.mxu0 0.0
    %324 = vmatpush1.msra.mxu0 0.0
    %325 = vmatprep.subr.mxu0 0.0
    %326 = vmatpush1.msra.mxu0 0.0
    %327 = vmatprep.subr.mxu0 0.0
    %328 = vmatpush1.msra.mxu0 0.0
    %329 = vmatprep.subr.mxu0 0.0
    %330 = vmatpush1.msra.mxu0 0.0
    %331 = vmatprep.subr.mxu0 0.0
    %332 = vmatpush1.msra.mxu0 0.0
    %333 = vmatprep.subr.mxu0 0.0
    %334 = vmatpush1.msra.mxu0 0.0
    %335 = vmatprep.subr.mxu0 0.0
    %336 = vmatpush1.msra.mxu0 0.0
    %337 = vmatprep.subr.mxu0 0.0
    %338 = vmatpush1.msra.mxu0 0.0
    %339 = vmatprep.subr.mxu0 0.0
    %340 = vmatpush1.msra.mxu0 0.0
    %341 = vmatprep.subr.mxu0 0.0
    %342 = vmatpush1.msra.mxu0 0.0
    %343 = vmatprep.subr.mxu0 0.0
    %344 = vmatpush1.msra.mxu0 0.0
    %345 = vmatprep.subr.mxu0 0.0
    %346 = vmatpush1.msra.mxu0 0.0
    %347 = vmatprep.subr.mxu0 0.0
    %348 = vmatpush1.msra.mxu0 0.0
    %349 = vmatprep.subr.mxu0 0.0
    %350 = vmatpush1.msra.mxu0 0.0
    %351 = vmatprep.subr.mxu0 0.0
    %352 = vmatpush1.msra.mxu0 0.0
    %353 = vmatprep.subr.mxu0 0.0
    %354 = vmatpush1.msra.mxu0 0.0
    %355 = vmatprep.mubr.f32.mxu0 0.0
    %356 = vmatmul.mubr.f32.gmra.mrb[0].mxu0 %v286
    %v357 = vpop.f32.mrb[0].mxu0
    %v358 = vadd.f32 0.0, %v357
    %v359 = vpop.f32.mrb[0].mxu0
    %360 = vmatprep.mubr.f32.mxu0 0.0
    %361 = vmatmul.mubr.f32.gmra.mrb[0].mxu0 %v289
    %v362 = vpop.f32.mrb[0].mxu0
    %v363 = vadd.f32 0.0, %v362
    %v364 = vpop.f32.mrb[0].mxu0
    %365 = vdwg.mxu0
    %v367 = vsel %vm202, %v281, 0
    %369 = vmatprep.subr.mxu0 0.0
    %370 = vmatpush1.msra.mxu0 %v367
    %371 = vmatprep.subr.mxu0 0.0
    %372 = vmatpush1.msra.mxu0 0.0
    %373 = vmatprep.subr.mxu0 0.0
    %374 = vmatpush1.msra.mxu0 0.0
    %375 = vmatprep.subr.mxu0 0.0
    %376 = vmatpush1.msra.mxu0 0.0
    %377 = vmatprep.subr.mxu0 0.0
    %378 = vmatpush1.msra.mxu0 0.0
    %379 = vmatprep.subr.mxu0 0.0
    %380 = vmatpush1.msra.mxu0 0.0
    %381 = vmatprep.subr.mxu0 0.0
    %382 = vmatpush1.msra.mxu0 0.0
    %383 = vmatprep.subr.mxu0 0.0
    %384 = vmatpush1.msra.mxu0 0.0
    %385 = vmatprep.subr.mxu0 0.0
    %386 = vmatpush1.msra.mxu0 0.0
    %387 = vmatprep.subr.mxu0 0.0
    %388 = vmatpush1.msra.mxu0 0.0
    %389 = vmatprep.subr.mxu0 0.0
    %390 = vmatpush1.msra.mxu0 0.0
    %391 = vmatprep.subr.mxu0 0.0
    %392 = vmatpush1.msra.mxu0 0.0
    %393 = vmatprep.subr.mxu0 0.0
    %394 = vmatpush1.msra.mxu0 0.0
    %395 = vmatprep.subr.mxu0 0.0
    %396 = vmatpush1.msra.mxu0 0.0
    %397 = vmatprep.subr.mxu0 0.0
    %398 = vmatpush1.msra.mxu0 0.0
    %399 = vmatprep.subr.mxu0 0.0
    %400 = vmatpush1.msra.mxu0 0.0
    %401 = vmatprep.subr.mxu0 0.0
    %402 = vmatpush1.msra.mxu0 0.0
    %403 = vmatprep.subr.mxu0 0.0
    %404 = vmatpush1.msra.mxu0 0.0
    %405 = vmatprep.subr.mxu0 0.0
    %406 = vmatpush1.msra.mxu0 0.0
    %407 = vmatprep.subr.mxu0 0.0
    %408 = vmatpush1.msra.mxu0 0.0
    %409 = vmatprep.subr.mxu0 0.0
    %410 = vmatpush1.msra.mxu0 0.0
    %411 = vmatprep.subr.mxu0 0.0
    %412 = vmatpush1.msra.mxu0 0.0
    %413 = vmatprep.subr.mxu0 0.0
    %414 = vmatpush1.msra.mxu0 0.0
    %415 = vmatprep.subr.mxu0 0.0
    %416 = vmatpush1.msra.mxu0 0.0
    %417 = vmatprep.subr.mxu0 0.0
    %418 = vmatpush1.msra.mxu0 0.0
    %419 = vmatprep.subr.mxu0 0.0
    %420 = vmatpush1.msra.mxu0 0.0
    %421 = vmatprep.subr.mxu0 0.0
    %422 = vmatpush1.msra.mxu0 0.0
    %423 = vmatprep.subr.mxu0 0.0
    %424 = vmatpush1.msra.mxu0 0.0
    %425 = vmatprep.subr.mxu0 0.0
    %426 = vmatpush1.msra.mxu0 0.0
    %427 = vmatprep.subr.mxu0 0.0
    %428 = vmatpush1.msra.mxu0 0.0
    %429 = vmatprep.subr.mxu0 0.0
    %430 = vmatpush1.msra.mxu0 0.0
    %431 = vmatprep.subr.mxu0 0.0
    %432 = vmatpush1.msra.mxu0 0.0
    %433 = vmatprep.mubr.f32.mxu0 0.0
    %434 = vmatmul.mubr.f32.gmra.mrb[0].mxu0 %v198
    %v435 = vpop.f32.mrb[0].mxu0
    %v436 = vadd.f32 %v358, %v435
    %v437 = vpop.f32.mrb[0].mxu0
    %438 = vmatprep.mubr.f32.mxu0 0.0
    %439 = vmatmul.mubr.f32.gmra.mrb[0].mxu0 %v200
    %v440 = vpop.f32.mrb[0].mxu0
    %v441 = vadd.f32 %v363, %v440
    %v442 = vpop.f32.mrb[0].mxu0
    %443 = vdwg.mxu0
    %v444 = vld [vmem:[%s4] sm:$0x1]
    %v446 = vlaneseq
    %v447 = vshrl.u32 %v446, 7
    %v448 = vsub.s32 0, %v447
    %v449 = vrot.slane %v444, %v448
    %v451 = vadd.f32 %v436, %v449
    %v452 = vadd.f32 %v441, %v449
    %v455 = vcombine.high %v451, %v451
    %v457 = vunpack.c.l.s4 1983009808
    %v458 = vunpack.c.0.s8 %v457
    %v459 = vlaneseq
    %v460 = vshrl.u32 %v459, 7
    %v461 = vsub.s32 %v458, %v460
    %v462 = vrot.slane %v451, %v461
    %v464 = vunpack.c.l.s4 1983009808
    %v465 = vunpack.c.0.s8 %v464
    %v466 = vlaneseq
    %v467 = vshrl.u32 %v466, 7
    %v468 = vsub.s32 %v465, %v467
    %v469 = vrot.slane %v455, %v468
    %v470 = vcombine.high %v462, %v462
    %v471 = vcombine.high %v469, %v469
    %v472 = vcombine.high %v452, %v452
    %v474 = vunpack.c.l.s4 1983009808
    %v475 = vunpack.c.0.s8 %v474
    %v476 = vlaneseq
    %v477 = vshrl.u32 %v476, 7
    %v478 = vsub.s32 %v475, %v477
    %v479 = vrot.slane %v452, %v478
    %v481 = vunpack.c.l.s4 1983009808
    %v482 = vunpack.c.0.s8 %v481
    %v483 = vlaneseq
    %v484 = vshrl.u32 %v483, 7
    %v485 = vsub.s32 %v482, %v484
    %v486 = vrot.slane %v472, %v485
    %v487 = vcombine.high %v479, %v479
    %v488 = vcombine.high %v486, %v486
    %v497 = vld [vmem:[%s5] sm:$0xff]
    %v498 = vld [vmem:[%s5 + $0x8] sm:$0xff]
    %v499 = vld [vmem:[%s5 + $0x10] sm:$0xff]
    %v500 = vld [vmem:[%s5 + $0x18] sm:$0xff]
    %v501 = vld [vmem:[%s6] sm:$0x1]
    %v502 = vld [vmem:[#allocation5] sm:$0xff]
    %v503 = vld [vmem:[#allocation5 + $0x8] sm:$0xff]
    %v504 = vld [vmem:[#allocation5 + $0x10] sm:$0xff]
    %v505 = vld [vmem:[#allocation5 + $0x18] sm:$0xff]
    %v506 = vld [vmem:[%s8] sm:$0x1]
    %v507 = vld [vmem:[#allocation7] sm:$0xff]
    %v508 = vld [vmem:[#allocation7 + $0x8] sm:$0xff]
    %v509 = vld [vmem:[#allocation7 + $0x10] sm:$0xff]
    %v510 = vld [vmem:[#allocation7 + $0x18] sm:$0xff]
    %v511 = vld [vmem:[%s10] sm:$0x1]
    %vm512 = vcmask 261120
    %v514 = vsel %vm512, 0.0, 0
    %516 = vmatprep.subr.mxu0 0.0
    %517 = vmatpush1.msra.mxu0 %v497
    %518 = vmatprep.subr.mxu0 0.0
    %519 = vmatpush1.msra.mxu0 %v498
    %520 = vmatprep.subr.mxu0 0.0
    %521 = vmatpush1.msra.mxu0 %v499
    %522 = vmatprep.subr.mxu0 0.0
    %523 = vmatpush1.msra.mxu0 %v500
    %524 = vmatprep.subr.mxu0 0.0
    %525 = vmatpush1.msra.mxu0 0.0
    %526 = vmatprep.subr.mxu0 0.0
    %527 = vmatpush1.msra.mxu0 0.0
    %528 = vmatprep.subr.mxu0 0.0
    %529 = vmatpush1.msra.mxu0 0.0
    %530 = vmatprep.subr.mxu0 0.0
    %531 = vmatpush1.msra.mxu0 0.0
    %532 = vmatprep.subr.mxu0 0.0
    %533 = vmatpush1.msra.mxu0 0.0
    %534 = vmatprep.subr.mxu0 0.0
    %535 = vmatpush1.msra.mxu0 0.0
    %536 = vmatprep.subr.mxu0 0.0
    %537 = vmatpush1.msra.mxu0 0.0
    %538 = vmatprep.subr.mxu0 0.0
    %539 = vmatpush1.msra.mxu0 0.0
    %540 = vmatprep.subr.mxu0 0.0
    %541 = vmatpush1.msra.mxu0 0.0
    %542 = vmatprep.subr.mxu0 0.0
    %543 = vmatpush1.msra.mxu0 0.0
    %544 = vmatprep.subr.mxu0 0.0
    %545 = vmatpush1.msra.mxu0 0.0
    %546 = vmatprep.subr.mxu0 0.0
    %547 = vmatpush1.msra.mxu0 0.0
    %548 = vmatprep.subr.mxu0 0.0
    %549 = vmatpush1.msra.mxu0 0.0
    %550 = vmatprep.subr.mxu0 0.0
    %551 = vmatpush1.msra.mxu0 0.0
    %552 = vmatprep.subr.mxu0 0.0
    %553 = vmatpush1.msra.mxu0 0.0
    %554 = vmatprep.subr.mxu0 0.0
    %555 = vmatpush1.msra.mxu0 0.0
    %556 = vmatprep.subr.mxu0 0.0
    %557 = vmatpush1.msra.mxu0 0.0
    %558 = vmatprep.subr.mxu0 0.0
    %559 = vmatpush1.msra.mxu0 0.0
    %560 = vmatprep.subr.mxu0 0.0
    %561 = vmatpush1.msra.mxu0 0.0
    %562 = vmatprep.subr.mxu0 0.0
    %563 = vmatpush1.msra.mxu0 0.0
    %564 = vmatprep.subr.mxu0 0.0
    %565 = vmatpush1.msra.mxu0 0.0
    %566 = vmatprep.subr.mxu0 0.0
    %567 = vmatpush1.msra.mxu0 0.0
    %568 = vmatprep.subr.mxu0 0.0
    %569 = vmatpush1.msra.mxu0 0.0
    %570 = vmatprep.subr.mxu0 0.0
    %571 = vmatpush1.msra.mxu0 0.0
    %572 = vmatprep.subr.mxu0 0.0
    %573 = vmatpush1.msra.mxu0 0.0
    %574 = vmatprep.subr.mxu0 0.0
    %575 = vmatpush1.msra.mxu0 0.0
    %576 = vmatprep.subr.mxu0 0.0
    %577 = vmatpush1.msra.mxu0 0.0
    %578 = vmatprep.subr.mxu0 0.0
    %579 = vmatpush1.msra.mxu0 0.0
    %580 = vmatprep.mubr.f32.mxu0 0.0
    %581 = vmatmul.mubr.f32.gmra.mrb[0].mxu0 %v514
    %v582 = vpop.f32.mrb[0].mxu0
    %v583 = vadd.f32 0.0, %v582
    %v584 = vpop.f32.mrb[0].mxu0
    %585 = vdwg.mxu0
    %v586 = vadd.f32 %v462, %v583
    %v587 = vxor.u32 %v586, 2147483648
    %v588 = vmul.f32 %v587, 1.442695
    %v589 = vpow.pop %v588
    %v590 = vadd.f32 %v589, 1.0
    %v591 = vrcp.pop %v590
    %v592 = vmul.f32 1.0, %v591
    %v594 = vlaneseq
    %v595 = vshrl.u32 %v594, 7
    %v596 = vsub.s32 0, %v595
    %v597 = vrot.slane %v501, %v596
    %598 = vrot.lane.b32.xlu0 %v597, 64
    %v599 = vpop.permute.xlu0 %598
    %v601 = vadd.f32 %v583, %v599
    %v604 = vunpack.c.l.s4 1983009808
    %v605 = vunpack.c.0.s8 %v604
    %v606 = vlaneseq
    %v607 = vshrl.u32 %v606, 7
    %v608 = vsub.s32 %v605, %v607
    %v609 = vrot.slane %v601, %v608
    %610 = vrot.lane.b32.xlu0 %v609, 64
    %v611 = vpop.permute.xlu0 %610
    %v613 = vmul.f32 %v592, %v611
    %615 = vrot.lane.b32.xlu0 %v613, 64
    %v616 = vpop.permute.xlu0 %615
    %v618 = vadd.f32 %v462, %v616
    %v619 = vtanh.pop %v618
    %v620 = vsub.f32 1.0, %v592
    %622 = vrot.lane.b32.xlu0 %v619, 96
    %v623 = vpop.permute.xlu0 %622
    %v625 = vmul.f32 %v620, %v623
    %v626 = vmul.f32 %v592, 0.0
    %v627 = vadd.f32 %v625, %v626
    %v630 = vunpack.c.l.s4 1983009808
    %v631 = vunpack.c.0.s8 %v630
    %v632 = vlaneseq
    %v633 = vshrl.u32 %v632, 7
    %v634 = vsub.s32 %v631, %v633
    %v635 = vrot.slane %v627, %v634
    %636 = vrot.lane.b32.xlu0 %v635, 96
    %v637 = vpop.permute.xlu0 %636
    %v638 = vsel %vm512, %v637, 0
    %640 = vmatprep.subr.mxu0 0.0
    %641 = vmatpush1.msra.mxu0 %v497
    %642 = vmatprep.subr.mxu0 0.0
    %643 = vmatpush1.msra.mxu0 %v498
    %644 = vmatprep.subr.mxu0 0.0
    %645 = vmatpush1.msra.mxu0 %v499
    %646 = vmatprep.subr.mxu0 0.0
    %647 = vmatpush1.msra.mxu0 %v500
    %648 = vmatprep.subr.mxu0 0.0
    %649 = vmatpush1.msra.mxu0 0.0
    %650 = vmatprep.subr.mxu0 0.0
    %651 = vmatpush1.msra.mxu0 0.0
    %652 = vmatprep.subr.mxu0 0.0
    %653 = vmatpush1.msra.mxu0 0.0
    %654 = vmatprep.subr.mxu0 0.0
    %655 = vmatpush1.msra.mxu0 0.0
    %656 = vmatprep.subr.mxu0 0.0
    %657 = vmatpush1.msra.mxu0 0.0
    %658 = vmatprep.subr.mxu0 0.0
    %659 = vmatpush1.msra.mxu0 0.0
    %660 = vmatprep.subr.mxu0 0.0
    %661 = vmatpush1.msra.mxu0 0.0
    %662 = vmatprep.subr.mxu0 0.0
    %663 = vmatpush1.msra.mxu0 0.0
    %664 = vmatprep.subr.mxu0 0.0
    %665 = vmatpush1.msra.mxu0 0.0
    %666 = vmatprep.subr.mxu0 0.0
    %667 = vmatpush1.msra.mxu0 0.0
    %668 = vmatprep.subr.mxu0 0.0
    %669 = vmatpush1.msra.mxu0 0.0
    %670 = vmatprep.subr.mxu0 0.0
    %671 = vmatpush1.msra.mxu0 0.0
    %672 = vmatprep.subr.mxu0 0.0
    %673 = vmatpush1.msra.mxu0 0.0
    %674 = vmatprep.subr.mxu0 0.0
    %675 = vmatpush1.msra.mxu0 0.0
    %676 = vmatprep.subr.mxu0 0.0
    %677 = vmatpush1.msra.mxu0 0.0
    %678 = vmatprep.subr.mxu0 0.0
    %679 = vmatpush1.msra.mxu0 0.0
    %680 = vmatprep.subr.mxu0 0.0
    %681 = vmatpush1.msra.mxu0 0.0
    %682 = vmatprep.subr.mxu0 0.0
    %683 = vmatpush1.msra.mxu0 0.0
    %684 = vmatprep.subr.mxu0 0.0
    %685 = vmatpush1.msra.mxu0 0.0
    %686 = vmatprep.subr.mxu0 0.0
    %687 = vmatpush1.msra.mxu0 0.0
    %688 = vmatprep.subr.mxu0 0.0
    %689 = vmatpush1.msra.mxu0 0.0
    %690 = vmatprep.subr.mxu0 0.0
    %691 = vmatpush1.msra.mxu0 0.0
    %692 = vmatprep.subr.mxu0 0.0
    %693 = vmatpush1.msra.mxu0 0.0
    %694 = vmatprep.subr.mxu0 0.0
    %695 = vmatpush1.msra.mxu0 0.0
    %696 = vmatprep.subr.mxu0 0.0
    %697 = vmatpush1.msra.mxu0 0.0
    %698 = vmatprep.subr.mxu0 0.0
    %699 = vmatpush1.msra.mxu0 0.0
    %700 = vmatprep.subr.mxu0 0.0
    %701 = vmatpush1.msra.mxu0 0.0
    %702 = vmatprep.subr.mxu0 0.0
    %703 = vmatpush1.msra.mxu0 0.0
    %704 = vmatprep.mubr.f32.mxu0 0.0
    %705 = vmatmul.mubr.f32.gmra.mrb[0].mxu0 %v638
    %v706 = vpop.f32.mrb[0].mxu0
    %v707 = vadd.f32 0.0, %v706
    %v708 = vpop.f32.mrb[0].mxu0
    %709 = vdwg.mxu0
    %v710 = vadd.f32 %v470, %v707
    %v711 = vxor.u32 %v710, 2147483648
    %v712 = vmul.f32 %v711, 1.442695
    %v713 = vpow.pop %v712
    %v714 = vadd.f32 %v713, 1.0
    %v715 = vrcp.pop %v714
    %v716 = vmul.f32 1.0, %v715
    %v717 = vadd.f32 %v707, %v599
    %v720 = vunpack.c.l.s4 1983009808
    %v721 = vunpack.c.0.s8 %v720
    %v722 = vlaneseq
    %v723 = vshrl.u32 %v722, 7
    %v724 = vsub.s32 %v721, %v723
    %v725 = vrot.slane %v717, %v724
    %726 = vrot.lane.b32.xlu0 %v725, 64
    %v727 = vpop.permute.xlu0 %726
    %v729 = vmul.f32 %v716, %v727
    %731 = vrot.lane.b32.xlu0 %v729, 64
    %v732 = vpop.permute.xlu0 %731
    %v734 = vadd.f32 %v470, %v732
    %v735 = vtanh.pop %v734
    %v736 = vsub.f32 1.0, %v716
    %738 = vrot.lane.b32.xlu0 %v735, 96
    %v739 = vpop.permute.xlu0 %738
    %v741 = vmul.f32 %v736, %v739
    %v742 = vmul.f32 %v716, %v627
    %v743 = vadd.f32 %v741, %v742
    %v745 = vlaneseq
    %v746 = vshrl.u32 %v745, 7
    %v747 = vsub.s32 0, %v746
    %v748 = vrot.slane %v506, %v747
    %750 = vmatprep.subr.mxu0 0.0
    %751 = vmatpush1.msra.mxu0 %v502
    %752 = vmatprep.subr.mxu0 0.0
    %753 = vmatpush1.msra.mxu0 %v503
    %754 = vmatprep.subr.mxu0 0.0
    %755 = vmatpush1.msra.mxu0 %v504
    %756 = vmatprep.subr.mxu0 0.0
    %757 = vmatpush1.msra.mxu0 %v505
    %758 = vmatprep.subr.mxu0 0.0
    %759 = vmatpush1.msra.mxu0 0.0
    %760 = vmatprep.subr.mxu0 0.0
    %761 = vmatpush1.msra.mxu0 0.0
    %762 = vmatprep.subr.mxu0 0.0
    %763 = vmatpush1.msra.mxu0 0.0
    %764 = vmatprep.subr.mxu0 0.0
    %765 = vmatpush1.msra.mxu0 0.0
    %766 = vmatprep.subr.mxu0 0.0
    %767 = vmatpush1.msra.mxu0 0.0
    %768 = vmatprep.subr.mxu0 0.0
    %769 = vmatpush1.msra.mxu0 0.0
    %770 = vmatprep.subr.mxu0 0.0
    %771 = vmatpush1.msra.mxu0 0.0
    %772 = vmatprep.subr.mxu0 0.0
    %773 = vmatpush1.msra.mxu0 0.0
    %774 = vmatprep.subr.mxu0 0.0
    %775 = vmatpush1.msra.mxu0 0.0
    %776 = vmatprep.subr.mxu0 0.0
    %777 = vmatpush1.msra.mxu0 0.0
    %778 = vmatprep.subr.mxu0 0.0
    %779 = vmatpush1.msra.mxu0 0.0
    %780 = vmatprep.subr.mxu0 0.0
    %781 = vmatpush1.msra.mxu0 0.0
    %782 = vmatprep.subr.mxu0 0.0
    %783 = vmatpush1.msra.mxu0 0.0
    %784 = vmatprep.subr.mxu0 0.0
    %785 = vmatpush1.msra.mxu0 0.0
    %786 = vmatprep.subr.mxu0 0.0
    %787 = vmatpush1.msra.mxu0 0.0
    %788 = vmatprep.subr.mxu0 0.0
    %789 = vmatpush1.msra.mxu0 0.0
    %790 = vmatprep.subr.mxu0 0.0
    %791 = vmatpush1.msra.mxu0 0.0
    %792 = vmatprep.subr.mxu0 0.0
    %793 = vmatpush1.msra.mxu0 0.0
    %794 = vmatprep.subr.mxu0 0.0
    %795 = vmatpush1.msra.mxu0 0.0
    %796 = vmatprep.subr.mxu0 0.0
    %797 = vmatpush1.msra.mxu0 0.0
    %798 = vmatprep.subr.mxu0 0.0
    %799 = vmatpush1.msra.mxu0 0.0
    %800 = vmatprep.subr.mxu0 0.0
    %801 = vmatpush1.msra.mxu0 0.0
    %802 = vmatprep.subr.mxu0 0.0
    %803 = vmatpush1.msra.mxu0 0.0
    %804 = vmatprep.subr.mxu0 0.0
    %805 = vmatpush1.msra.mxu0 0.0
    %806 = vmatprep.subr.mxu0 0.0
    %807 = vmatpush1.msra.mxu0 0.0
    %808 = vmatprep.subr.mxu0 0.0
    %809 = vmatpush1.msra.mxu0 0.0
    %810 = vmatprep.subr.mxu0 0.0
    %811 = vmatpush1.msra.mxu0 0.0
    %812 = vmatprep.subr.mxu0 0.0
    %813 = vmatpush1.msra.mxu0 0.0
    %814 = vmatprep.mubr.f32.mxu0 0.0
    %815 = vmatmul.mubr.f32.gmra.mrb[0].mxu0 %v638
    %v816 = vpop.f32.mrb[0].mxu0
    %v817 = vadd.f32 %v748, %v816
    %v818 = vpop.f32.mrb[0].mxu0
    %819 = vdwg.mxu0
    %820 = vmatprep.subr.mxu0 0.0
    %821 = vmatpush1.msra.mxu0 %v507
    %822 = vmatprep.subr.mxu0 0.0
    %823 = vmatpush1.msra.mxu0 %v508
    %824 = vmatprep.subr.mxu0 0.0
    %825 = vmatpush1.msra.mxu0 %v509
    %826 = vmatprep.subr.mxu0 0.0
    %827 = vmatpush1.msra.mxu0 %v510
    %828 = vmatprep.subr.mxu0 0.0
    %829 = vmatpush1.msra.mxu0 0.0
    %830 = vmatprep.subr.mxu0 0.0
    %831 = vmatpush1.msra.mxu0 0.0
    %832 = vmatprep.subr.mxu0 0.0
    %833 = vmatpush1.msra.mxu0 0.0
    %834 = vmatprep.subr.mxu0 0.0
    %835 = vmatpush1.msra.mxu0 0.0
    %836 = vmatprep.subr.mxu0 0.0
    %837 = vmatpush1.msra.mxu0 0.0
    %838 = vmatprep.subr.mxu0 0.0
    %839 = vmatpush1.msra.mxu0 0.0
    %840 = vmatprep.subr.mxu0 0.0
    %841 = vmatpush1.msra.mxu0 0.0
    %842 = vmatprep.subr.mxu0 0.0
    %843 = vmatpush1.msra.mxu0 0.0
    %844 = vmatprep.subr.mxu0 0.0
    %845 = vmatpush1.msra.mxu0 0.0
    %846 = vmatprep.subr.mxu0 0.0
    %847 = vmatpush1.msra.mxu0 0.0
    %848 = vmatprep.subr.mxu0 0.0
    %849 = vmatpush1.msra.mxu0 0.0
    %850 = vmatprep.subr.mxu0 0.0
    %851 = vmatpush1.msra.mxu0 0.0
    %852 = vmatprep.subr.mxu0 0.0
    %853 = vmatpush1.msra.mxu0 0.0
    %854 = vmatprep.subr.mxu0 0.0
    %855 = vmatpush1.msra.mxu0 0.0
    %856 = vmatprep.subr.mxu0 0.0
    %857 = vmatpush1.msra.mxu0 0.0
    %858 = vmatprep.subr.mxu0 0.0
    %859 = vmatpush1.msra.mxu0 0.0
    %860 = vmatprep.subr.mxu0 0.0
    %861 = vmatpush1.msra.mxu0 0.0
    %862 = vmatprep.subr.mxu0 0.0
    %863 = vmatpush1.msra.mxu0 0.0
    %864 = vmatprep.subr.mxu0 0.0
    %865 = vmatpush1.msra.mxu0 0.0
    %866 = vmatprep.subr.mxu0 0.0
    %867 = vmatpush1.msra.mxu0 0.0
    %868 = vmatprep.subr.mxu0 0.0
    %869 = vmatpush1.msra.mxu0 0.0
    %870 = vmatprep.subr.mxu0 0.0
    %871 = vmatpush1.msra.mxu0 0.0
    %872 = vmatprep.subr.mxu0 0.0
    %873 = vmatpush1.msra.mxu0 0.0
    %874 = vmatprep.subr.mxu0 0.0
    %875 = vmatpush1.msra.mxu0 0.0
    %876 = vmatprep.subr.mxu0 0.0
    %877 = vmatpush1.msra.mxu0 0.0
    %878 = vmatprep.subr.mxu0 0.0
    %879 = vmatpush1.msra.mxu0 0.0
    %880 = vmatprep.subr.mxu0 0.0
    %881 = vmatpush1.msra.mxu0 0.0
    %882 = vmatprep.subr.mxu0 0.0
    %883 = vmatpush1.msra.mxu0 0.0
    %884 = vmatprep.mubr.f32.mxu0 0.0
    %885 = vmatmul.mubr.f32.gmra.mrb[0].mxu0 %v514
    %v886 = vpop.f32.mrb[0].mxu0
    %v887 = vadd.f32 0.0, %v886
    %v888 = vpop.f32.mrb[0].mxu0
    %889 = vdwg.mxu0
    %v890 = vadd.f32 %v817, %v887
    %v891 = vxor.u32 %v890, 2147483648
    %v892 = vmul.f32 %v891, 1.442695
    %v893 = vpow.pop %v892
    %v894 = vadd.f32 %v893, 1.0
    %v895 = vrcp.pop %v894
    %v896 = vmul.f32 1.0, %v895
    %v898 = vlaneseq
    %v899 = vshrl.u32 %v898, 7
    %v900 = vsub.s32 0, %v899
    %v901 = vrot.slane %v511, %v900
    %902 = vrot.lane.b32.xlu0 %v901, 64
    %v903 = vpop.permute.xlu0 %902
    %v905 = vadd.f32 %v887, %v903
    %907 = vrot.lane.b32.xlu0 %v905, 64
    %v908 = vpop.permute.xlu0 %907
    %v910 = vmul.f32 %v896, %v908
    %912 = vrot.lane.b32.xlu0 %v910, 64
    %v913 = vpop.permute.xlu0 %912
    %v915 = vadd.f32 %v817, %v913
    %v916 = vtanh.pop %v915
    %v917 = vsub.f32 1.0, %v896
    %919 = vrot.lane.b32.xlu0 %v916, 96
    %v920 = vpop.permute.xlu0 %919
    %v922 = vmul.f32 %v917, %v920
    %v923 = vmul.f32 %v896, 0.0
    %v924 = vadd.f32 %v922, %v923
    %v927 = vunpack.c.l.s4 1983009808
    %v928 = vunpack.c.0.s8 %v927
    %v929 = vlaneseq
    %v930 = vshrl.u32 %v929, 7
    %v931 = vsub.s32 %v928, %v930
    %v932 = vrot.slane %v743, %v931
    %933 = vrot.lane.b32.xlu0 %v932, 96
    %v934 = vpop.permute.xlu0 %933
    %v935 = vsel %vm512, %v934, 0
    %937 = vmatprep.subr.mxu0 0.0
    %938 = vmatpush1.msra.mxu0 %v497
    %939 = vmatprep.subr.mxu0 0.0
    %940 = vmatpush1.msra.mxu0 %v498
    %941 = vmatprep.subr.mxu0 0.0
    %942 = vmatpush1.msra.mxu0 %v499
    %943 = vmatprep.subr.mxu0 0.0
    %944 = vmatpush1.msra.mxu0 %v500
    %945 = vmatprep.subr.mxu0 0.0
    %946 = vmatpush1.msra.mxu0 0.0
    %947 = vmatprep.subr.mxu0 0.0
    %948 = vmatpush1.msra.mxu0 0.0
    %949 = vmatprep.subr.mxu0 0.0
    %950 = vmatpush1.msra.mxu0 0.0
    %951 = vmatprep.subr.mxu0 0.0
    %952 = vmatpush1.msra.mxu0 0.0
    %953 = vmatprep.subr.mxu0 0.0
    %954 = vmatpush1.msra.mxu0 0.0
    %955 = vmatprep.subr.mxu0 0.0
    %956 = vmatpush1.msra.mxu0 0.0
    %957 = vmatprep.subr.mxu0 0.0
    %958 = vmatpush1.msra.mxu0 0.0
    %959 = vmatprep.subr.mxu0 0.0
    %960 = vmatpush1.msra.mxu0 0.0
    %961 = vmatprep.subr.mxu0 0.0
    %962 = vmatpush1.msra.mxu0 0.0
    %963 = vmatprep.subr.mxu0 0.0
    %964 = vmatpush1.msra.mxu0 0.0
    %965 = vmatprep.subr.mxu0 0.0
    %966 = vmatpush1.msra.mxu0 0.0
    %967 = vmatprep.subr.mxu0 0.0
    %968 = vmatpush1.msra.mxu0 0.0
    %969 = vmatprep.subr.mxu0 0.0
    %970 = vmatpush1.msra.mxu0 0.0
    %971 = vmatprep.subr.mxu0 0.0
    %972 = vmatpush1.msra.mxu0 0.0
    %973 = vmatprep.subr.mxu0 0.0
    %974 = vmatpush1.msra.mxu0 0.0
    %975 = vmatprep.subr.mxu0 0.0
    %976 = vmatpush1.msra.mxu0 0.0
    %977 = vmatprep.subr.mxu0 0.0
    %978 = vmatpush1.msra.mxu0 0.0
    %979 = vmatprep.subr.mxu0 0.0
    %980 = vmatpush1.msra.mxu0 0.0
    %981 = vmatprep.subr.mxu0 0.0
    %982 = vmatpush1.msra.mxu0 0.0
    %983 = vmatprep.subr.mxu0 0.0
    %984 = vmatpush1.msra.mxu0 0.0
    %985 = vmatprep.subr.mxu0 0.0
    %986 = vmatpush1.msra.mxu0 0.0
    %987 = vmatprep.subr.mxu0 0.0
    %988 = vmatpush1.msra.mxu0 0.0
    %989 = vmatprep.subr.mxu0 0.0
    %990 = vmatpush1.msra.mxu0 0.0
    %991 = vmatprep.subr.mxu0 0.0
    %992 = vmatpush1.msra.mxu0 0.0
    %993 = vmatprep.subr.mxu0 0.0
    %994 = vmatpush1.msra.mxu0 0.0
    %995 = vmatprep.subr.mxu0 0.0
    %996 = vmatpush1.msra.mxu0 0.0
    %997 = vmatprep.subr.mxu0 0.0
    %998 = vmatpush1.msra.mxu0 0.0
    %999 = vmatprep.subr.mxu0 0.0
    %1000 = vmatpush1.msra.mxu0 0.0
    %1001 = vmatprep.mubr.f32.mxu0 0.0
    %1002 = vmatmul.mubr.f32.gmra.mrb[0].mxu0 %v935
    %v1003 = vpop.f32.mrb[0].mxu0
    %v1004 = vadd.f32 0.0, %v1003
    %v1005 = vpop.f32.mrb[0].mxu0
    %1006 = vdwg.mxu0
    %v1007 = vadd.f32 %v469, %v1004
    %v1008 = vxor.u32 %v1007, 2147483648
    %v1009 = vmul.f32 %v1008, 1.442695
    %v1010 = vpow.pop %v1009
    %v1011 = vadd.f32 %v1010, 1.0
    %v1012 = vrcp.pop %v1011
    %v1013 = vmul.f32 1.0, %v1012
    %v1014 = vadd.f32 %v1004, %v599
    %v1017 = vunpack.c.l.s4 1983009808
    %v1018 = vunpack.c.0.s8 %v1017
    %v1019 = vlaneseq
    %v1020 = vshrl.u32 %v1019, 7
    %v1021 = vsub.s32 %v1018, %v1020
    %v1022 = vrot.slane %v1014, %v1021
    %1023 = vrot.lane.b32.xlu0 %v1022, 64
    %v1024 = vpop.permute.xlu0 %1023
    %v1026 = vmul.f32 %v1013, %v1024
    %1028 = vrot.lane.b32.xlu0 %v1026, 64
    %v1029 = vpop.permute.xlu0 %1028
    %v1031 = vadd.f32 %v469, %v1029
    %v1032 = vtanh.pop %v1031
    %v1033 = vsub.f32 1.0, %v1013
    %1035 = vrot.lane.b32.xlu0 %v1032, 96
    %v1036 = vpop.permute.xlu0 %1035
    %v1038 = vmul.f32 %v1033, %v1036
    %v1039 = vmul.f32 %v1013, %v743
    %v1040 = vadd.f32 %v1038, %v1039
    %1041 = vmatprep.subr.mxu0 0.0
    %1042 = vmatpush1.msra.mxu0 %v502
    %1043 = vmatprep.subr.mxu0 0.0
    %1044 = vmatpush1.msra.mxu0 %v503
    %1045 = vmatprep.subr.mxu0 0.0
    %1046 = vmatpush1.msra.mxu0 %v504
    %1047 = vmatprep.subr.mxu0 0.0
    %1048 = vmatpush1.msra.mxu0 %v505
    %1049 = vmatprep.subr.mxu0 0.0
    %1050 = vmatpush1.msra.mxu0 0.0
    %1051 = vmatprep.subr.mxu0 0.0
    %1052 = vmatpush1.msra.mxu0 0.0
    %1053 = vmatprep.subr.mxu0 0.0
    %1054 = vmatpush1.msra.mxu0 0.0
    %1055 = vmatprep.subr.mxu0 0.0
    %1056 = vmatpush1.msra.mxu0 0.0
    %1057 = vmatprep.subr.mxu0 0.0
    %1058 = vmatpush1.msra.mxu0 0.0
    %1059 = vmatprep.subr.mxu0 0.0
    %1060 = vmatpush1.msra.mxu0 0.0
    %1061 = vmatprep.subr.mxu0 0.0
    %1062 = vmatpush1.msra.mxu0 0.0
    %1063 = vmatprep.subr.mxu0 0.0
    %1064 = vmatpush1.msra.mxu0 0.0
    %1065 = vmatprep.subr.mxu0 0.0
    %1066 = vmatpush1.msra.mxu0 0.0
    %1067 = vmatprep.subr.mxu0 0.0
    %1068 = vmatpush1.msra.mxu0 0.0
    %1069 = vmatprep.subr.mxu0 0.0
    %1070 = vmatpush1.msra.mxu0 0.0
    %1071 = vmatprep.subr.mxu0 0.0
    %1072 = vmatpush1.msra.mxu0 0.0
    %1073 = vmatprep.subr.mxu0 0.0
    %1074 = vmatpush1.msra.mxu0 0.0
    %1075 = vmatprep.subr.mxu0 0.0
    %1076 = vmatpush1.msra.mxu0 0.0
    %1077 = vmatprep.subr.mxu0 0.0
    %1078 = vmatpush1.msra.mxu0 0.0
    %1079 = vmatprep.subr.mxu0 0.0
    %1080 = vmatpush1.msra.mxu0 0.0
    %1081 = vmatprep.subr.mxu0 0.0
    %1082 = vmatpush1.msra.mxu0 0.0
    %1083 = vmatprep.subr.mxu0 0.0
    %1084 = vmatpush1.msra.mxu0 0.0
    %1085 = vmatprep.subr.mxu0 0.0
    %1086 = vmatpush1.msra.mxu0 0.0
    %1087 = vmatprep.subr.mxu0 0.0
    %1088 = vmatpush1.msra.mxu0 0.0
    %1089 = vmatprep.subr.mxu0 0.0
    %1090 = vmatpush1.msra.mxu0 0.0
    %1091 = vmatprep.subr.mxu0 0.0
    %1092 = vmatpush1.msra.mxu0 0.0
    %1093 = vmatprep.subr.mxu0 0.0
    %1094 = vmatpush1.msra.mxu0 0.0
    %1095 = vmatprep.subr.mxu0 0.0
    %1096 = vmatpush1.msra.mxu0 0.0
    %1097 = vmatprep.subr.mxu0 0.0
    %1098 = vmatpush1.msra.mxu0 0.0
    %1099 = vmatprep.subr.mxu0 0.0
    %1100 = vmatpush1.msra.mxu0 0.0
    %1101 = vmatprep.subr.mxu0 0.0
    %1102 = vmatpush1.msra.mxu0 0.0
    %1103 = vmatprep.subr.mxu0 0.0
    %1104 = vmatpush1.msra.mxu0 0.0
    %1105 = vmatprep.mubr.f32.mxu0 0.0
    %1106 = vmatmul.mubr.f32.gmra.mrb[0].mxu0 %v935
    %v1107 = vpop.f32.mrb[0].mxu0
    %v1108 = vadd.f32 %v748, %v1107
    %v1109 = vpop.f32.mrb[0].mxu0
    %1110 = vdwg.mxu0
    %1112 = vrot.lane.b32.xlu0 %v924, 96
    %v1113 = vpop.permute.xlu0 %1112
    %v1114 = vsel %vm512, %v1113, 0
    %1116 = vmatprep.subr.mxu0 0.0
    %1117 = vmatpush1.msra.mxu0 %v507
    %1118 = vmatprep.subr.mxu0 0.0
    %1119 = vmatpush1.msra.mxu0 %v508
    %1120 = vmatprep.subr.mxu0 0.0
    %1121 = vmatpush1.msra.mxu0 %v509
    %1122 = vmatprep.subr.mxu0 0.0
    %1123 = vmatpush1.msra.mxu0 %v510
    %1124 = vmatprep.subr.mxu0 0.0
    %1125 = vmatpush1.msra.mxu0 0.0
    %1126 = vmatprep.subr.mxu0 0.0
    %1127 = vmatpush1.msra.mxu0 0.0
    %1128 = vmatprep.subr.mxu0 0.0
    %1129 = vmatpush1.msra.mxu0 0.0
    %1130 = vmatprep.subr.mxu0 0.0
    %1131 = vmatpush1.msra.mxu0 0.0
    %1132 = vmatprep.subr.mxu0 0.0
    %1133 = vmatpush1.msra.mxu0 0.0
    %1134 = vmatprep.subr.mxu0 0.0
    %1135 = vmatpush1.msra.mxu0 0.0
    %1136 = vmatprep.subr.mxu0 0.0
    %1137 = vmatpush1.msra.mxu0 0.0
    %1138 = vmatprep.subr.mxu0 0.0
    %1139 = vmatpush1.msra.mxu0 0.0
    %1140 = vmatprep.subr.mxu0 0.0
    %1141 = vmatpush1.msra.mxu0 0.0
    %1142 = vmatprep.subr.mxu0 0.0
    %1143 = vmatpush1.msra.mxu0 0.0
    %1144 = vmatprep.subr.mxu0 0.0
    %1145 = vmatpush1.msra.mxu0 0.0
    %1146 = vmatprep.subr.mxu0 0.0
    %1147 = vmatpush1.msra.mxu0 0.0
    %1148 = vmatprep.subr.mxu0 0.0
    %1149 = vmatpush1.msra.mxu0 0.0
    %1150 = vmatprep.subr.mxu0 0.0
    %1151 = vmatpush1.msra.mxu0 0.0
    %1152 = vmatprep.subr.mxu0 0.0
    %1153 = vmatpush1.msra.mxu0 0.0
    %1154 = vmatprep.subr.mxu0 0.0
    %1155 = vmatpush1.msra.mxu0 0.0
    %1156 = vmatprep.subr.mxu0 0.0
    %1157 = vmatpush1.msra.mxu0 0.0
    %1158 = vmatprep.subr.mxu0 0.0
    %1159 = vmatpush1.msra.mxu0 0.0
    %1160 = vmatprep.subr.mxu0 0.0
    %1161 = vmatpush1.msra.mxu0 0.0
    %1162 = vmatprep.subr.mxu0 0.0
    %1163 = vmatpush1.msra.mxu0 0.0
    %1164 = vmatprep.subr.mxu0 0.0
    %1165 = vmatpush1.msra.mxu0 0.0
    %1166 = vmatprep.subr.mxu0 0.0
    %1167 = vmatpush1.msra.mxu0 0.0
    %1168 = vmatprep.subr.mxu0 0.0
    %1169 = vmatpush1.msra.mxu0 0.0
    %1170 = vmatprep.subr.mxu0 0.0
    %1171 = vmatpush1.msra.mxu0 0.0
    %1172 = vmatprep.subr.mxu0 0.0
    %1173 = vmatpush1.msra.mxu0 0.0
    %1174 = vmatprep.subr.mxu0 0.0
    %1175 = vmatpush1.msra.mxu0 0.0
    %1176 = vmatprep.subr.mxu0 0.0
    %1177 = vmatpush1.msra.mxu0 0.0
    %1178 = vmatprep.subr.mxu0 0.0
    %1179 = vmatpush1.msra.mxu0 0.0
    %1180 = vmatprep.mubr.f32.mxu0 0.0
    %1181 = vmatmul.mubr.f32.gmra.mrb[0].mxu0 %v1114
    %v1182 = vpop.f32.mrb[0].mxu0
    %v1183 = vadd.f32 0.0, %v1182
    %v1184 = vpop.f32.mrb[0].mxu0
    %1185 = vdwg.mxu0
    %v1186 = vadd.f32 %v1108, %v1183
    %v1187 = vxor.u32 %v1186, 2147483648
    %v1188 = vmul.f32 %v1187, 1.442695
    %v1189 = vpow.pop %v1188
    %v1190 = vadd.f32 %v1189, 1.0
    %v1191 = vrcp.pop %v1190
    %v1192 = vmul.f32 1.0, %v1191
    %v1193 = vadd.f32 %v1183, %v903
    %1195 = vrot.lane.b32.xlu0 %v1193, 64
    %v1196 = vpop.permute.xlu0 %1195
    %v1198 = vmul.f32 %v1192, %v1196
    %1200 = vrot.lane.b32.xlu0 %v1198, 64
    %v1201 = vpop.permute.xlu0 %1200
    %v1203 = vadd.f32 %v1108, %v1201
    %v1204 = vtanh.pop %v1203
    %v1205 = vsub.f32 1.0, %v1192
    %1207 = vrot.lane.b32.xlu0 %v1204, 96
    %v1208 = vpop.permute.xlu0 %1207
    %v1210 = vmul.f32 %v1205, %v1208
    %v1211 = vmul.f32 %v1192, %v924
    %v1212 = vadd.f32 %v1210, %v1211
    %v1215 = vunpack.c.l.s4 1983009808
    %v1216 = vunpack.c.0.s8 %v1215
    %v1217 = vlaneseq
    %v1218 = vshrl.u32 %v1217, 7
    %v1219 = vsub.s32 %v1216, %v1218
    %v1220 = vrot.slane %v1040, %v1219
    %1221 = vrot.lane.b32.xlu0 %v1220, 96
    %v1222 = vpop.permute.xlu0 %1221
    %v1223 = vsel %vm512, %v1222, 0
    %1225 = vmatprep.subr.mxu0 0.0
    %1226 = vmatpush1.msra.mxu0 %v497
    %1227 = vmatprep.subr.mxu0 0.0
    %1228 = vmatpush1.msra.mxu0 %v498
    %1229 = vmatprep.subr.mxu0 0.0
    %1230 = vmatpush1.msra.mxu0 %v499
    %1231 = vmatprep.subr.mxu0 0.0
    %1232 = vmatpush1.msra.mxu0 %v500
    %1233 = vmatprep.subr.mxu0 0.0
    %1234 = vmatpush1.msra.mxu0 0.0
    %1235 = vmatprep.subr.mxu0 0.0
    %1236 = vmatpush1.msra.mxu0 0.0
    %1237 = vmatprep.subr.mxu0 0.0
    %1238 = vmatpush1.msra.mxu0 0.0
    %1239 = vmatprep.subr.mxu0 0.0
    %1240 = vmatpush1.msra.mxu0 0.0
    %1241 = vmatprep.subr.mxu0 0.0
    %1242 = vmatpush1.msra.mxu0 0.0
    %1243 = vmatprep.subr.mxu0 0.0
    %1244 = vmatpush1.msra.mxu0 0.0
    %1245 = vmatprep.subr.mxu0 0.0
    %1246 = vmatpush1.msra.mxu0 0.0
    %1247 = vmatprep.subr.mxu0 0.0
    %1248 = vmatpush1.msra.mxu0 0.0
    %1249 = vmatprep.subr.mxu0 0.0
    %1250 = vmatpush1.msra.mxu0 0.0
    %1251 = vmatprep.subr.mxu0 0.0
    %1252 = vmatpush1.msra.mxu0 0.0
    %1253 = vmatprep.subr.mxu0 0.0
    %1254 = vmatpush1.msra.mxu0 0.0
    %1255 = vmatprep.subr.mxu0 0.0
    %1256 = vmatpush1.msra.mxu0 0.0
    %1257 = vmatprep.subr.mxu0 0.0
    %1258 = vmatpush1.msra.mxu0 0.0
    %1259 = vmatprep.subr.mxu0 0.0
    %1260 = vmatpush1.msra.mxu0 0.0
    %1261 = vmatprep.subr.mxu0 0.0
    %1262 = vmatpush1.msra.mxu0 0.0
    %1263 = vmatprep.subr.mxu0 0.0
    %1264 = vmatpush1.msra.mxu0 0.0
    %1265 = vmatprep.subr.mxu0 0.0
    %1266 = vmatpush1.msra.mxu0 0.0
    %1267 = vmatprep.subr.mxu0 0.0
    %1268 = vmatpush1.msra.mxu0 0.0
    %1269 = vmatprep.subr.mxu0 0.0
    %1270 = vmatpush1.msra.mxu0 0.0
    %1271 = vmatprep.subr.mxu0 0.0
    %1272 = vmatpush1.msra.mxu0 0.0
    %1273 = vmatprep.subr.mxu0 0.0
    %1274 = vmatpush1.msra.mxu0 0.0
    %1275 = vmatprep.subr.mxu0 0.0
    %1276 = vmatpush1.msra.mxu0 0.0
    %1277 = vmatprep.subr.mxu0 0.0
    %1278 = vmatpush1.msra.mxu0 0.0
    %1279 = vmatprep.subr.mxu0 0.0
    %1280 = vmatpush1.msra.mxu0 0.0
    %1281 = vmatprep.subr.mxu0 0.0
    %1282 = vmatpush1.msra.mxu0 0.0
    %1283 = vmatprep.subr.mxu0 0.0
    %1284 = vmatpush1.msra.mxu0 0.0
    %1285 = vmatprep.subr.mxu0 0.0
    %1286 = vmatpush1.msra.mxu0 0.0
    %1287 = vmatprep.subr.mxu0 0.0
    %1288 = vmatpush1.msra.mxu0 0.0
    %1289 = vmatprep.mubr.f32.mxu0 0.0
    %1290 = vmatmul.mubr.f32.gmra.mrb[0].mxu0 %v1223
    %v1291 = vpop.f32.mrb[0].mxu0
    %v1292 = vadd.f32 0.0, %v1291
    %v1293 = vpop.f32.mrb[0].mxu0
    %1294 = vdwg.mxu0
    %v1295 = vadd.f32 %v471, %v1292
    %v1296 = vxor.u32 %v1295, 2147483648
    %v1297 = vmul.f32 %v1296, 1.442695
    %v1298 = vpow.pop %v1297
    %v1299 = vadd.f32 %v1298, 1.0
    %v1300 = vrcp.pop %v1299
    %v1301 = vmul.f32 1.0, %v1300
    %v1302 = vadd.f32 %v1292, %v599
    %v1305 = vunpack.c.l.s4 1983009808
    %v1306 = vunpack.c.0.s8 %v1305
    %v1307 = vlaneseq
    %v1308 = vshrl.u32 %v1307, 7
    %v1309 = vsub.s32 %v1306, %v1308
    %v1310 = vrot.slane %v1302, %v1309
    %1311 = vrot.lane.b32.xlu0 %v1310, 64
    %v1312 = vpop.permute.xlu0 %1311
    %v1314 = vmul.f32 %v1301, %v1312
    %1316 = vrot.lane.b32.xlu0 %v1314, 64
    %v1317 = vpop.permute.xlu0 %1316
    %v1319 = vadd.f32 %v471, %v1317
    %v1320 = vtanh.pop %v1319
    %v1321 = vsub.f32 1.0, %v1301
    %1323 = vrot.lane.b32.xlu0 %v1320, 96
    %v1324 = vpop.permute.xlu0 %1323
    %v1326 = vmul.f32 %v1321, %v1324
    %v1327 = vmul.f32 %v1301, %v1040
    %v1328 = vadd.f32 %v1326, %v1327
    %1329 = vmatprep.subr.mxu0 0.0
    %1330 = vmatpush1.msra.mxu0 %v502
    %1331 = vmatprep.subr.mxu0 0.0
    %1332 = vmatpush1.msra.mxu0 %v503
    %1333 = vmatprep.subr.mxu0 0.0
    %1334 = vmatpush1.msra.mxu0 %v504
    %1335 = vmatprep.subr.mxu0 0.0
    %1336 = vmatpush1.msra.mxu0 %v505
    %1337 = vmatprep.subr.mxu0 0.0
    %1338 = vmatpush1.msra.mxu0 0.0
    %1339 = vmatprep.subr.mxu0 0.0
    %1340 = vmatpush1.msra.mxu0 0.0
    %1341 = vmatprep.subr.mxu0 0.0
    %1342 = vmatpush1.msra.mxu0 0.0
    %1343 = vmatprep.subr.mxu0 0.0
    %1344 = vmatpush1.msra.mxu0 0.0
    %1345 = vmatprep.subr.mxu0 0.0
    %1346 = vmatpush1.msra.mxu0 0.0
    %1347 = vmatprep.subr.mxu0 0.0
    %1348 = vmatpush1.msra.mxu0 0.0
    %1349 = vmatprep.subr.mxu0 0.0
    %1350 = vmatpush1.msra.mxu0 0.0
    %1351 = vmatprep.subr.mxu0 0.0
    %1352 = vmatpush1.msra.mxu0 0.0
    %1353 = vmatprep.subr.mxu0 0.0
    %1354 = vmatpush1.msra.mxu0 0.0
    %1355 = vmatprep.subr.mxu0 0.0
    %1356 = vmatpush1.msra.mxu0 0.0
    %1357 = vmatprep.subr.mxu0 0.0
    %1358 = vmatpush1.msra.mxu0 0.0
    %1359 = vmatprep.subr.mxu0 0.0
    %1360 = vmatpush1.msra.mxu0 0.0
    %1361 = vmatprep.subr.mxu0 0.0
    %1362 = vmatpush1.msra.mxu0 0.0
    %1363 = vmatprep.subr.mxu0 0.0
    %1364 = vmatpush1.msra.mxu0 0.0
    %1365 = vmatprep.subr.mxu0 0.0
    %1366 = vmatpush1.msra.mxu0 0.0
    %1367 = vmatprep.subr.mxu0 0.0
    %1368 = vmatpush1.msra.mxu0 0.0
    %1369 = vmatprep.subr.mxu0 0.0
    %1370 = vmatpush1.msra.mxu0 0.0
    %1371 = vmatprep.subr.mxu0 0.0
    %1372 = vmatpush1.msra.mxu0 0.0
    %1373 = vmatprep.subr.mxu0 0.0
    %1374 = vmatpush1.msra.mxu0 0.0
    %1375 = vmatprep.subr.mxu0 0.0
    %1376 = vmatpush1.msra.mxu0 0.0
    %1377 = vmatprep.subr.mxu0 0.0
    %1378 = vmatpush1.msra.mxu0 0.0
    %1379 = vmatprep.subr.mxu0 0.0
    %1380 = vmatpush1.msra.mxu0 0.0
    %1381 = vmatprep.subr.mxu0 0.0
    %1382 = vmatpush1.msra.mxu0 0.0
    %1383 = vmatprep.subr.mxu0 0.0
    %1384 = vmatpush1.msra.mxu0 0.0
    %1385 = vmatprep.subr.mxu0 0.0
    %1386 = vmatpush1.msra.mxu0 0.0
    %1387 = vmatprep.subr.mxu0 0.0
    %1388 = vmatpush1.msra.mxu0 0.0
    %1389 = vmatprep.subr.mxu0 0.0
    %1390 = vmatpush1.msra.mxu0 0.0
    %1391 = vmatprep.subr.mxu0 0.0
    %1392 = vmatpush1.msra.mxu0 0.0
    %1393 = vmatprep.mubr.f32.mxu0 0.0
    %1394 = vmatmul.mubr.f32.gmra.mrb[0].mxu0 %v1223
    %v1395 = vpop.f32.mrb[0].mxu0
    %v1396 = vadd.f32 %v748, %v1395
    %v1397 = vpop.f32.mrb[0].mxu0
    %1398 = vdwg.mxu0
    %1400 = vrot.lane.b32.xlu0 %v1212, 96
    %v1401 = vpop.permute.xlu0 %1400
    %v1402 = vsel %vm512, %v1401, 0
    %1404 = vmatprep.subr.mxu0 0.0
    %1405 = vmatpush1.msra.mxu0 %v507
    %1406 = vmatprep.subr.mxu0 0.0
    %1407 = vmatpush1.msra.mxu0 %v508
    %1408 = vmatprep.subr.mxu0 0.0
    %1409 = vmatpush1.msra.mxu0 %v509
    %1410 = vmatprep.subr.mxu0 0.0
    %1411 = vmatpush1.msra.mxu0 %v510
    %1412 = vmatprep.subr.mxu0 0.0
    %1413 = vmatpush1.msra.mxu0 0.0
    %1414 = vmatprep.subr.mxu0 0.0
    %1415 = vmatpush1.msra.mxu0 0.0
    %1416 = vmatprep.subr.mxu0 0.0
    %1417 = vmatpush1.msra.mxu0 0.0
    %1418 = vmatprep.subr.mxu0 0.0
    %1419 = vmatpush1.msra.mxu0 0.0
    %1420 = vmatprep.subr.mxu0 0.0
    %1421 = vmatpush1.msra.mxu0 0.0
    %1422 = vmatprep.subr.mxu0 0.0
    %1423 = vmatpush1.msra.mxu0 0.0
    %1424 = vmatprep.subr.mxu0 0.0
    %1425 = vmatpush1.msra.mxu0 0.0
    %1426 = vmatprep.subr.mxu0 0.0
    %1427 = vmatpush1.msra.mxu0 0.0
    %1428 = vmatprep.subr.mxu0 0.0
    %1429 = vmatpush1.msra.mxu0 0.0
    %1430 = vmatprep.subr.mxu0 0.0
    %1431 = vmatpush1.msra.mxu0 0.0
    %1432 = vmatprep.subr.mxu0 0.0
    %1433 = vmatpush1.msra.mxu0 0.0
    %1434 = vmatprep.subr.mxu0 0.0
    %1435 = vmatpush1.msra.mxu0 0.0
    %1436 = vmatprep.subr.mxu0 0.0
    %1437 = vmatpush1.msra.mxu0 0.0
    %1438 = vmatprep.subr.mxu0 0.0
    %1439 = vmatpush1.msra.mxu0 0.0
    %1440 = vmatprep.subr.mxu0 0.0
    %1441 = vmatpush1.msra.mxu0 0.0
    %1442 = vmatprep.subr.mxu0 0.0
    %1443 = vmatpush1.msra.mxu0 0.0
    %1444 = vmatprep.subr.mxu0 0.0
    %1445 = vmatpush1.msra.mxu0 0.0
    %1446 = vmatprep.subr.mxu0 0.0
    %1447 = vmatpush1.msra.mxu0 0.0
    %1448 = vmatprep.subr.mxu0 0.0
    %1449 = vmatpush1.msra.mxu0 0.0
    %1450 = vmatprep.subr.mxu0 0.0
    %1451 = vmatpush1.msra.mxu0 0.0
    %1452 = vmatprep.subr.mxu0 0.0
    %1453 = vmatpush1.msra.mxu0 0.0
    %1454 = vmatprep.subr.mxu0 0.0
    %1455 = vmatpush1.msra.mxu0 0.0
    %1456 = vmatprep.subr.mxu0 0.0
    %1457 = vmatpush1.msra.mxu0 0.0
    %1458 = vmatprep.subr.mxu0 0.0
    %1459 = vmatpush1.msra.mxu0 0.0
    %1460 = vmatprep.subr.mxu0 0.0
    %1461 = vmatpush1.msra.mxu0 0.0
    %1462 = vmatprep.subr.mxu0 0.0
    %1463 = vmatpush1.msra.mxu0 0.0
    %1464 = vmatprep.subr.mxu0 0.0
    %1465 = vmatpush1.msra.mxu0 0.0
    %1466 = vmatprep.subr.mxu0 0.0
    %1467 = vmatpush1.msra.mxu0 0.0
    %1468 = vmatprep.mubr.f32.mxu0 0.0
    %1469 = vmatmul.mubr.f32.gmra.mrb[0].mxu0 %v1402
    %v1470 = vpop.f32.mrb[0].mxu0
    %v1471 = vadd.f32 0.0, %v1470
    %v1472 = vpop.f32.mrb[0].mxu0
    %1473 = vdwg.mxu0
    %v1474 = vadd.f32 %v1396, %v1471
    %v1475 = vxor.u32 %v1474, 2147483648
    %v1476 = vmul.f32 %v1475, 1.442695
    %v1477 = vpow.pop %v1476
    %v1478 = vadd.f32 %v1477, 1.0
    %v1479 = vrcp.pop %v1478
    %v1480 = vmul.f32 1.0, %v1479
    %v1481 = vadd.f32 %v1471, %v903
    %1483 = vrot.lane.b32.xlu0 %v1481, 64
    %v1484 = vpop.permute.xlu0 %1483
    %v1486 = vmul.f32 %v1480, %v1484
    %1488 = vrot.lane.b32.xlu0 %v1486, 64
    %v1489 = vpop.permute.xlu0 %1488
    %v1491 = vadd.f32 %v1396, %v1489
    %v1492 = vtanh.pop %v1491
    %v1493 = vsub.f32 1.0, %v1480
    %1495 = vrot.lane.b32.xlu0 %v1492, 96
    %v1496 = vpop.permute.xlu0 %1495
    %v1498 = vmul.f32 %v1493, %v1496
    %v1499 = vmul.f32 %v1480, %v1212
    %v1500 = vadd.f32 %v1498, %v1499
    %v1503 = vunpack.c.l.s4 1983009808
    %v1504 = vunpack.c.0.s8 %v1503
    %v1505 = vlaneseq
    %v1506 = vshrl.u32 %v1505, 7
    %v1507 = vsub.s32 %v1504, %v1506
    %v1508 = vrot.slane %v1328, %v1507
    %1509 = vrot.lane.b32.xlu0 %v1508, 96
    %v1510 = vpop.permute.xlu0 %1509
    %v1511 = vsel %vm512, %v1510, 0
    %1513 = vmatprep.subr.mxu0 0.0
    %1514 = vmatpush1.msra.mxu0 %v497
    %1515 = vmatprep.subr.mxu0 0.0
    %1516 = vmatpush1.msra.mxu0 %v498
    %1517 = vmatprep.subr.mxu0 0.0
    %1518 = vmatpush1.msra.mxu0 %v499
    %1519 = vmatprep.subr.mxu0 0.0
    %1520 = vmatpush1.msra.mxu0 %v500
    %1521 = vmatprep.subr.mxu0 0.0
    %1522 = vmatpush1.msra.mxu0 0.0
    %1523 = vmatprep.subr.mxu0 0.0
    %1524 = vmatpush1.msra.mxu0 0.0
    %1525 = vmatprep.subr.mxu0 0.0
    %1526 = vmatpush1.msra.mxu0 0.0
    %1527 = vmatprep.subr.mxu0 0.0
    %1528 = vmatpush1.msra.mxu0 0.0
    %1529 = vmatprep.subr.mxu0 0.0
    %1530 = vmatpush1.msra.mxu0 0.0
    %1531 = vmatprep.subr.mxu0 0.0
    %1532 = vmatpush1.msra.mxu0 0.0
    %1533 = vmatprep.subr.mxu0 0.0
    %1534 = vmatpush1.msra.mxu0 0.0
    %1535 = vmatprep.subr.mxu0 0.0
    %1536 = vmatpush1.msra.mxu0 0.0
    %1537 = vmatprep.subr.mxu0 0.0
    %1538 = vmatpush1.msra.mxu0 0.0
    %1539 = vmatprep.subr.mxu0 0.0
    %1540 = vmatpush1.msra.mxu0 0.0
    %1541 = vmatprep.subr.mxu0 0.0
    %1542 = vmatpush1.msra.mxu0 0.0
    %1543 = vmatprep.subr.mxu0 0.0
    %1544 = vmatpush1.msra.mxu0 0.0
    %1545 = vmatprep.subr.mxu0 0.0
    %1546 = vmatpush1.msra.mxu0 0.0
    %1547 = vmatprep.subr.mxu0 0.0
    %1548 = vmatpush1.msra.mxu0 0.0
    %1549 = vmatprep.subr.mxu0 0.0
    %1550 = vmatpush1.msra.mxu0 0.0
    %1551 = vmatprep.subr.mxu0 0.0
    %1552 = vmatpush1.msra.mxu0 0.0
    %1553 = vmatprep.subr.mxu0 0.0
    %1554 = vmatpush1.msra.mxu0 0.0
    %1555 = vmatprep.subr.mxu0 0.0
    %1556 = vmatpush1.msra.mxu0 0.0
    %1557 = vmatprep.subr.mxu0 0.0
    %1558 = vmatpush1.msra.mxu0 0.0
    %1559 = vmatprep.subr.mxu0 0.0
    %1560 = vmatpush1.msra.mxu0 0.0
    %1561 = vmatprep.subr.mxu0 0.0
    %1562 = vmatpush1.msra.mxu0 0.0
    %1563 = vmatprep.subr.mxu0 0.0
    %1564 = vmatpush1.msra.mxu0 0.0
    %1565 = vmatprep.subr.mxu0 0.0
    %1566 = vmatpush1.msra.mxu0 0.0
    %1567 = vmatprep.subr.mxu0 0.0
    %1568 = vmatpush1.msra.mxu0 0.0
    %1569 = vmatprep.subr.mxu0 0.0
    %1570 = vmatpush1.msra.mxu0 0.0
    %1571 = vmatprep.subr.mxu0 0.0
    %1572 = vmatpush1.msra.mxu0 0.0
    %1573 = vmatprep.subr.mxu0 0.0
    %1574 = vmatpush1.msra.mxu0 0.0
    %1575 = vmatprep.subr.mxu0 0.0
    %1576 = vmatpush1.msra.mxu0 0.0
    %1577 = vmatprep.mubr.f32.mxu0 0.0
    %1578 = vmatmul.mubr.f32.gmra.mrb[0].mxu0 %v1511
    %v1579 = vpop.f32.mrb[0].mxu0
    %v1580 = vadd.f32 0.0, %v1579
    %v1581 = vpop.f32.mrb[0].mxu0
    %1582 = vdwg.mxu0
    %v1583 = vadd.f32 %v479, %v1580
    %v1584 = vxor.u32 %v1583, 2147483648
    %v1585 = vmul.f32 %v1584, 1.442695
    %v1586 = vpow.pop %v1585
    %v1587 = vadd.f32 %v1586, 1.0
    %v1588 = vrcp.pop %v1587
    %v1589 = vmul.f32 1.0, %v1588
    %v1590 = vadd.f32 %v1580, %v599
    %v1593 = vunpack.c.l.s4 1983009808
    %v1594 = vunpack.c.0.s8 %v1593
    %v1595 = vlaneseq
    %v1596 = vshrl.u32 %v1595, 7
    %v1597 = vsub.s32 %v1594, %v1596
    %v1598 = vrot.slane %v1590, %v1597
    %1599 = vrot.lane.b32.xlu0 %v1598, 64
    %v1600 = vpop.permute.xlu0 %1599
    %v1602 = vmul.f32 %v1589, %v1600
    %1604 = vrot.lane.b32.xlu0 %v1602, 64
    %v1605 = vpop.permute.xlu0 %1604
    %v1607 = vadd.f32 %v479, %v1605
    %v1608 = vtanh.pop %v1607
    %v1609 = vsub.f32 1.0, %v1589
    %1611 = vrot.lane.b32.xlu0 %v1608, 96
    %v1612 = vpop.permute.xlu0 %1611
    %v1614 = vmul.f32 %v1609, %v1612
    %v1615 = vmul.f32 %v1589, %v1328
    %v1616 = vadd.f32 %v1614, %v1615
    %1617 = vmatprep.subr.mxu0 0.0
    %1618 = vmatpush1.msra.mxu0 %v502
    %1619 = vmatprep.subr.mxu0 0.0
    %1620 = vmatpush1.msra.mxu0 %v503
    %1621 = vmatprep.subr.mxu0 0.0
    %1622 = vmatpush1.msra.mxu0 %v504
    %1623 = vmatprep.subr.mxu0 0.0
    %1624 = vmatpush1.msra.mxu0 %v505
    %1625 = vmatprep.subr.mxu0 0.0
    %1626 = vmatpush1.msra.mxu0 0.0
    %1627 = vmatprep.subr.mxu0 0.0
    %1628 = vmatpush1.msra.mxu0 0.0
    %1629 = vmatprep.subr.mxu0 0.0
    %1630 = vmatpush1.msra.mxu0 0.0
    %1631 = vmatprep.subr.mxu0 0.0
    %1632 = vmatpush1.msra.mxu0 0.0
    %1633 = vmatprep.subr.mxu0 0.0
    %1634 = vmatpush1.msra.mxu0 0.0
    %1635 = vmatprep.subr.mxu0 0.0
    %1636 = vmatpush1.msra.mxu0 0.0
    %1637 = vmatprep.subr.mxu0 0.0
    %1638 = vmatpush1.msra.mxu0 0.0
    %1639 = vmatprep.subr.mxu0 0.0
    %1640 = vmatpush1.msra.mxu0 0.0
    %1641 = vmatprep.subr.mxu0 0.0
    %1642 = vmatpush1.msra.mxu0 0.0
    %1643 = vmatprep.subr.mxu0 0.0
    %1644 = vmatpush1.msra.mxu0 0.0
    %1645 = vmatprep.subr.mxu0 0.0
    %1646 = vmatpush1.msra.mxu0 0.0
    %1647 = vmatprep.subr.mxu0 0.0
    %1648 = vmatpush1.msra.mxu0 0.0
    %1649 = vmatprep.subr.mxu0 0.0
    %1650 = vmatpush1.msra.mxu0 0.0
    %1651 = vmatprep.subr.mxu0 0.0
    %1652 = vmatpush1.msra.mxu0 0.0
    %1653 = vmatprep.subr.mxu0 0.0
    %1654 = vmatpush1.msra.mxu0 0.0
    %1655 = vmatprep.subr.mxu0 0.0
    %1656 = vmatpush1.msra.mxu0 0.0
    %1657 = vmatprep.subr.mxu0 0.0
    %1658 = vmatpush1.msra.mxu0 0.0
    %1659 = vmatprep.subr.mxu0 0.0
    %1660 = vmatpush1.msra.mxu0 0.0
    %1661 = vmatprep.subr.mxu0 0.0
    %1662 = vmatpush1.msra.mxu0 0.0
    %1663 = vmatprep.subr.mxu0 0.0
    %1664 = vmatpush1.msra.mxu0 0.0
    %1665 = vmatprep.subr.mxu0 0.0
    %1666 = vmatpush1.msra.mxu0 0.0
    %1667 = vmatprep.subr.mxu0 0.0
    %1668 = vmatpush1.msra.mxu0 0.0
    %1669 = vmatprep.subr.mxu0 0.0
    %1670 = vmatpush1.msra.mxu0 0.0
    %1671 = vmatprep.subr.mxu0 0.0
    %1672 = vmatpush1.msra.mxu0 0.0
    %1673 = vmatprep.subr.mxu0 0.0
    %1674 = vmatpush1.msra.mxu0 0.0
    %1675 = vmatprep.subr.mxu0 0.0
    %1676 = vmatpush1.msra.mxu0 0.0
    %1677 = vmatprep.subr.mxu0 0.0
    %1678 = vmatpush1.msra.mxu0 0.0
    %1679 = vmatprep.subr.mxu0 0.0
    %1680 = vmatpush1.msra.mxu0 0.0
    %1681 = vmatprep.mubr.f32.mxu0 0.0
    %1682 = vmatmul.mubr.f32.gmra.mrb[0].mxu0 %v1511
    %v1683 = vpop.f32.mrb[0].mxu0
    %v1684 = vadd.f32 %v748, %v1683
    %v1685 = vpop.f32.mrb[0].mxu0
    %1686 = vdwg.mxu0
    %1688 = vrot.lane.b32.xlu0 %v1500, 96
    %v1689 = vpop.permute.xlu0 %1688
    %v1690 = vsel %vm512, %v1689, 0
    %1692 = vmatprep.subr.mxu0 0.0
    %1693 = vmatpush1.msra.mxu0 %v507
    %1694 = vmatprep.subr.mxu0 0.0
    %1695 = vmatpush1.msra.mxu0 %v508
    %1696 = vmatprep.subr.mxu0 0.0
    %1697 = vmatpush1.msra.mxu0 %v509
    %1698 = vmatprep.subr.mxu0 0.0
    %1699 = vmatpush1.msra.mxu0 %v510
    %1700 = vmatprep.subr.mxu0 0.0
    %1701 = vmatpush1.msra.mxu0 0.0
    %1702 = vmatprep.subr.mxu0 0.0
    %1703 = vmatpush1.msra.mxu0 0.0
    %1704 = vmatprep.subr.mxu0 0.0
    %1705 = vmatpush1.msra.mxu0 0.0
    %1706 = vmatprep.subr.mxu0 0.0
    %1707 = vmatpush1.msra.mxu0 0.0
    %1708 = vmatprep.subr.mxu0 0.0
    %1709 = vmatpush1.msra.mxu0 0.0
    %1710 = vmatprep.subr.mxu0 0.0
    %1711 = vmatpush1.msra.mxu0 0.0
    %1712 = vmatprep.subr.mxu0 0.0
    %1713 = vmatpush1.msra.mxu0 0.0
    %1714 = vmatprep.subr.mxu0 0.0
    %1715 = vmatpush1.msra.mxu0 0.0
    %1716 = vmatprep.subr.mxu0 0.0
    %1717 = vmatpush1.msra.mxu0 0.0
    %1718 = vmatprep.subr.mxu0 0.0
    %1719 = vmatpush1.msra.mxu0 0.0
    %1720 = vmatprep.subr.mxu0 0.0
    %1721 = vmatpush1.msra.mxu0 0.0
    %1722 = vmatprep.subr.mxu0 0.0
    %1723 = vmatpush1.msra.mxu0 0.0
    %1724 = vmatprep.subr.mxu0 0.0
    %1725 = vmatpush1.msra.mxu0 0.0
    %1726 = vmatprep.subr.mxu0 0.0
    %1727 = vmatpush1.msra.mxu0 0.0
    %1728 = vmatprep.subr.mxu0 0.0
    %1729 = vmatpush1.msra.mxu0 0.0
    %1730 = vmatprep.subr.mxu0 0.0
    %1731 = vmatpush1.msra.mxu0 0.0
    %1732 = vmatprep.subr.mxu0 0.0
    %1733 = vmatpush1.msra.mxu0 0.0
    %1734 = vmatprep.subr.mxu0 0.0
    %1735 = vmatpush1.msra.mxu0 0.0
    %1736 = vmatprep.subr.mxu0 0.0
    %1737 = vmatpush1.msra.mxu0 0.0
    %1738 = vmatprep.subr.mxu0 0.0
    %1739 = vmatpush1.msra.mxu0 0.0
    %1740 = vmatprep.subr.mxu0 0.0
    %1741 = vmatpush1.msra.mxu0 0.0
    %1742 = vmatprep.subr.mxu0 0.0
    %1743 = vmatpush1.msra.mxu0 0.0
    %1744 = vmatprep.subr.mxu0 0.0
    %1745 = vmatpush1.msra.mxu0 0.0
    %1746 = vmatprep.subr.mxu0 0.0
    %1747 = vmatpush1.msra.mxu0 0.0
    %1748 = vmatprep.subr.mxu0 0.0
    %1749 = vmatpush1.msra.mxu0 0.0
    %1750 = vmatprep.subr.mxu0 0.0
    %1751 = vmatpush1.msra.mxu0 0.0
    %1752 = vmatprep.subr.mxu0 0.0
    %1753 = vmatpush1.msra.mxu0 0.0
    %1754 = vmatprep.subr.mxu0 0.0
    %1755 = vmatpush1.msra.mxu0 0.0
    %1756 = vmatprep.mubr.f32.mxu0 0.0
    %1757 = vmatmul.mubr.f32.gmra.mrb[0].mxu0 %v1690
    %v1758 = vpop.f32.mrb[0].mxu0
    %v1759 = vadd.f32 0.0, %v1758
    %v1760 = vpop.f32.mrb[0].mxu0
    %1761 = vdwg.mxu0
    %v1762 = vadd.f32 %v1684, %v1759
    %v1763 = vxor.u32 %v1762, 2147483648
    %v1764 = vmul.f32 %v1763, 1.442695
    %v1765 = vpow.pop %v1764
    %v1766 = vadd.f32 %v1765, 1.0
    %v1767 = vrcp.pop %v1766
    %v1768 = vmul.f32 1.0, %v1767
    %v1769 = vadd.f32 %v1759, %v903
    %1771 = vrot.lane.b32.xlu0 %v1769, 64
    %v1772 = vpop.permute.xlu0 %1771
    %v1774 = vmul.f32 %v1768, %v1772
    %1776 = vrot.lane.b32.xlu0 %v1774, 64
    %v1777 = vpop.permute.xlu0 %1776
    %v1779 = vadd.f32 %v1684, %v1777
    %v1780 = vtanh.pop %v1779
    %v1781 = vsub.f32 1.0, %v1768
    %1783 = vrot.lane.b32.xlu0 %v1780, 96
    %v1784 = vpop.permute.xlu0 %1783
    %v1786 = vmul.f32 %v1781, %v1784
    %v1787 = vmul.f32 %v1768, %v1500
    %v1788 = vadd.f32 %v1786, %v1787
    %v1791 = vunpack.c.l.s4 1983009808
    %v1792 = vunpack.c.0.s8 %v1791
    %v1793 = vlaneseq
    %v1794 = vshrl.u32 %v1793, 7
    %v1795 = vsub.s32 %v1792, %v1794
    %v1796 = vrot.slane %v1616, %v1795
    %1797 = vrot.lane.b32.xlu0 %v1796, 96
    %v1798 = vpop.permute.xlu0 %1797
    %v1799 = vsel %vm512, %v1798, 0
    %1801 = vmatprep.subr.mxu0 0.0
    %1802 = vmatpush1.msra.mxu0 %v497
    %1803 = vmatprep.subr.mxu0 0.0
    %1804 = vmatpush1.msra.mxu0 %v498
    %1805 = vmatprep.subr.mxu0 0.0
    %1806 = vmatpush1.msra.mxu0 %v499
    %1807 = vmatprep.subr.mxu0 0.0
    %1808 = vmatpush1.msra.mxu0 %v500
    %1809 = vmatprep.subr.mxu0 0.0
    %1810 = vmatpush1.msra.mxu0 0.0
    %1811 = vmatprep.subr.mxu0 0.0
    %1812 = vmatpush1.msra.mxu0 0.0
    %1813 = vmatprep.subr.mxu0 0.0
    %1814 = vmatpush1.msra.mxu0 0.0
    %1815 = vmatprep.subr.mxu0 0.0
    %1816 = vmatpush1.msra.mxu0 0.0
    %1817 = vmatprep.subr.mxu0 0.0
    %1818 = vmatpush1.msra.mxu0 0.0
    %1819 = vmatprep.subr.mxu0 0.0
    %1820 = vmatpush1.msra.mxu0 0.0
    %1821 = vmatprep.subr.mxu0 0.0
    %1822 = vmatpush1.msra.mxu0 0.0
    %1823 = vmatprep.subr.mxu0 0.0
    %1824 = vmatpush1.msra.mxu0 0.0
    %1825 = vmatprep.subr.mxu0 0.0
    %1826 = vmatpush1.msra.mxu0 0.0
    %1827 = vmatprep.subr.mxu0 0.0
    %1828 = vmatpush1.msra.mxu0 0.0
    %1829 = vmatprep.subr.mxu0 0.0
    %1830 = vmatpush1.msra.mxu0 0.0
    %1831 = vmatprep.subr.mxu0 0.0
    %1832 = vmatpush1.msra.mxu0 0.0
    %1833 = vmatprep.subr.mxu0 0.0
    %1834 = vmatpush1.msra.mxu0 0.0
    %1835 = vmatprep.subr.mxu0 0.0
    %1836 = vmatpush1.msra.mxu0 0.0
    %1837 = vmatprep.subr.mxu0 0.0
    %1838 = vmatpush1.msra.mxu0 0.0
    %1839 = vmatprep.subr.mxu0 0.0
    %1840 = vmatpush1.msra.mxu0 0.0
    %1841 = vmatprep.subr.mxu0 0.0
    %1842 = vmatpush1.msra.mxu0 0.0
    %1843 = vmatprep.subr.mxu0 0.0
    %1844 = vmatpush1.msra.mxu0 0.0
    %1845 = vmatprep.subr.mxu0 0.0
    %1846 = vmatpush1.msra.mxu0 0.0
    %1847 = vmatprep.subr.mxu0 0.0
    %1848 = vmatpush1.msra.mxu0 0.0
    %1849 = vmatprep.subr.mxu0 0.0
    %1850 = vmatpush1.msra.mxu0 0.0
    %1851 = vmatprep.subr.mxu0 0.0
    %1852 = vmatpush1.msra.mxu0 0.0
    %1853 = vmatprep.subr.mxu0 0.0
    %1854 = vmatpush1.msra.mxu0 0.0
    %1855 = vmatprep.subr.mxu0 0.0
    %1856 = vmatpush1.msra.mxu0 0.0
    %1857 = vmatprep.subr.mxu0 0.0
    %1858 = vmatpush1.msra.mxu0 0.0
    %1859 = vmatprep.subr.mxu0 0.0
    %1860 = vmatpush1.msra.mxu0 0.0
    %1861 = vmatprep.subr.mxu0 0.0
    %1862 = vmatpush1.msra.mxu0 0.0
    %1863 = vmatprep.subr.mxu0 0.0
    %1864 = vmatpush1.msra.mxu0 0.0
    %1865 = vmatprep.mubr.f32.mxu0 0.0
    %1866 = vmatmul.mubr.f32.gmra.mrb[0].mxu0 %v1799
    %v1867 = vpop.f32.mrb[0].mxu0
    %v1868 = vadd.f32 0.0, %v1867
    %v1869 = vpop.f32.mrb[0].mxu0
    %1870 = vdwg.mxu0
    %v1871 = vadd.f32 %v487, %v1868
    %v1872 = vxor.u32 %v1871, 2147483648
    %v1873 = vmul.f32 %v1872, 1.442695
    %v1874 = vpow.pop %v1873
    %v1875 = vadd.f32 %v1874, 1.0
    %v1876 = vrcp.pop %v1875
    %v1877 = vmul.f32 1.0, %v1876
    %v1878 = vadd.f32 %v1868, %v599
    %v1881 = vunpack.c.l.s4 1983009808
    %v1882 = vunpack.c.0.s8 %v1881
    %v1883 = vlaneseq
    %v1884 = vshrl.u32 %v1883, 7
    %v1885 = vsub.s32 %v1882, %v1884
    %v1886 = vrot.slane %v1878, %v1885
    %1887 = vrot.lane.b32.xlu0 %v1886, 64
    %v1888 = vpop.permute.xlu0 %1887
    %v1890 = vmul.f32 %v1877, %v1888
    %1892 = vrot.lane.b32.xlu0 %v1890, 64
    %v1893 = vpop.permute.xlu0 %1892
    %v1895 = vadd.f32 %v487, %v1893
    %v1896 = vtanh.pop %v1895
    %v1897 = vsub.f32 1.0, %v1877
    %1899 = vrot.lane.b32.xlu0 %v1896, 96
    %v1900 = vpop.permute.xlu0 %1899
    %v1902 = vmul.f32 %v1897, %v1900
    %v1903 = vmul.f32 %v1877, %v1616
    %v1904 = vadd.f32 %v1902, %v1903
    %1905 = vmatprep.subr.mxu0 0.0
    %1906 = vmatpush1.msra.mxu0 %v502
    %1907 = vmatprep.subr.mxu0 0.0
    %1908 = vmatpush1.msra.mxu0 %v503
    %1909 = vmatprep.subr.mxu0 0.0
    %1910 = vmatpush1.msra.mxu0 %v504
    %1911 = vmatprep.subr.mxu0 0.0
    %1912 = vmatpush1.msra.mxu0 %v505
    %1913 = vmatprep.subr.mxu0 0.0
    %1914 = vmatpush1.msra.mxu0 0.0
    %1915 = vmatprep.subr.mxu0 0.0
    %1916 = vmatpush1.msra.mxu0 0.0
    %1917 = vmatprep.subr.mxu0 0.0
    %1918 = vmatpush1.msra.mxu0 0.0
    %1919 = vmatprep.subr.mxu0 0.0
    %1920 = vmatpush1.msra.mxu0 0.0
    %1921 = vmatprep.subr.mxu0 0.0
    %1922 = vmatpush1.msra.mxu0 0.0
    %1923 = vmatprep.subr.mxu0 0.0
    %1924 = vmatpush1.msra.mxu0 0.0
    %1925 = vmatprep.subr.mxu0 0.0
    %1926 = vmatpush1.msra.mxu0 0.0
    %1927 = vmatprep.subr.mxu0 0.0
    %1928 = vmatpush1.msra.mxu0 0.0
    %1929 = vmatprep.subr.mxu0 0.0
    %1930 = vmatpush1.msra.mxu0 0.0
    %1931 = vmatprep.subr.mxu0 0.0
    %1932 = vmatpush1.msra.mxu0 0.0
    %1933 = vmatprep.subr.mxu0 0.0
    %1934 = vmatpush1.msra.mxu0 0.0
    %1935 = vmatprep.subr.mxu0 0.0
    %1936 = vmatpush1.msra.mxu0 0.0
    %1937 = vmatprep.subr.mxu0 0.0
    %1938 = vmatpush1.msra.mxu0 0.0
    %1939 = vmatprep.subr.mxu0 0.0
    %1940 = vmatpush1.msra.mxu0 0.0
    %1941 = vmatprep.subr.mxu0 0.0
    %1942 = vmatpush1.msra.mxu0 0.0
    %1943 = vmatprep.subr.mxu0 0.0
    %1944 = vmatpush1.msra.mxu0 0.0
    %1945 = vmatprep.subr.mxu0 0.0
    %1946 = vmatpush1.msra.mxu0 0.0
    %1947 = vmatprep.subr.mxu0 0.0
    %1948 = vmatpush1.msra.mxu0 0.0
    %1949 = vmatprep.subr.mxu0 0.0
    %1950 = vmatpush1.msra.mxu0 0.0
    %1951 = vmatprep.subr.mxu0 0.0
    %1952 = vmatpush1.msra.mxu0 0.0
    %1953 = vmatprep.subr.mxu0 0.0
    %1954 = vmatpush1.msra.mxu0 0.0
    %1955 = vmatprep.subr.mxu0 0.0
    %1956 = vmatpush1.msra.mxu0 0.0
    %1957 = vmatprep.subr.mxu0 0.0
    %1958 = vmatpush1.msra.mxu0 0.0
    %1959 = vmatprep.subr.mxu0 0.0
    %1960 = vmatpush1.msra.mxu0 0.0
    %1961 = vmatprep.subr.mxu0 0.0
    %1962 = vmatpush1.msra.mxu0 0.0
    %1963 = vmatprep.subr.mxu0 0.0
    %1964 = vmatpush1.msra.mxu0 0.0
    %1965 = vmatprep.subr.mxu0 0.0
    %1966 = vmatpush1.msra.mxu0 0.0
    %1967 = vmatprep.subr.mxu0 0.0
    %1968 = vmatpush1.msra.mxu0 0.0
    %1969 = vmatprep.mubr.f32.mxu0 0.0
    %1970 = vmatmul.mubr.f32.gmra.mrb[0].mxu0 %v1799
    %v1971 = vpop.f32.mrb[0].mxu0
    %v1972 = vadd.f32 %v748, %v1971
    %v1973 = vpop.f32.mrb[0].mxu0
    %1974 = vdwg.mxu0
    %1976 = vrot.lane.b32.xlu0 %v1788, 96
    %v1977 = vpop.permute.xlu0 %1976
    %v1978 = vsel %vm512, %v1977, 0
    %1980 = vmatprep.subr.mxu0 0.0
    %1981 = vmatpush1.msra.mxu0 %v507
    %1982 = vmatprep.subr.mxu0 0.0
    %1983 = vmatpush1.msra.mxu0 %v508
    %1984 = vmatprep.subr.mxu0 0.0
    %1985 = vmatpush1.msra.mxu0 %v509
    %1986 = vmatprep.subr.mxu0 0.0
    %1987 = vmatpush1.msra.mxu0 %v510
    %1988 = vmatprep.subr.mxu0 0.0
    %1989 = vmatpush1.msra.mxu0 0.0
    %1990 = vmatprep.subr.mxu0 0.0
    %1991 = vmatpush1.msra.mxu0 0.0
    %1992 = vmatprep.subr.mxu0 0.0
    %1993 = vmatpush1.msra.mxu0 0.0
    %1994 = vmatprep.subr.mxu0 0.0
    %1995 = vmatpush1.msra.mxu0 0.0
    %1996 = vmatprep.subr.mxu0 0.0
    %1997 = vmatpush1.msra.mxu0 0.0
    %1998 = vmatprep.subr.mxu0 0.0
    %1999 = vmatpush1.msra.mxu0 0.0
    %2000 = vmatprep.subr.mxu0 0.0
    %2001 = vmatpush1.msra.mxu0 0.0
    %2002 = vmatprep.subr.mxu0 0.0
    %2003 = vmatpush1.msra.mxu0 0.0
    %2004 = vmatprep.subr.mxu0 0.0
    %2005 = vmatpush1.msra.mxu0 0.0
    %2006 = vmatprep.subr.mxu0 0.0
    %2007 = vmatpush1.msra.mxu0 0.0
    %2008 = vmatprep.subr.mxu0 0.0
    %2009 = vmatpush1.msra.mxu0 0.0
    %2010 = vmatprep.subr.mxu0 0.0
    %2011 = vmatpush1.msra.mxu0 0.0
    %2012 = vmatprep.subr.mxu0 0.0
    %2013 = vmatpush1.msra.mxu0 0.0
    %2014 = vmatprep.subr.mxu0 0.0
    %2015 = vmatpush1.msra.mxu0 0.0
    %2016 = vmatprep.subr.mxu0 0.0
    %2017 = vmatpush1.msra.mxu0 0.0
    %2018 = vmatprep.subr.mxu0 0.0
    %2019 = vmatpush1.msra.mxu0 0.0
    %2020 = vmatprep.subr.mxu0 0.0
    %2021 = vmatpush1.msra.mxu0 0.0
    %2022 = vmatprep.subr.mxu0 0.0
    %2023 = vmatpush1.msra.mxu0 0.0
    %2024 = vmatprep.subr.mxu0 0.0
    %2025 = vmatpush1.msra.mxu0 0.0
    %2026 = vmatprep.subr.mxu0 0.0
    %2027 = vmatpush1.msra.mxu0 0.0
    %2028 = vmatprep.subr.mxu0 0.0
    %2029 = vmatpush1.msra.mxu0 0.0
    %2030 = vmatprep.subr.mxu0 0.0
    %2031 = vmatpush1.msra.mxu0 0.0
    %2032 = vmatprep.subr.mxu0 0.0
    %2033 = vmatpush1.msra.mxu0 0.0
    %2034 = vmatprep.subr.mxu0 0.0
    %2035 = vmatpush1.msra.mxu0 0.0
    %2036 = vmatprep.subr.mxu0 0.0
    %2037 = vmatpush1.msra.mxu0 0.0
    %2038 = vmatprep.subr.mxu0 0.0
    %2039 = vmatpush1.msra.mxu0 0.0
    %2040 = vmatprep.subr.mxu0 0.0
    %2041 = vmatpush1.msra.mxu0 0.0
    %2042 = vmatprep.subr.mxu0 0.0
    %2043 = vmatpush1.msra.mxu0 0.0
    %2044 = vmatprep.mubr.f32.mxu0 0.0
    %2045 = vmatmul.mubr.f32.gmra.mrb[0].mxu0 %v1978
    %v2046 = vpop.f32.mrb[0].mxu0
    %v2047 = vadd.f32 0.0, %v2046
    %v2048 = vpop.f32.mrb[0].mxu0
    %2049 = vdwg.mxu0
    %v2050 = vadd.f32 %v1972, %v2047
    %v2051 = vxor.u32 %v2050, 2147483648
    %v2052 = vmul.f32 %v2051, 1.442695
    %v2053 = vpow.pop %v2052
    %v2054 = vadd.f32 %v2053, 1.0
    %v2055 = vrcp.pop %v2054
    %v2056 = vmul.f32 1.0, %v2055
    %v2057 = vadd.f32 %v2047, %v903
    %2059 = vrot.lane.b32.xlu0 %v2057, 64
    %v2060 = vpop.permute.xlu0 %2059
    %v2062 = vmul.f32 %v2056, %v2060
    %2064 = vrot.lane.b32.xlu0 %v2062, 64
    %v2065 = vpop.permute.xlu0 %2064
    %v2067 = vadd.f32 %v1972, %v2065
    %v2068 = vtanh.pop %v2067
    %v2069 = vsub.f32 1.0, %v2056
    %2071 = vrot.lane.b32.xlu0 %v2068, 96
    %v2072 = vpop.permute.xlu0 %2071
    %v2074 = vmul.f32 %v2069, %v2072
    %v2075 = vmul.f32 %v2056, %v1788
    %v2076 = vadd.f32 %v2074, %v2075
    %v2079 = vunpack.c.l.s4 1983009808
    %v2080 = vunpack.c.0.s8 %v2079
    %v2081 = vlaneseq
    %v2082 = vshrl.u32 %v2081, 7
    %v2083 = vsub.s32 %v2080, %v2082
    %v2084 = vrot.slane %v1904, %v2083
    %2085 = vrot.lane.b32.xlu0 %v2084, 96
    %v2086 = vpop.permute.xlu0 %2085
    %v2087 = vsel %vm512, %v2086, 0
    %2089 = vmatprep.subr.mxu0 0.0
    %2090 = vmatpush1.msra.mxu0 %v497
    %2091 = vmatprep.subr.mxu0 0.0
    %2092 = vmatpush1.msra.mxu0 %v498
    %2093 = vmatprep.subr.mxu0 0.0
    %2094 = vmatpush1.msra.mxu0 %v499
    %2095 = vmatprep.subr.mxu0 0.0
    %2096 = vmatpush1.msra.mxu0 %v500
    %2097 = vmatprep.subr.mxu0 0.0
    %2098 = vmatpush1.msra.mxu0 0.0
    %2099 = vmatprep.subr.mxu0 0.0
    %2100 = vmatpush1.msra.mxu0 0.0
    %2101 = vmatprep.subr.mxu0 0.0
    %2102 = vmatpush1.msra.mxu0 0.0
    %2103 = vmatprep.subr.mxu0 0.0
    %2104 = vmatpush1.msra.mxu0 0.0
    %2105 = vmatprep.subr.mxu0 0.0
    %2106 = vmatpush1.msra.mxu0 0.0
    %2107 = vmatprep.subr.mxu0 0.0
    %2108 = vmatpush1.msra.mxu0 0.0
    %2109 = vmatprep.subr.mxu0 0.0
    %2110 = vmatpush1.msra.mxu0 0.0
    %2111 = vmatprep.subr.mxu0 0.0
    %2112 = vmatpush1.msra.mxu0 0.0
    %2113 = vmatprep.subr.mxu0 0.0
    %2114 = vmatpush1.msra.mxu0 0.0
    %2115 = vmatprep.subr.mxu0 0.0
    %2116 = vmatpush1.msra.mxu0 0.0
    %2117 = vmatprep.subr.mxu0 0.0
    %2118 = vmatpush1.msra.mxu0 0.0
    %2119 = vmatprep.subr.mxu0 0.0
    %2120 = vmatpush1.msra.mxu0 0.0
    %2121 = vmatprep.subr.mxu0 0.0
    %2122 = vmatpush1.msra.mxu0 0.0
    %2123 = vmatprep.subr.mxu0 0.0
    %2124 = vmatpush1.msra.mxu0 0.0
    %2125 = vmatprep.subr.mxu0 0.0
    %2126 = vmatpush1.msra.mxu0 0.0
    %2127 = vmatprep.subr.mxu0 0.0
    %2128 = vmatpush1.msra.mxu0 0.0
    %2129 = vmatprep.subr.mxu0 0.0
    %2130 = vmatpush1.msra.mxu0 0.0
    %2131 = vmatprep.subr.mxu0 0.0
    %2132 = vmatpush1.msra.mxu0 0.0
    %2133 = vmatprep.subr.mxu0 0.0
    %2134 = vmatpush1.msra.mxu0 0.0
    %2135 = vmatprep.subr.mxu0 0.0
    %2136 = vmatpush1.msra.mxu0 0.0
    %2137 = vmatprep.subr.mxu0 0.0
    %2138 = vmatpush1.msra.mxu0 0.0
    %2139 = vmatprep.subr.mxu0 0.0
    %2140 = vmatpush1.msra.mxu0 0.0
    %2141 = vmatprep.subr.mxu0 0.0
    %2142 = vmatpush1.msra.mxu0 0.0
    %2143 = vmatprep.subr.mxu0 0.0
    %2144 = vmatpush1.msra.mxu0 0.0
    %2145 = vmatprep.subr.mxu0 0.0
    %2146 = vmatpush1.msra.mxu0 0.0
    %2147 = vmatprep.subr.mxu0 0.0
    %2148 = vmatpush1.msra.mxu0 0.0
    %2149 = vmatprep.subr.mxu0 0.0
    %2150 = vmatpush1.msra.mxu0 0.0
    %2151 = vmatprep.subr.mxu0 0.0
    %2152 = vmatpush1.msra.mxu0 0.0
    %2153 = vmatprep.mubr.f32.mxu0 0.0
    %2154 = vmatmul.mubr.f32.gmra.mrb[0].mxu0 %v2087
    %v2155 = vpop.f32.mrb[0].mxu0
    %v2156 = vadd.f32 0.0, %v2155
    %v2157 = vpop.f32.mrb[0].mxu0
    %2158 = vdwg.mxu0
    %v2159 = vadd.f32 %v486, %v2156
    %v2160 = vxor.u32 %v2159, 2147483648
    %v2161 = vmul.f32 %v2160, 1.442695
    %v2162 = vpow.pop %v2161
    %v2163 = vadd.f32 %v2162, 1.0
    %v2164 = vrcp.pop %v2163
    %v2165 = vmul.f32 1.0, %v2164
    %v2166 = vadd.f32 %v2156, %v599
    %v2169 = vunpack.c.l.s4 1983009808
    %v2170 = vunpack.c.0.s8 %v2169
    %v2171 = vlaneseq
    %v2172 = vshrl.u32 %v2171, 7
    %v2173 = vsub.s32 %v2170, %v2172
    %v2174 = vrot.slane %v2166, %v2173
    %2175 = vrot.lane.b32.xlu0 %v2174, 64
    %v2176 = vpop.permute.xlu0 %2175
    %v2178 = vmul.f32 %v2165, %v2176
    %2180 = vrot.lane.b32.xlu0 %v2178, 64
    %v2181 = vpop.permute.xlu0 %2180
    %v2183 = vadd.f32 %v486, %v2181
    %v2184 = vtanh.pop %v2183
    %v2185 = vsub.f32 1.0, %v2165
    %2187 = vrot.lane.b32.xlu0 %v2184, 96
    %v2188 = vpop.permute.xlu0 %2187
    %v2190 = vmul.f32 %v2185, %v2188
    %v2191 = vmul.f32 %v2165, %v1904
    %v2192 = vadd.f32 %v2190, %v2191
    %2193 = vmatprep.subr.mxu0 0.0
    %2194 = vmatpush1.msra.mxu0 %v502
    %2195 = vmatprep.subr.mxu0 0.0
    %2196 = vmatpush1.msra.mxu0 %v503
    %2197 = vmatprep.subr.mxu0 0.0
    %2198 = vmatpush1.msra.mxu0 %v504
    %2199 = vmatprep.subr.mxu0 0.0
    %2200 = vmatpush1.msra.mxu0 %v505
    %2201 = vmatprep.subr.mxu0 0.0
    %2202 = vmatpush1.msra.mxu0 0.0
    %2203 = vmatprep.subr.mxu0 0.0
    %2204 = vmatpush1.msra.mxu0 0.0
    %2205 = vmatprep.subr.mxu0 0.0
    %2206 = vmatpush1.msra.mxu0 0.0
    %2207 = vmatprep.subr.mxu0 0.0
    %2208 = vmatpush1.msra.mxu0 0.0
    %2209 = vmatprep.subr.mxu0 0.0
    %2210 = vmatpush1.msra.mxu0 0.0
    %2211 = vmatprep.subr.mxu0 0.0
    %2212 = vmatpush1.msra.mxu0 0.0
    %2213 = vmatprep.subr.mxu0 0.0
    %2214 = vmatpush1.msra.mxu0 0.0
    %2215 = vmatprep.subr.mxu0 0.0
    %2216 = vmatpush1.msra.mxu0 0.0
    %2217 = vmatprep.subr.mxu0 0.0
    %2218 = vmatpush1.msra.mxu0 0.0
    %2219 = vmatprep.subr.mxu0 0.0
    %2220 = vmatpush1.msra.mxu0 0.0
    %2221 = vmatprep.subr.mxu0 0.0
    %2222 = vmatpush1.msra.mxu0 0.0
    %2223 = vmatprep.subr.mxu0 0.0
    %2224 = vmatpush1.msra.mxu0 0.0
    %2225 = vmatprep.subr.mxu0 0.0
    %2226 = vmatpush1.msra.mxu0 0.0
    %2227 = vmatprep.subr.mxu0 0.0
    %2228 = vmatpush1.msra.mxu0 0.0
    %2229 = vmatprep.subr.mxu0 0.0
    %2230 = vmatpush1.msra.mxu0 0.0
    %2231 = vmatprep.subr.mxu0 0.0
    %2232 = vmatpush1.msra.mxu0 0.0
    %2233 = vmatprep.subr.mxu0 0.0
    %2234 = vmatpush1.msra.mxu0 0.0
    %2235 = vmatprep.subr.mxu0 0.0
    %2236 = vmatpush1.msra.mxu0 0.0
    %2237 = vmatprep.subr.mxu0 0.0
    %2238 = vmatpush1.msra.mxu0 0.0
    %2239 = vmatprep.subr.mxu0 0.0
    %2240 = vmatpush1.msra.mxu0 0.0
    %2241 = vmatprep.subr.mxu0 0.0
    %2242 = vmatpush1.msra.mxu0 0.0
    %2243 = vmatprep.subr.mxu0 0.0
    %2244 = vmatpush1.msra.mxu0 0.0
    %2245 = vmatprep.subr.mxu0 0.0
    %2246 = vmatpush1.msra.mxu0 0.0
    %2247 = vmatprep.subr.mxu0 0.0
    %2248 = vmatpush1.msra.mxu0 0.0
    %2249 = vmatprep.subr.mxu0 0.0
    %2250 = vmatpush1.msra.mxu0 0.0
    %2251 = vmatprep.subr.mxu0 0.0
    %2252 = vmatpush1.msra.mxu0 0.0
    %2253 = vmatprep.subr.mxu0 0.0
    %2254 = vmatpush1.msra.mxu0 0.0
    %2255 = vmatprep.subr.mxu0 0.0
    %2256 = vmatpush1.msra.mxu0 0.0
    %2257 = vmatprep.mubr.f32.mxu0 0.0
    %2258 = vmatmul.mubr.f32.gmra.mrb[0].mxu0 %v2087
    %v2259 = vpop.f32.mrb[0].mxu0
    %v2260 = vadd.f32 %v748, %v2259
    %v2261 = vpop.f32.mrb[0].mxu0
    %2262 = vdwg.mxu0
    %2264 = vrot.lane.b32.xlu0 %v2076, 96
    %v2265 = vpop.permute.xlu0 %2264
    %v2266 = vsel %vm512, %v2265, 0
    %2268 = vmatprep.subr.mxu0 0.0
    %2269 = vmatpush1.msra.mxu0 %v507
    %2270 = vmatprep.subr.mxu0 0.0
    %2271 = vmatpush1.msra.mxu0 %v508
    %2272 = vmatprep.subr.mxu0 0.0
    %2273 = vmatpush1.msra.mxu0 %v509
    %2274 = vmatprep.subr.mxu0 0.0
    %2275 = vmatpush1.msra.mxu0 %v510
    %2276 = vmatprep.subr.mxu0 0.0
    %2277 = vmatpush1.msra.mxu0 0.0
    %2278 = vmatprep.subr.mxu0 0.0
    %2279 = vmatpush1.msra.mxu0 0.0
    %2280 = vmatprep.subr.mxu0 0.0
    %2281 = vmatpush1.msra.mxu0 0.0
    %2282 = vmatprep.subr.mxu0 0.0
    %2283 = vmatpush1.msra.mxu0 0.0
    %2284 = vmatprep.subr.mxu0 0.0
    %2285 = vmatpush1.msra.mxu0 0.0
    %2286 = vmatprep.subr.mxu0 0.0
    %2287 = vmatpush1.msra.mxu0 0.0
    %2288 = vmatprep.subr.mxu0 0.0
    %2289 = vmatpush1.msra.mxu0 0.0
    %2290 = vmatprep.subr.mxu0 0.0
    %2291 = vmatpush1.msra.mxu0 0.0
    %2292 = vmatprep.subr.mxu0 0.0
    %2293 = vmatpush1.msra.mxu0 0.0
    %2294 = vmatprep.subr.mxu0 0.0
    %2295 = vmatpush1.msra.mxu0 0.0
    %2296 = vmatprep.subr.mxu0 0.0
    %2297 = vmatpush1.msra.mxu0 0.0
    %2298 = vmatprep.subr.mxu0 0.0
    %2299 = vmatpush1.msra.mxu0 0.0
    %2300 = vmatprep.subr.mxu0 0.0
    %2301 = vmatpush1.msra.mxu0 0.0
    %2302 = vmatprep.subr.mxu0 0.0
    %2303 = vmatpush1.msra.mxu0 0.0
    %2304 = vmatprep.subr.mxu0 0.0
    %2305 = vmatpush1.msra.mxu0 0.0
    %2306 = vmatprep.subr.mxu0 0.0
    %2307 = vmatpush1.msra.mxu0 0.0
    %2308 = vmatprep.subr.mxu0 0.0
    %2309 = vmatpush1.msra.mxu0 0.0
    %2310 = vmatprep.subr.mxu0 0.0
    %2311 = vmatpush1.msra.mxu0 0.0
    %2312 = vmatprep.subr.mxu0 0.0
    %2313 = vmatpush1.msra.mxu0 0.0
    %2314 = vmatprep.subr.mxu0 0.0
    %2315 = vmatpush1.msra.mxu0 0.0
    %2316 = vmatprep.subr.mxu0 0.0
    %2317 = vmatpush1.msra.mxu0 0.0
    %2318 = vmatprep.subr.mxu0 0.0
    %2319 = vmatpush1.msra.mxu0 0.0
    %2320 = vmatprep.subr.mxu0 0.0
    %2321 = vmatpush1.msra.mxu0 0.0
    %2322 = vmatprep.subr.mxu0 0.0
    %2323 = vmatpush1.msra.mxu0 0.0
    %2324 = vmatprep.subr.mxu0 0.0
    %2325 = vmatpush1.msra.mxu0 0.0
    %2326 = vmatprep.subr.mxu0 0.0
    %2327 = vmatpush1.msra.mxu0 0.0
    %2328 = vmatprep.subr.mxu0 0.0
    %2329 = vmatpush1.msra.mxu0 0.0
    %2330 = vmatprep.subr.mxu0 0.0
    %2331 = vmatpush1.msra.mxu0 0.0
    %2332 = vmatprep.mubr.f32.mxu0 0.0
    %2333 = vmatmul.mubr.f32.gmra.mrb[0].mxu0 %v2266
    %v2334 = vpop.f32.mrb[0].mxu0
    %v2335 = vadd.f32 0.0, %v2334
    %v2336 = vpop.f32.mrb[0].mxu0
    %2337 = vdwg.mxu0
    %v2338 = vadd.f32 %v2260, %v2335
    %v2339 = vxor.u32 %v2338, 2147483648
    %v2340 = vmul.f32 %v2339, 1.442695
    %v2341 = vpow.pop %v2340
    %v2342 = vadd.f32 %v2341, 1.0
    %v2343 = vrcp.pop %v2342
    %v2344 = vmul.f32 1.0, %v2343
    %v2345 = vadd.f32 %v2335, %v903
    %2347 = vrot.lane.b32.xlu0 %v2345, 64
    %v2348 = vpop.permute.xlu0 %2347
    %v2350 = vmul.f32 %v2344, %v2348
    %2352 = vrot.lane.b32.xlu0 %v2350, 64
    %v2353 = vpop.permute.xlu0 %2352
    %v2355 = vadd.f32 %v2260, %v2353
    %v2356 = vtanh.pop %v2355
    %v2357 = vsub.f32 1.0, %v2344
    %2359 = vrot.lane.b32.xlu0 %v2356, 96
    %v2360 = vpop.permute.xlu0 %2359
    %v2362 = vmul.f32 %v2357, %v2360
    %v2363 = vmul.f32 %v2344, %v2076
    %v2364 = vadd.f32 %v2362, %v2363
    %v2367 = vunpack.c.l.s4 1983009808
    %v2368 = vunpack.c.0.s8 %v2367
    %v2369 = vlaneseq
    %v2370 = vshrl.u32 %v2369, 7
    %v2371 = vsub.s32 %v2368, %v2370
    %v2372 = vrot.slane %v2192, %v2371
    %2373 = vrot.lane.b32.xlu0 %v2372, 96
    %v2374 = vpop.permute.xlu0 %2373
    %v2375 = vsel %vm512, %v2374, 0
    %2377 = vmatprep.subr.mxu0 0.0
    %2378 = vmatpush1.msra.mxu0 %v497
    %2379 = vmatprep.subr.mxu0 0.0
    %2380 = vmatpush1.msra.mxu0 %v498
    %2381 = vmatprep.subr.mxu0 0.0
    %2382 = vmatpush1.msra.mxu0 %v499
    %2383 = vmatprep.subr.mxu0 0.0
    %2384 = vmatpush1.msra.mxu0 %v500
    %2385 = vmatprep.subr.mxu0 0.0
    %2386 = vmatpush1.msra.mxu0 0.0
    %2387 = vmatprep.subr.mxu0 0.0
    %2388 = vmatpush1.msra.mxu0 0.0
    %2389 = vmatprep.subr.mxu0 0.0
    %2390 = vmatpush1.msra.mxu0 0.0
    %2391 = vmatprep.subr.mxu0 0.0
    %2392 = vmatpush1.msra.mxu0 0.0
    %2393 = vmatprep.subr.mxu0 0.0
    %2394 = vmatpush1.msra.mxu0 0.0
    %2395 = vmatprep.subr.mxu0 0.0
    %2396 = vmatpush1.msra.mxu0 0.0
    %2397 = vmatprep.subr.mxu0 0.0
    %2398 = vmatpush1.msra.mxu0 0.0
    %2399 = vmatprep.subr.mxu0 0.0
    %2400 = vmatpush1.msra.mxu0 0.0
    %2401 = vmatprep.subr.mxu0 0.0
    %2402 = vmatpush1.msra.mxu0 0.0
    %2403 = vmatprep.subr.mxu0 0.0
    %2404 = vmatpush1.msra.mxu0 0.0
    %2405 = vmatprep.subr.mxu0 0.0
    %2406 = vmatpush1.msra.mxu0 0.0
    %2407 = vmatprep.subr.mxu0 0.0
    %2408 = vmatpush1.msra.mxu0 0.0
    %2409 = vmatprep.subr.mxu0 0.0
    %2410 = vmatpush1.msra.mxu0 0.0
    %2411 = vmatprep.subr.mxu0 0.0
    %2412 = vmatpush1.msra.mxu0 0.0
    %2413 = vmatprep.subr.mxu0 0.0
    %2414 = vmatpush1.msra.mxu0 0.0
    %2415 = vmatprep.subr.mxu0 0.0
    %2416 = vmatpush1.msra.mxu0 0.0
    %2417 = vmatprep.subr.mxu0 0.0
    %2418 = vmatpush1.msra.mxu0 0.0
    %2419 = vmatprep.subr.mxu0 0.0
    %2420 = vmatpush1.msra.mxu0 0.0
    %2421 = vmatprep.subr.mxu0 0.0
    %2422 = vmatpush1.msra.mxu0 0.0
    %2423 = vmatprep.subr.mxu0 0.0
    %2424 = vmatpush1.msra.mxu0 0.0
    %2425 = vmatprep.subr.mxu0 0.0
    %2426 = vmatpush1.msra.mxu0 0.0
    %2427 = vmatprep.subr.mxu0 0.0
    %2428 = vmatpush1.msra.mxu0 0.0
    %2429 = vmatprep.subr.mxu0 0.0
    %2430 = vmatpush1.msra.mxu0 0.0
    %2431 = vmatprep.subr.mxu0 0.0
    %2432 = vmatpush1.msra.mxu0 0.0
    %2433 = vmatprep.subr.mxu0 0.0
    %2434 = vmatpush1.msra.mxu0 0.0
    %2435 = vmatprep.subr.mxu0 0.0
    %2436 = vmatpush1.msra.mxu0 0.0
    %2437 = vmatprep.subr.mxu0 0.0
    %2438 = vmatpush1.msra.mxu0 0.0
    %2439 = vmatprep.subr.mxu0 0.0
    %2440 = vmatpush1.msra.mxu0 0.0
    %2441 = vmatprep.mubr.f32.mxu0 0.0
    %2442 = vmatmul.mubr.f32.gmra.mrb[0].mxu0 %v2375
    %v2443 = vpop.f32.mrb[0].mxu0
    %v2444 = vadd.f32 0.0, %v2443
    %v2445 = vpop.f32.mrb[0].mxu0
    %2446 = vdwg.mxu0
    %v2447 = vadd.f32 %v488, %v2444
    %v2448 = vxor.u32 %v2447, 2147483648
    %v2449 = vmul.f32 %v2448, 1.442695
    %v2450 = vpow.pop %v2449
    %v2451 = vadd.f32 %v2450, 1.0
    %v2452 = vrcp.pop %v2451
    %v2453 = vmul.f32 1.0, %v2452
    %v2454 = vadd.f32 %v2444, %v599
    %v2457 = vunpack.c.l.s4 1983009808
    %v2458 = vunpack.c.0.s8 %v2457
    %v2459 = vlaneseq
    %v2460 = vshrl.u32 %v2459, 7
    %v2461 = vsub.s32 %v2458, %v2460
    %v2462 = vrot.slane %v2454, %v2461
    %2463 = vrot.lane.b32.xlu0 %v2462, 64
    %v2464 = vpop.permute.xlu0 %2463
    %v2466 = vmul.f32 %v2453, %v2464
    %2468 = vrot.lane.b32.xlu0 %v2466, 64
    %v2469 = vpop.permute.xlu0 %2468
    %v2471 = vadd.f32 %v488, %v2469
    %v2472 = vtanh.pop %v2471
    %v2473 = vsub.f32 1.0, %v2453
    %2475 = vrot.lane.b32.xlu0 %v2472, 96
    %v2476 = vpop.permute.xlu0 %2475
    %v2478 = vmul.f32 %v2473, %v2476
    %v2479 = vmul.f32 %v2453, %v2192
    %v2480 = vadd.f32 %v2478, %v2479
    %2481 = vmatprep.subr.mxu0 0.0
    %2482 = vmatpush1.msra.mxu0 %v502
    %2483 = vmatprep.subr.mxu0 0.0
    %2484 = vmatpush1.msra.mxu0 %v503
    %2485 = vmatprep.subr.mxu0 0.0
    %2486 = vmatpush1.msra.mxu0 %v504
    %2487 = vmatprep.subr.mxu0 0.0
    %2488 = vmatpush1.msra.mxu0 %v505
    %2489 = vmatprep.subr.mxu0 0.0
    %2490 = vmatpush1.msra.mxu0 0.0
    %2491 = vmatprep.subr.mxu0 0.0
    %2492 = vmatpush1.msra.mxu0 0.0
    %2493 = vmatprep.subr.mxu0 0.0
    %2494 = vmatpush1.msra.mxu0 0.0
    %2495 = vmatprep.subr.mxu0 0.0
    %2496 = vmatpush1.msra.mxu0 0.0
    %2497 = vmatprep.subr.mxu0 0.0
    %2498 = vmatpush1.msra.mxu0 0.0
    %2499 = vmatprep.subr.mxu0 0.0
    %2500 = vmatpush1.msra.mxu0 0.0
    %2501 = vmatprep.subr.mxu0 0.0
    %2502 = vmatpush1.msra.mxu0 0.0
    %2503 = vmatprep.subr.mxu0 0.0
    %2504 = vmatpush1.msra.mxu0 0.0
    %2505 = vmatprep.subr.mxu0 0.0
    %2506 = vmatpush1.msra.mxu0 0.0
    %2507 = vmatprep.subr.mxu0 0.0
    %2508 = vmatpush1.msra.mxu0 0.0
    %2509 = vmatprep.subr.mxu0 0.0
    %2510 = vmatpush1.msra.mxu0 0.0
    %2511 = vmatprep.subr.mxu0 0.0
    %2512 = vmatpush1.msra.mxu0 0.0
    %2513 = vmatprep.subr.mxu0 0.0
    %2514 = vmatpush1.msra.mxu0 0.0
    %2515 = vmatprep.subr.mxu0 0.0
    %2516 = vmatpush1.msra.mxu0 0.0
    %2517 = vmatprep.subr.mxu0 0.0
    %2518 = vmatpush1.msra.mxu0 0.0
    %2519 = vmatprep.subr.mxu0 0.0
    %2520 = vmatpush1.msra.mxu0 0.0
    %2521 = vmatprep.subr.mxu0 0.0
    %2522 = vmatpush1.msra.mxu0 0.0
    %2523 = vmatprep.subr.mxu0 0.0
    %2524 = vmatpush1.msra.mxu0 0.0
    %2525 = vmatprep.subr.mxu0 0.0
    %2526 = vmatpush1.msra.mxu0 0.0
    %2527 = vmatprep.subr.mxu0 0.0
    %2528 = vmatpush1.msra.mxu0 0.0
    %2529 = vmatprep.subr.mxu0 0.0
    %2530 = vmatpush1.msra.mxu0 0.0
    %2531 = vmatprep.subr.mxu0 0.0
    %2532 = vmatpush1.msra.mxu0 0.0
    %2533 = vmatprep.subr.mxu0 0.0
    %2534 = vmatpush1.msra.mxu0 0.0
    %2535 = vmatprep.subr.mxu0 0.0
    %2536 = vmatpush1.msra.mxu0 0.0
    %2537 = vmatprep.subr.mxu0 0.0
    %2538 = vmatpush1.msra.mxu0 0.0
    %2539 = vmatprep.subr.mxu0 0.0
    %2540 = vmatpush1.msra.mxu0 0.0
    %2541 = vmatprep.subr.mxu0 0.0
    %2542 = vmatpush1.msra.mxu0 0.0
    %2543 = vmatprep.subr.mxu0 0.0
    %2544 = vmatpush1.msra.mxu0 0.0
    %2545 = vmatprep.mubr.f32.mxu0 0.0
    %2546 = vmatmul.mubr.f32.gmra.mrb[0].mxu0 %v2375
    %v2547 = vpop.f32.mrb[0].mxu0
    %v2548 = vadd.f32 %v748, %v2547
    %v2549 = vpop.f32.mrb[0].mxu0
    %2550 = vdwg.mxu0
    %2552 = vrot.lane.b32.xlu0 %v2364, 96
    %v2553 = vpop.permute.xlu0 %2552
    %v2554 = vsel %vm512, %v2553, 0
    %2556 = vmatprep.subr.mxu0 0.0
    %2557 = vmatpush1.msra.mxu0 %v507
    %2558 = vmatprep.subr.mxu0 0.0
    %2559 = vmatpush1.msra.mxu0 %v508
    %2560 = vmatprep.subr.mxu0 0.0
    %2561 = vmatpush1.msra.mxu0 %v509
    %2562 = vmatprep.subr.mxu0 0.0
    %2563 = vmatpush1.msra.mxu0 %v510
    %2564 = vmatprep.subr.mxu0 0.0
    %2565 = vmatpush1.msra.mxu0 0.0
    %2566 = vmatprep.subr.mxu0 0.0
    %2567 = vmatpush1.msra.mxu0 0.0
    %2568 = vmatprep.subr.mxu0 0.0
    %2569 = vmatpush1.msra.mxu0 0.0
    %2570 = vmatprep.subr.mxu0 0.0
    %2571 = vmatpush1.msra.mxu0 0.0
    %2572 = vmatprep.subr.mxu0 0.0
    %2573 = vmatpush1.msra.mxu0 0.0
    %2574 = vmatprep.subr.mxu0 0.0
    %2575 = vmatpush1.msra.mxu0 0.0
    %2576 = vmatprep.subr.mxu0 0.0
    %2577 = vmatpush1.msra.mxu0 0.0
    %2578 = vmatprep.subr.mxu0 0.0
    %2579 = vmatpush1.msra.mxu0 0.0
    %2580 = vmatprep.subr.mxu0 0.0
    %2581 = vmatpush1.msra.mxu0 0.0
    %2582 = vmatprep.subr.mxu0 0.0
    %2583 = vmatpush1.msra.mxu0 0.0
    %2584 = vmatprep.subr.mxu0 0.0
    %2585 = vmatpush1.msra.mxu0 0.0
    %2586 = vmatprep.subr.mxu0 0.0
    %2587 = vmatpush1.msra.mxu0 0.0
    %2588 = vmatprep.subr.mxu0 0.0
    %2589 = vmatpush1.msra.mxu0 0.0
    %2590 = vmatprep.subr.mxu0 0.0
    %2591 = vmatpush1.msra.mxu0 0.0
    %2592 = vmatprep.subr.mxu0 0.0
    %2593 = vmatpush1.msra.mxu0 0.0
    %2594 = vmatprep.subr.mxu0 0.0
    %2595 = vmatpush1.msra.mxu0 0.0
    %2596 = vmatprep.subr.mxu0 0.0
    %2597 = vmatpush1.msra.mxu0 0.0
    %2598 = vmatprep.subr.mxu0 0.0
    %2599 = vmatpush1.msra.mxu0 0.0
    %2600 = vmatprep.subr.mxu0 0.0
    %2601 = vmatpush1.msra.mxu0 0.0
    %2602 = vmatprep.subr.mxu0 0.0
    %2603 = vmatpush1.msra.mxu0 0.0
    %2604 = vmatprep.subr.mxu0 0.0
    %2605 = vmatpush1.msra.mxu0 0.0
    %2606 = vmatprep.subr.mxu0 0.0
    %2607 = vmatpush1.msra.mxu0 0.0
    %2608 = vmatprep.subr.mxu0 0.0
    %2609 = vmatpush1.msra.mxu0 0.0
    %2610 = vmatprep.subr.mxu0 0.0
    %2611 = vmatpush1.msra.mxu0 0.0
    %2612 = vmatprep.subr.mxu0 0.0
    %2613 = vmatpush1.msra.mxu0 0.0
    %2614 = vmatprep.subr.mxu0 0.0
    %2615 = vmatpush1.msra.mxu0 0.0
    %2616 = vmatprep.subr.mxu0 0.0
    %2617 = vmatpush1.msra.mxu0 0.0
    %2618 = vmatprep.subr.mxu0 0.0
    %2619 = vmatpush1.msra.mxu0 0.0
    %2620 = vmatprep.mubr.f32.mxu0 0.0
    %2621 = vmatmul.mubr.f32.gmra.mrb[0].mxu0 %v2554
    %v2622 = vpop.f32.mrb[0].mxu0
    %v2623 = vadd.f32 0.0, %v2622
    %v2624 = vpop.f32.mrb[0].mxu0
    %2625 = vdwg.mxu0
    %v2626 = vadd.f32 %v2548, %v2623
    %v2627 = vxor.u32 %v2626, 2147483648
    %v2628 = vmul.f32 %v2627, 1.442695
    %v2629 = vpow.pop %v2628
    %v2630 = vadd.f32 %v2629, 1.0
    %v2631 = vrcp.pop %v2630
    %v2632 = vmul.f32 1.0, %v2631
    %v2633 = vadd.f32 %v2623, %v903
    %2635 = vrot.lane.b32.xlu0 %v2633, 64
    %v2636 = vpop.permute.xlu0 %2635
    %v2638 = vmul.f32 %v2632, %v2636
    %2640 = vrot.lane.b32.xlu0 %v2638, 64
    %v2641 = vpop.permute.xlu0 %2640
    %v2643 = vadd.f32 %v2548, %v2641
    %v2644 = vtanh.pop %v2643
    %v2645 = vsub.f32 1.0, %v2632
    %2647 = vrot.lane.b32.xlu0 %v2644, 96
    %v2648 = vpop.permute.xlu0 %2647
    %v2650 = vmul.f32 %v2645, %v2648
    %v2651 = vmul.f32 %v2632, %v2364
    %v2652 = vadd.f32 %v2650, %v2651
    %v2655 = vunpack.c.l.s4 1983009808
    %v2656 = vunpack.c.0.s8 %v2655
    %v2657 = vlaneseq
    %v2658 = vshrl.u32 %v2657, 7
    %v2659 = vsub.s32 %v2656, %v2658
    %v2660 = vrot.slane %v2480, %v2659
    %2661 = vrot.lane.b32.xlu0 %v2660, 96
    %v2662 = vpop.permute.xlu0 %2661
    %v2663 = vsel %vm512, %v2662, 0
    %2665 = vmatprep.subr.mxu0 0.0
    %2666 = vmatpush1.msra.mxu0 %v502
    %2667 = vmatprep.subr.mxu0 0.0
    %2668 = vmatpush1.msra.mxu0 %v503
    %2669 = vmatprep.subr.mxu0 0.0
    %2670 = vmatpush1.msra.mxu0 %v504
    %2671 = vmatprep.subr.mxu0 0.0
    %2672 = vmatpush1.msra.mxu0 %v505
    %2673 = vmatprep.subr.mxu0 0.0
    %2674 = vmatpush1.msra.mxu0 0.0
    %2675 = vmatprep.subr.mxu0 0.0
    %2676 = vmatpush1.msra.mxu0 0.0
    %2677 = vmatprep.subr.mxu0 0.0
    %2678 = vmatpush1.msra.mxu0 0.0
    %2679 = vmatprep.subr.mxu0 0.0
    %2680 = vmatpush1.msra.mxu0 0.0
    %2681 = vmatprep.subr.mxu0 0.0
    %2682 = vmatpush1.msra.mxu0 0.0
    %2683 = vmatprep.subr.mxu0 0.0
    %2684 = vmatpush1.msra.mxu0 0.0
    %2685 = vmatprep.subr.mxu0 0.0
    %2686 = vmatpush1.msra.mxu0 0.0
    %2687 = vmatprep.subr.mxu0 0.0
    %2688 = vmatpush1.msra.mxu0 0.0
    %2689 = vmatprep.subr.mxu0 0.0
    %2690 = vmatpush1.msra.mxu0 0.0
    %2691 = vmatprep.subr.mxu0 0.0
    %2692 = vmatpush1.msra.mxu0 0.0
    %2693 = vmatprep.subr.mxu0 0.0
    %2694 = vmatpush1.msra.mxu0 0.0
    %2695 = vmatprep.subr.mxu0 0.0
    %2696 = vmatpush1.msra.mxu0 0.0
    %2697 = vmatprep.subr.mxu0 0.0
    %2698 = vmatpush1.msra.mxu0 0.0
    %2699 = vmatprep.subr.mxu0 0.0
    %2700 = vmatpush1.msra.mxu0 0.0
    %2701 = vmatprep.subr.mxu0 0.0
    %2702 = vmatpush1.msra.mxu0 0.0
    %2703 = vmatprep.subr.mxu0 0.0
    %2704 = vmatpush1.msra.mxu0 0.0
    %2705 = vmatprep.subr.mxu0 0.0
    %2706 = vmatpush1.msra.mxu0 0.0
    %2707 = vmatprep.subr.mxu0 0.0
    %2708 = vmatpush1.msra.mxu0 0.0
    %2709 = vmatprep.subr.mxu0 0.0
    %2710 = vmatpush1.msra.mxu0 0.0
    %2711 = vmatprep.subr.mxu0 0.0
    %2712 = vmatpush1.msra.mxu0 0.0
    %2713 = vmatprep.subr.mxu0 0.0
    %2714 = vmatpush1.msra.mxu0 0.0
    %2715 = vmatprep.subr.mxu0 0.0
    %2716 = vmatpush1.msra.mxu0 0.0
    %2717 = vmatprep.subr.mxu0 0.0
    %2718 = vmatpush1.msra.mxu0 0.0
    %2719 = vmatprep.subr.mxu0 0.0
    %2720 = vmatpush1.msra.mxu0 0.0
    %2721 = vmatprep.subr.mxu0 0.0
    %2722 = vmatpush1.msra.mxu0 0.0
    %2723 = vmatprep.subr.mxu0 0.0
    %2724 = vmatpush1.msra.mxu0 0.0
    %2725 = vmatprep.subr.mxu0 0.0
    %2726 = vmatpush1.msra.mxu0 0.0
    %2727 = vmatprep.subr.mxu0 0.0
    %2728 = vmatpush1.msra.mxu0 0.0
    %2729 = vmatprep.mubr.f32.mxu0 0.0
    %2730 = vmatmul.mubr.f32.gmra.mrb[0].mxu0 %v2663
    %v2731 = vpop.f32.mrb[0].mxu0
    %v2732 = vadd.f32 %v748, %v2731
    %v2733 = vpop.f32.mrb[0].mxu0
    %2734 = vdwg.mxu0
    %2736 = vrot.lane.b32.xlu0 %v2652, 96
    %v2737 = vpop.permute.xlu0 %2736
    %v2738 = vsel %vm512, %v2737, 0
    %2740 = vmatprep.subr.mxu0 0.0
    %2741 = vmatpush1.msra.mxu0 %v507
    %2742 = vmatprep.subr.mxu0 0.0
    %2743 = vmatpush1.msra.mxu0 %v508
    %2744 = vmatprep.subr.mxu0 0.0
    %2745 = vmatpush1.msra.mxu0 %v509
    %2746 = vmatprep.subr.mxu0 0.0
    %2747 = vmatpush1.msra.mxu0 %v510
    %2748 = vmatprep.subr.mxu0 0.0
    %2749 = vmatpush1.msra.mxu0 0.0
    %2750 = vmatprep.subr.mxu0 0.0
    %2751 = vmatpush1.msra.mxu0 0.0
    %2752 = vmatprep.subr.mxu0 0.0
    %2753 = vmatpush1.msra.mxu0 0.0
    %2754 = vmatprep.subr.mxu0 0.0
    %2755 = vmatpush1.msra.mxu0 0.0
    %2756 = vmatprep.subr.mxu0 0.0
    %2757 = vmatpush1.msra.mxu0 0.0
    %2758 = vmatprep.subr.mxu0 0.0
    %2759 = vmatpush1.msra.mxu0 0.0
    %2760 = vmatprep.subr.mxu0 0.0
    %2761 = vmatpush1.msra.mxu0 0.0
    %2762 = vmatprep.subr.mxu0 0.0
    %2763 = vmatpush1.msra.mxu0 0.0
    %2764 = vmatprep.subr.mxu0 0.0
    %2765 = vmatpush1.msra.mxu0 0.0
    %2766 = vmatprep.subr.mxu0 0.0
    %2767 = vmatpush1.msra.mxu0 0.0
    %2768 = vmatprep.subr.mxu0 0.0
    %2769 = vmatpush1.msra.mxu0 0.0
    %2770 = vmatprep.subr.mxu0 0.0
    %2771 = vmatpush1.msra.mxu0 0.0
    %2772 = vmatprep.subr.mxu0 0.0
    %2773 = vmatpush1.msra.mxu0 0.0
    %2774 = vmatprep.subr.mxu0 0.0
    %2775 = vmatpush1.msra.mxu0 0.0
    %2776 = vmatprep.subr.mxu0 0.0
    %2777 = vmatpush1.msra.mxu0 0.0
    %2778 = vmatprep.subr.mxu0 0.0
    %2779 = vmatpush1.msra.mxu0 0.0
    %2780 = vmatprep.subr.mxu0 0.0
    %2781 = vmatpush1.msra.mxu0 0.0
    %2782 = vmatprep.subr.mxu0 0.0
    %2783 = vmatpush1.msra.mxu0 0.0
    %2784 = vmatprep.subr.mxu0 0.0
    %2785 = vmatpush1.msra.mxu0 0.0
    %2786 = vmatprep.subr.mxu0 0.0
    %2787 = vmatpush1.msra.mxu0 0.0
    %2788 = vmatprep.subr.mxu0 0.0
    %2789 = vmatpush1.msra.mxu0 0.0
    %2790 = vmatprep.subr.mxu0 0.0
    %2791 = vmatpush1.msra.mxu0 0.0
    %2792 = vmatprep.subr.mxu0 0.0
    %2793 = vmatpush1.msra.mxu0 0.0
    %2794 = vmatprep.subr.mxu0 0.0
    %2795 = vmatpush1.msra.mxu0 0.0
    %2796 = vmatprep.subr.mxu0 0.0
    %2797 = vmatpush1.msra.mxu0 0.0
    %2798 = vmatprep.subr.mxu0 0.0
    %2799 = vmatpush1.msra.mxu0 0.0
    %2800 = vmatprep.subr.mxu0 0.0
    %2801 = vmatpush1.msra.mxu0 0.0
    %2802 = vmatprep.subr.mxu0 0.0
    %2803 = vmatpush1.msra.mxu0 0.0
    %2804 = vmatprep.mubr.f32.mxu0 0.0
    %2805 = vmatmul.mubr.f32.gmra.mrb[0].mxu0 %v2738
    %v2806 = vpop.f32.mrb[0].mxu0
    %v2807 = vadd.f32 0.0, %v2806
    %v2808 = vpop.f32.mrb[0].mxu0
    %2809 = vdwg.mxu0
    %v2810 = vadd.f32 %v2732, %v2807
    %v2811 = vxor.u32 %v2810, 2147483648
    %v2812 = vmul.f32 %v2811, 1.442695
    %v2813 = vpow.pop %v2812
    %v2814 = vadd.f32 %v2813, 1.0
    %v2815 = vrcp.pop %v2814
    %v2816 = vmul.f32 1.0, %v2815
    %v2817 = vadd.f32 %v2807, %v903
    %2819 = vrot.lane.b32.xlu0 %v2817, 64
    %v2820 = vpop.permute.xlu0 %2819
    %v2822 = vmul.f32 %v2816, %v2820
    %2824 = vrot.lane.b32.xlu0 %v2822, 64
    %v2825 = vpop.permute.xlu0 %2824
    %v2827 = vadd.f32 %v2732, %v2825
    %v2828 = vtanh.pop %v2827
    %v2829 = vsub.f32 1.0, %v2816
    %2831 = vrot.lane.b32.xlu0 %v2828, 96
    %v2832 = vpop.permute.xlu0 %2831
    %v2834 = vmul.f32 %v2829, %v2832
    %v2835 = vmul.f32 %v2816, %v2652
    %v2836 = vadd.f32 %v2834, %v2835
    %2838 = vrot.lane.b32.xlu0 %v924, 112
    %v2839 = vpop.permute.xlu0 %2838
    %2840 = vrot.lane.b32.xlu0 %v1212, 112
    %v2841 = vpop.permute.xlu0 %2840
    %2842 = vrot.lane.b32.xlu0 %v1500, 112
    %v2843 = vpop.permute.xlu0 %2842
    %2844 = vrot.lane.b32.xlu0 %v1788, 112
    %v2845 = vpop.permute.xlu0 %2844
    %2846 = vrot.lane.b32.xlu0 %v2076, 112
    %v2847 = vpop.permute.xlu0 %2846
    %2848 = vrot.lane.b32.xlu0 %v2364, 112
    %v2849 = vpop.permute.xlu0 %2848
    %2850 = vrot.lane.b32.xlu0 %v2652, 112
    %v2851 = vpop.permute.xlu0 %2850
    %2852 = vrot.lane.b32.xlu0 %v2836, 112
    %v2853 = vpop.permute.xlu0 %2852
    %2854 = vrot.lane.b32.xlu0 %v2836, 96
    %v2855 = vpop.permute.xlu0 %2854
    %2856 = vrot.lane.b32.xlu0 %v2839, 96
    %v2857 = vpop.permute.xlu0 %2856
    %2858 = vrot.lane.b32.xlu0 %v2841, 96
    %v2859 = vpop.permute.xlu0 %2858
    %2860 = vrot.lane.b32.xlu0 %v2843, 96
    %v2861 = vpop.permute.xlu0 %2860
    %2862 = vrot.lane.b32.xlu0 %v2845, 96
    %v2863 = vpop.permute.xlu0 %2862
    %2864 = vrot.lane.b32.xlu0 %v2847, 96
    %v2865 = vpop.permute.xlu0 %2864
    %2866 = vrot.lane.b32.xlu0 %v2849, 96
    %v2867 = vpop.permute.xlu0 %2866
    %2868 = vrot.lane.b32.xlu0 %v2851, 96
    %v2869 = vpop.permute.xlu0 %2868
    %2870 = vrot.lane.b32.xlu0 %v2853, 96
    %v2871 = vpop.permute.xlu0 %2870
    %v2888 = vcombine.low %v1113, %v1689
    %v2890 = vunpack.c.l.s4 1983009808
    %v2891 = vunpack.c.0.s8 %v2890
    %v2892 = vlaneseq
    %v2893 = vshrl.u32 %v2892, 7
    %v2894 = vsub.s32 %v2891, %v2893
    %v2895 = vrot.slane %v2888, %v2894
    %v2896 = vcombine.low %v1401, %v1977
    %v2898 = vunpack.c.l.s4 1983009808
    %v2899 = vunpack.c.0.s8 %v2898
    %v2900 = vlaneseq
    %v2901 = vshrl.u32 %v2900, 7
    %v2902 = vsub.s32 %v2899, %v2901
    %v2903 = vrot.slane %v2896, %v2902
    %v2904 = vcombine.low %v2265, %v2737
    %v2906 = vunpack.c.l.s4 1983009808
    %v2907 = vunpack.c.0.s8 %v2906
    %v2908 = vlaneseq
    %v2909 = vshrl.u32 %v2908, 7
    %v2910 = vsub.s32 %v2907, %v2909
    %v2911 = vrot.slane %v2904, %v2910
    %v2912 = vcombine.low %v2553, %v2855
    %v2914 = vunpack.c.l.s4 1983009808
    %v2915 = vunpack.c.0.s8 %v2914
    %v2916 = vlaneseq
    %v2917 = vshrl.u32 %v2916, 7
    %v2918 = vsub.s32 %v2915, %v2917
    %v2919 = vrot.slane %v2912, %v2918
    %v2920 = vcombine.low %v2895, %v2903
    %v2922 = vunpack.c.l.s4 1934713408
    %v2923 = vunpack.c.0.s8 %v2922
    %v2924 = vlaneseq
    %v2925 = vshrl.u32 %v2924, 7
    %v2926 = vsub.s32 %v2923, %v2925
    %v2927 = vrot.slane %v2920, %v2926
    %v2928 = vcombine.low %v2911, %v2919
    %v2930 = vunpack.c.l.s4 1934713408
    %v2931 = vunpack.c.0.s8 %v2930
    %v2932 = vlaneseq
    %v2933 = vshrl.u32 %v2932, 7
    %v2934 = vsub.s32 %v2931, %v2933
    %v2935 = vrot.slane %v2928, %v2934
    %v2936 = vcombine.low %v2927, %v2935
    %v2937 = vcombine.high %v2927, %v2935
    %v2938 = vcombine.low %v2857, %v2861
    %v2940 = vunpack.c.l.s4 1983009808
    %v2941 = vunpack.c.0.s8 %v2940
    %v2942 = vlaneseq
    %v2943 = vshrl.u32 %v2942, 7
    %v2944 = vsub.s32 %v2941, %v2943
    %v2945 = vrot.slane %v2938, %v2944
    %v2946 = vcombine.low %v2859, %v2863
    %v2948 = vunpack.c.l.s4 1983009808
    %v2949 = vunpack.c.0.s8 %v2948
    %v2950 = vlaneseq
    %v2951 = vshrl.u32 %v2950, 7
    %v2952 = vsub.s32 %v2949, %v2951
    %v2953 = vrot.slane %v2946, %v2952
    %v2954 = vcombine.low %v2865, %v2869
    %v2956 = vunpack.c.l.s4 1983009808
    %v2957 = vunpack.c.0.s8 %v2956
    %v2958 = vlaneseq
    %v2959 = vshrl.u32 %v2958, 7
    %v2960 = vsub.s32 %v2957, %v2959
    %v2961 = vrot.slane %v2954, %v2960
    %v2962 = vcombine.low %v2867, %v2871
    %v2964 = vunpack.c.l.s4 1983009808
    %v2965 = vunpack.c.0.s8 %v2964
    %v2966 = vlaneseq
    %v2967 = vshrl.u32 %v2966, 7
    %v2968 = vsub.s32 %v2965, %v2967
    %v2969 = vrot.slane %v2962, %v2968
    %v2970 = vcombine.low %v2945, %v2953
    %v2972 = vunpack.c.l.s4 1934713408
    %v2973 = vunpack.c.0.s8 %v2972
    %v2974 = vlaneseq
    %v2975 = vshrl.u32 %v2974, 7
    %v2976 = vsub.s32 %v2973, %v2975
    %v2977 = vrot.slane %v2970, %v2976
    %v2978 = vcombine.low %v2961, %v2969
    %v2980 = vunpack.c.l.s4 1934713408
    %v2981 = vunpack.c.0.s8 %v2980
    %v2982 = vlaneseq
    %v2983 = vshrl.u32 %v2982, 7
    %v2984 = vsub.s32 %v2981, %v2983
    %v2985 = vrot.slane %v2978, %v2984
    %v2986 = vcombine.low %v2977, %v2985
    %v2987 = vcombine.high %v2977, %v2985
    %2990 = vrot.lane.b32.xlu0 %v2937, 16
    %v2991 = vpop.permute.xlu0 %2990
    %2992 = vrot.lane.b32.xlu0 %v2987, 16
    %v2993 = vpop.permute.xlu0 %2992
    %v2996 = vsel %vm284, %v2936, %v2991
    %v2997 = vsel %vm284, %v2986, %v2993
    %v2998 = vld [vmem:[%s11] sm:$0xf]
    %v2999 = vld [vmem:[%s12] sm:$0xf]
    %3001 = vset.pattern.permute.xlu0 0
    %3002 = vperm.xlu0 %3001, %v2999
    %v3003 = vpop.permute.xlu0 %3002
    %v3006 = vsel %vm284, %v2998, 0
    %3008 = vmatprep.subr.mxu0 0.0
    %3009 = vmatpush1.msra.mxu0 %v2996
    %3010 = vmatprep.subr.mxu0 0.0
    %3011 = vmatpush1.msra.mxu0 %v2997
    %3012 = vmatprep.subr.mxu0 0.0
    %3013 = vmatpush1.msra.mxu0 0.0
    %3014 = vmatprep.subr.mxu0 0.0
    %3015 = vmatpush1.msra.mxu0 0.0
    %3016 = vmatprep.subr.mxu0 0.0
    %3017 = vmatpush1.msra.mxu0 0.0
    %3018 = vmatprep.subr.mxu0 0.0
    %3019 = vmatpush1.msra.mxu0 0.0
    %3020 = vmatprep.subr.mxu0 0.0
    %3021 = vmatpush1.msra.mxu0 0.0
    %3022 = vmatprep.subr.mxu0 0.0
    %3023 = vmatpush1.msra.mxu0 0.0
    %3024 = vmatprep.subr.mxu0 0.0
    %3025 = vmatpush1.msra.mxu0 0.0
    %3026 = vmatprep.subr.mxu0 0.0
    %3027 = vmatpush1.msra.mxu0 0.0
    %3028 = vmatprep.subr.mxu0 0.0
    %3029 = vmatpush1.msra.mxu0 0.0
    %3030 = vmatprep.subr.mxu0 0.0
    %3031 = vmatpush1.msra.mxu0 0.0
    %3032 = vmatprep.subr.mxu0 0.0
    %3033 = vmatpush1.msra.mxu0 0.0
    %3034 = vmatprep.subr.mxu0 0.0
    %3035 = vmatpush1.msra.mxu0 0.0
    %3036 = vmatprep.subr.mxu0 0.0
    %3037 = vmatpush1.msra.mxu0 0.0
    %3038 = vmatprep.subr.mxu0 0.0
    %3039 = vmatpush1.msra.mxu0 0.0
    %3040 = vmatprep.subr.mxu0 0.0
    %3041 = vmatpush1.msra.mxu0 0.0
    %3042 = vmatprep.subr.mxu0 0.0
    %3043 = vmatpush1.msra.mxu0 0.0
    %3044 = vmatprep.subr.mxu0 0.0
    %3045 = vmatpush1.msra.mxu0 0.0
    %3046 = vmatprep.subr.mxu0 0.0
    %3047 = vmatpush1.msra.mxu0 0.0
    %3048 = vmatprep.subr.mxu0 0.0
    %3049 = vmatpush1.msra.mxu0 0.0
    %3050 = vmatprep.subr.mxu0 0.0
    %3051 = vmatpush1.msra.mxu0 0.0
    %3052 = vmatprep.subr.mxu0 0.0
    %3053 = vmatpush1.msra.mxu0 0.0
    %3054 = vmatprep.subr.mxu0 0.0
    %3055 = vmatpush1.msra.mxu0 0.0
    %3056 = vmatprep.subr.mxu0 0.0
    %3057 = vmatpush1.msra.mxu0 0.0
    %3058 = vmatprep.subr.mxu0 0.0
    %3059 = vmatpush1.msra.mxu0 0.0
    %3060 = vmatprep.subr.mxu0 0.0
    %3061 = vmatpush1.msra.mxu0 0.0
    %3062 = vmatprep.subr.mxu0 0.0
    %3063 = vmatpush1.msra.mxu0 0.0
    %3064 = vmatprep.subr.mxu0 0.0
    %3065 = vmatpush1.msra.mxu0 0.0
    %3066 = vmatprep.subr.mxu0 0.0
    %3067 = vmatpush1.msra.mxu0 0.0
    %3068 = vmatprep.subr.mxu0 0.0
    %3069 = vmatpush1.msra.mxu0 0.0
    %3070 = vmatprep.subr.mxu0 0.0
    %3071 = vmatpush1.msra.mxu0 0.0
    %3072 = vmatprep.mubr.f32.mxu0 0.0
    %3073 = vmatmul.mubr.f32.gmra.mrb[0].mxu0 %v3006
    %v3074 = vpop.f32.mrb[0].mxu0
    %v3075 = vadd.f32 %v3003, %v3074
    %v3076 = vpop.f32.mrb[0].mxu0
    %3077 = vdwg.mxu0
    %vm3078 = vcmask 257024
    %3079 = vst.msk [vmem:[#allocation8] sm:$0xf] %vm3078, %v3075
    // Predicated region
    $region66: #{tpu_custom_call.1} parent=1 // pred_check
      _
    $region67: #{tpu_custom_call.1} parent=1 // pred_check_branch
      %3081 = sbr.rel (0) target = $region69
    $region68: #{tpu_custom_call.1} parent=1 // pred_region
      %s3083 = ssub.s32 64, 64
      %3084 = vsyncadd [#allocation4], %s3083
      %s3086 = sshll.u32 [#allocation8], 4
      %s3087 = int_to_ptr.vmem [resolvable:$true] %s3086
      %3089 = dma.vmem_to_hbm [thread:$0]  %s3087, 64, %s13, [#allocation4]
    $region69: #{tpu_custom_call.1} parent=1 // pred_fallthru
      _
    // Predicated region
    $region70: #{tpu_custom_call.1} parent=1 // pred_check
      _
    $region71: #{tpu_custom_call.1} parent=1 // pred_check_branch
      %3091 = sbr.rel (0) target = $region73
    $region72: #{tpu_custom_call.1} parent=1 // pred_region
      %3092 = dma.done [#allocation4], 64
    $region73: #{tpu_custom_call.1} parent=1 // pred_fallthru
      _
    %3093 = vsyncpa [#allocation3], 1
    %3094 = vsyncpa [#allocation6], 1
    %3095 = vsyncpa [#allocation4], 1

</llo_original>
